<compile_context>
chip_gen: v7x
topology: tpu7x:2x2x1
jax: 0.10.0
libtpu: 0.0.40
codegen_flags: <defaults>
</compile_context>

<pallas_src>
import functools

import jax
import jax.numpy as jnp
from jax import lax
from jax.experimental import pallas as pl
from jax.experimental.pallas import tpu as pltpu


def _ceil_to(v, m):
    return -(-v // m) * m


# ----------------------------------------------------------------------------
# Pallas fused conv kernel: in-kernel patch staging + one K=Kdim bf16 GEMM
# (f32 accumulation) + fused bias + single lane-dense bf16 store.
# ----------------------------------------------------------------------------
def _conv_gemm_kernel(x_ref, w_ref, b_ref, o_ref, patch_ref, *,
                      nky, nkx, toh, ow, cp):
    """One (M_blk, OCp) output tile covering NBT images x TOH output rows.

    x_ref     : (NBT, Hps, Wps, CP)  phase-packed padded images (bf16, VMEM)
    w_ref     : (Kdim, OCp)          tap-grouped weights        (bf16, VMEM)
    b_ref     : (1, OCp)             bias (zero padded)         (f32,  VMEM)
    o_ref     : (M_blk, OCp)         output tile                (bf16, VMEM)
    patch_ref : (M_blk, Kdim)        im2col staging scratch     (bf16, VMEM)
    """
    t = pl.program_id(1)
    row0 = pl.multiple_of(t * toh, toh)
    m = o_ref.shape[0]

    # Stage the full (M_blk, Kdim) patch; each macro tap's slab is a contiguous
    # window of the VMEM-resident phase-packed image (no HBM im2col).
    for idx in range(nky * nkx):
        dy, dx = idx // nkx, idx % nkx
        slab = x_ref[:, pl.ds(row0 + dy, toh), pl.ds(dx, ow), :]  # (NBT,toh,ow,CP)
        patch_ref[:, idx * cp:(idx + 1) * cp] = slab.reshape(m, cp)

    # Single GEMM with the whole contraction dim -> MXU-internal accumulation.
    acc = jnp.dot(patch_ref[...], w_ref[...],
                  preferred_element_type=jnp.float32)
    o_ref[...] = (acc + b_ref[...]).astype(o_ref.dtype)          # fused bias, 1 store


def _pick_tiles(NB, OH, OW, Hps, Wps, CP, Kdim, OCp, budget=6 * 1024 * 1024):
    """OC-aware tile sizing: fold as many whole images as possible into the
    GEMM M dim; fall back to row tiling when one image's working set is big."""
    img_b = Hps * Wps * _ceil_to(CP, 128) * 2                      # bf16 input block
    per_row = OW * (OCp * 2 + OCp * 4 + _ceil_to(Kdim, 128) * 2)   # out + acc + patch
    for cand in range(NB, 1, -1):
        if NB % cand == 0 and cand * (img_b + OH * per_row) <= budget:
            return cand, OH
    toh = OH
    while toh % 2 == 0 and (img_b + toh * per_row) > budget and toh > 8:
        toh //= 2
    return 1, toh


def conv2d_pallas(x_nhwc, w, bias, stride, padding):
    """2-D conv, NHWC input, HWIO weights, bf16 output.  The strided conv is
    done via a one-pass space-to-phase repack so the kernel only does
    contiguous loads, then a single dense GEMM per tile."""
    NB, H, W, C = x_nhwc.shape
    KH, KW, Cw, OC = w.shape
    assert Cw == C
    sh, sw = (stride, stride) if isinstance(stride, int) else stride
    ph, pw = (padding, padding) if isinstance(padding, int) else padding

    OH = (H + 2 * ph - KH) // sh + 1
    OW = (W + 2 * pw - KW) // sw + 1

    # Pad the tap grid to a stride multiple so whole phase groups are consumed
    # per macro tap (extra taps get zero weights).
    KHp, KWp = _ceil_to(KH, sh), _ceil_to(KW, sw)
    nky, nkx = KHp // sh, KWp // sw
    Hps, Wps = OH + nky - 1, OW + nkx - 1
    Hp, Wp = sh * Hps, sw * Wps
    CP = sh * sw * C
    Kdim = nky * nkx * CP
    OCp = _ceil_to(OC, 128)           # lane-dense output / GEMM N dim

    # Space-to-phase repack (single HBM pass, no im2col inflation):
    # xs[n, r, q, (py*sw+px)*C + c] = xpad[n, r*sh+py, q*sw+px, c]
    # TODO(synk): audit that XLA fuses pad+reshape+transpose+cast into one pass.
    xp = jnp.pad(
        x_nhwc,
        ((0, 0), (ph, max(0, Hp - H - ph)), (pw, max(0, Wp - W - pw)), (0, 0))
    )[:, :Hp, :Wp, :]
    xs = xp.reshape(NB, Hps, sh, Wps, sw, C)
    xs = jnp.transpose(xs, (0, 1, 3, 2, 4, 5)).reshape(NB, Hps, Wps, CP)
    xs = xs.astype(jnp.bfloat16)

    # Tap-grouped weight matrix, rows ordered (dy, dx, py, px, c); N padded to OCp.
    wz = jnp.pad(w, ((0, KHp - KH), (0, KWp - KW), (0, 0), (0, 0)))
    w_mat = jnp.transpose(wz.reshape(nky, sh, nkx, sw, C, OC),
                          (0, 2, 1, 3, 4, 5)).reshape(Kdim, OC)
    w_mat = jnp.pad(w_mat, ((0, 0), (0, OCp - OC))).astype(jnp.bfloat16)
    bias2d = jnp.pad(bias.reshape(1, OC),
                     ((0, 0), (0, OCp - OC))).astype(jnp.float32)

    # Tiling: batch-fold first (M = NBT*OH*OW), row tiles otherwise.
    NBT, TOH = _pick_tiles(NB, OH, OW, Hps, Wps, CP, Kdim, OCp)
    n_row_tiles = OH // TOH
    M_blk = NBT * TOH * OW
    if (NB // NBT) * n_row_tiles > 1 and (M_blk % 8 != 0 or OW % 8 != 0):
        NBT, TOH, n_row_tiles = NB, OH, 1          # full-extent safe fallback
        M_blk = NB * OH * OW
    grid = (NB // NBT, n_row_tiles)

    # Explicit scoped-VMEM limit sized from the actual blocks (double-buffered
    # in/out + weights + patch scratch), never below any generation's default.
    in_blk_b = NBT * Hps * Wps * _ceil_to(CP, 128) * 2
    out_blk_b = _ceil_to(M_blk, 16) * OCp * 2
    w_b = _ceil_to(Kdim, 16) * OCp * 2 + 8 * OCp * 4
    patch_b = _ceil_to(M_blk, 16) * _ceil_to(Kdim, 128) * 2
    vmem_limit = int(min(64 * 2 ** 20,
                         max(32 * 2 ** 20,
                             2 * (2 * (in_blk_b + out_blk_b) + 2 * w_b + patch_b))))

    kernel = functools.partial(
        _conv_gemm_kernel, nky=nky, nkx=nkx, toh=TOH, ow=OW, cp=CP)

    out2d = pl.pallas_call(
        kernel,
        out_shape=jax.ShapeDtypeStruct((NB * OH * OW, OCp), jnp.bfloat16),
        grid_spec=pltpu.PrefetchScalarGridSpec(
            num_scalar_prefetch=0,
            grid=grid,
            in_specs=[
                # Whole phase-packed image block per batch tile; its block index
                # depends only on the batch axis, so it stays VMEM-resident
                # across row tiles (and the megacore split lands on the batch).
                pl.BlockSpec((NBT, Hps, Wps, CP), lambda n, t: (n, 0, 0, 0)),
                pl.BlockSpec((Kdim, OCp), lambda n, t: (0, 0)),
                pl.BlockSpec((1, OCp), lambda n, t: (0, 0)),
            ],
            out_specs=pl.BlockSpec(
                (M_blk, OCp), lambda n, t: (n * n_row_tiles + t, 0)),
            scratch_shapes=[pltpu.VMEM((M_blk, Kdim), jnp.bfloat16)],
        ),
        compiler_params=pltpu.CompilerParams(
            dimension_semantics=("parallel", "arbitrary"),
            vmem_limit_bytes=vmem_limit),
    )(xs, w_mat, bias2d)

    out = out2d if OCp == OC else out2d[:, :OC]
    return out.reshape(NB, OH, OW, OC)


# ----------------------------------------------------------------------------
# Non-kernel pieces (global reductions): training-mode BatchNorm2d.
# ----------------------------------------------------------------------------
def batchnorm2d_train(x_nhwc, gamma, beta, eps=1e-5):
    x = x_nhwc.astype(jnp.float32)
    mean = jnp.mean(x, axis=(0, 1, 2), keepdims=True)
    var = jnp.var(x, axis=(0, 1, 2), keepdims=True)   # biased, torch training BN
    return (x - mean) * lax.rsqrt(var + eps) * gamma + beta


# ----------------------------------------------------------------------------
# Conv2dDeepSym forward (matches the PyTorch module).
# ----------------------------------------------------------------------------
def conv2d_deep_sym_forward(params, x, *, stride, padding, use_max=0,
                            outermost=False, conv_fn=conv2d_pallas):
    b, n, c, H, W = x.shape
    x_flat = jnp.transpose(x.reshape(b * n, c, H, W), (0, 2, 3, 1))      # NHWC
    x1 = conv_fn(x_flat, params["w"], params["b"], stride, padding)

    pooled = jnp.max(x, axis=1) if use_max else jnp.mean(x, axis=1)      # set pool
    x2 = conv_fn(jnp.transpose(pooled, (0, 2, 3, 1)),
                 params["ws"], params["bs"], stride, padding)
    # TODO(synk): the two convs could share one pallas_call (stacked weights +
    #             scalar-prefetched group id) to drop a launch at tiny shapes.

    if not outermost:
        x1 = batchnorm2d_train(x1, params["bn_g"], params["bn_b"])
        x2 = batchnorm2d_train(x2, params["bns_g"], params["bns_b"])

    _, OH, OW, OC = x1.shape
    out = (x1.reshape(b, n, OH, OW, OC).astype(jnp.float32)
           + x2[:, None].astype(jnp.float32))                            # broadcast n
    return jnp.transpose(out, (0, 1, 4, 2, 3))                           # (b,n,OC,OH,OW)


# Pure-JAX (f32) reference conv for correctness checking of the bf16 kernel.
def _conv_ref(x_nhwc, w, bias, stride, padding):
    sh, sw = (stride, stride) if isinstance(stride, int) else stride
    ph, pw = (padding, padding) if isinstance(padding, int) else padding
    y = lax.conv_general_dilated(
        x_nhwc, w, window_strides=(sh, sw), padding=[(ph, ph), (pw, pw)],
        dimension_numbers=("NHWC", "HWIO", "NHWC"))
    return y + bias[None, None, None, :]


# ----------------------------------------------------------------------------
# Parameter init (deterministic, torch-like uniform scaling).
# ----------------------------------------------------------------------------
def init_conv_deep_sym_params(key, in_ch, out_ch, k):
    k1, k2, k3, k4 = jax.random.split(key, 4)
    s = 1.0 / ((in_ch * k * k) ** 0.5)
    u = lambda kk, shape: jax.random.uniform(kk, shape, jnp.float32, -s, s)
    return dict(
        w=u(k1, (k, k, in_ch, out_ch)), b=u(k2, (out_ch,)),
        ws=u(k3, (k, k, in_ch, out_ch)), bs=u(k4, (out_ch,)),
        bn_g=jnp.ones((out_ch,), jnp.float32), bn_b=jnp.zeros((out_ch,), jnp.float32),
        bns_g=jnp.ones((out_ch,), jnp.float32), bns_b=jnp.zeros((out_ch,), jnp.float32),
    )


# ----------------------------------------------------------------------------
if __name__ == "__main__":
    # Small shapes; 4x4 / stride 2 / pad 1 matches how Conv2dDeepSym is used
    # inside the DSS U-Net.
    B, N_SET, C_IN, C_OUT, H, W = 2, 3, 4, 8, 16, 16
    KSIZE, STRIDE, PAD = 4, (2, 2), (1, 1)

    key = jax.random.PRNGKey(0)
    kp, kx = jax.random.split(key)
    params = init_conv_deep_sym_params(kp, C_IN, C_OUT, KSIZE)
    x = jax.random.normal(kx, (B, N_SET, C_IN, H, W), jnp.float32)

    fwd = jax.jit(functools.partial(conv2d_deep_sym_forward,
                                    stride=STRIDE, padding=PAD))
    out = fwd(params, x)
    jax.block_until_ready(out)

    OH = (H + 2 * PAD[0] - KSIZE) // STRIDE[0] + 1
    OW = (W + 2 * PAD[1] - KSIZE) // STRIDE[1] + 1
    assert out.shape == (B, N_SET, C_OUT, OH, OW), out.shape
    assert bool(jnp.all(jnp.isfinite(out)))

    # Correctness vs f32 XLA reference (bf16 operands / output -> tolerance).
    ref = conv2d_deep_sym_forward(params, x, stride=STRIDE, padding=PAD,
                                  conv_fn=_conv_ref)
    err = float(jnp.max(jnp.abs(out - ref)))
    assert err < 1e-1, f"max abs err vs f32 reference = {err}"

    print("KERNEL_OK")
</pallas_src>

<mosaic_0001>
module attributes {stable_mosaic.version = 11 : i64} {
  func.func @_conv_gemm_kernel(%arg0: i32, %arg1: i32, %arg2: memref<2x9x9x16xbf16, #tpu.memory_space<vmem>>, %arg3: memref<64x128xbf16, #tpu.memory_space<vmem>>, %arg4: memref<1x128xf32, #tpu.memory_space<vmem>>, %arg5: memref<128x128xbf16, #tpu.memory_space<vmem>>, %arg6: memref<128x64xbf16, #tpu.memory_space<vmem>>) attributes {dimension_semantics = [#tpu.dimension_semantics<parallel>, #tpu.dimension_semantics<arbitrary>], iteration_bounds = array<i64: 1, 1>, scalar_prefetch = 0 : i64, scratch_operands = 1 : i64, tpu.core_type = #tpu.core_type<tc>, window_params = [{transform_indices = @transform_0, window_bounds = array<i64: 2, 9, 9, 16>}, {pipeline_mode = #tpu.pipeline_mode<synchronous>, transform_indices = @transform_1, window_bounds = array<i64: 64, 128>}, {pipeline_mode = #tpu.pipeline_mode<synchronous>, transform_indices = @transform_2, window_bounds = array<i64: 1, 128>}, {transform_indices = @transform_3, window_bounds = array<i64: 128, 128>}]} {
    %c8_i32 = arith.constant 8 : i32
    %0 = arith.muli %arg1, %c8_i32 : i32
    %1 = tpu.assume_multiple %0, 8 : i32
    %c0_i32 = arith.constant 0 : i32
    %2 = arith.addi %1, %c0_i32 : i32
    %c0 = arith.constant 0 : index
    %3 = arith.index_cast %2 : i32 to index
    %c0_0 = arith.constant 0 : index
    %c0_1 = arith.constant 0 : index
    %4 = vector.load %arg2[%c0, %3, %c0_0, %c0_1] : memref<2x9x9x16xbf16, #tpu.memory_space<vmem>>, vector<2x8x8x16xbf16>
    %5 = vector.shape_cast %4 : vector<2x8x8x16xbf16> to vector<128x16xbf16>
    %c0_2 = arith.constant 0 : index
    %c0_3 = arith.constant 0 : index
    %6 = vector.load %arg6[%c0_2, %c0_3] : memref<128x64xbf16, #tpu.memory_space<vmem>>, vector<128x16xbf16>
    tpu.vector_store %arg6[%c0_2, %c0_3], %5 {strides = array<i32>} : memref<128x64xbf16, #tpu.memory_space<vmem>>, vector<128x16xbf16>,
    %c0_i32_4 = arith.constant 0 : i32
    %7 = arith.addi %1, %c0_i32_4 : i32
    %c0_5 = arith.constant 0 : index
    %8 = arith.index_cast %7 : i32 to index
    %c1 = arith.constant 1 : index
    %c0_6 = arith.constant 0 : index
    %9 = vector.load %arg2[%c0_5, %8, %c1, %c0_6] : memref<2x9x9x16xbf16, #tpu.memory_space<vmem>>, vector<2x8x8x16xbf16>
    %10 = vector.shape_cast %9 : vector<2x8x8x16xbf16> to vector<128x16xbf16>
    %c0_7 = arith.constant 0 : index
    %c16 = arith.constant 16 : index
    %11 = vector.load %arg6[%c0_7, %c16] : memref<128x64xbf16, #tpu.memory_space<vmem>>, vector<128x16xbf16>
    tpu.vector_store %arg6[%c0_7, %c16], %10 {strides = array<i32>} : memref<128x64xbf16, #tpu.memory_space<vmem>>, vector<128x16xbf16>,
    %c1_i32 = arith.constant 1 : i32
    %12 = arith.addi %1, %c1_i32 : i32
    %c0_8 = arith.constant 0 : index
    %13 = arith.index_cast %12 : i32 to index
    %c0_9 = arith.constant 0 : index
    %c0_10 = arith.constant 0 : index
    %14 = vector.load %arg2[%c0_8, %13, %c0_9, %c0_10] : memref<2x9x9x16xbf16, #tpu.memory_space<vmem>>, vector<2x8x8x16xbf16>
    %15 = vector.shape_cast %14 : vector<2x8x8x16xbf16> to vector<128x16xbf16>
    %c0_11 = arith.constant 0 : index
    %c32 = arith.constant 32 : index
    %16 = vector.load %arg6[%c0_11, %c32] : memref<128x64xbf16, #tpu.memory_space<vmem>>, vector<128x16xbf16>
    tpu.vector_store %arg6[%c0_11, %c32], %15 {strides = array<i32>} : memref<128x64xbf16, #tpu.memory_space<vmem>>, vector<128x16xbf16>,
    %c1_i32_12 = arith.constant 1 : i32
    %17 = arith.addi %1, %c1_i32_12 : i32
    %c0_13 = arith.constant 0 : index
    %18 = arith.index_cast %17 : i32 to index
    %c1_14 = arith.constant 1 : index
    %c0_15 = arith.constant 0 : index
    %19 = vector.load %arg2[%c0_13, %18, %c1_14, %c0_15] : memref<2x9x9x16xbf16, #tpu.memory_space<vmem>>, vector<2x8x8x16xbf16>
    %20 = vector.shape_cast %19 : vector<2x8x8x16xbf16> to vector<128x16xbf16>
    %c0_16 = arith.constant 0 : index
    %c48 = arith.constant 48 : index
    %21 = vector.load %arg6[%c0_16, %c48] : memref<128x64xbf16, #tpu.memory_space<vmem>>, vector<128x16xbf16>
    tpu.vector_store %arg6[%c0_16, %c48], %20 {strides = array<i32>} : memref<128x64xbf16, #tpu.memory_space<vmem>>, vector<128x16xbf16>,
    %c0_17 = arith.constant 0 : index
    %c0_18 = arith.constant 0 : index
    %22 = vector.load %arg6[%c0_17, %c0_18] : memref<128x64xbf16, #tpu.memory_space<vmem>>, vector<128x64xbf16>
    %c0_19 = arith.constant 0 : index
    %c0_20 = arith.constant 0 : index
    %23 = vector.load %arg3[%c0_19, %c0_20] : memref<64x128xbf16, #tpu.memory_space<vmem>>, vector<64x128xbf16>
    %cst = arith.constant dense<0.000000e+00> : vector<128x128xf32>
    %24 = tpu.matmul %22, %23, %cst {dimension_numbers = #tpu.dot_dimension_numbers<[1], [0], [0], [1], [0, 0, 1, 1], [], []>} : vector<128x64xbf16>, vector<64x128xbf16>, vector<128x128xf32> -> vector<128x128xf32>
    %c0_21 = arith.constant 0 : index
    %c0_22 = arith.constant 0 : index
    %25 = vector.load %arg4[%c0_21, %c0_22] : memref<1x128xf32, #tpu.memory_space<vmem>>, vector<1x128xf32>
    %26 = vector.broadcast %25 : vector<1x128xf32> to vector<128x128xf32>
    %27 = arith.addf %24, %26 : vector<128x128xf32>
    %28 = arith.truncf %27 : vector<128x128xf32> to vector<128x128xbf16>
    %c0_23 = arith.constant 0 : index
    %c0_24 = arith.constant 0 : index
    %29 = vector.load %arg5[%c0_23, %c0_24] : memref<128x128xbf16, #tpu.memory_space<vmem>>, vector<128x128xbf16>
    tpu.vector_store %arg5[%c0_23, %c0_24], %28 {strides = array<i32>} : memref<128x128xbf16, #tpu.memory_space<vmem>>, vector<128x128xbf16>,
    return
  }
  func.func @transform_0(%arg0: i32, %arg1: i32) -> (i32, i32, i32, i32) {
    %c0_i32 = arith.constant 0 : i32
    %c0_i32_0 = arith.constant 0 : i32
    %c0_i32_1 = arith.constant 0 : i32
    %c0_i32_2 = arith.constant 0 : i32
    return %arg0, %c0_i32, %c0_i32_0, %c0_i32_1 : i32, i32, i32, i32
  }
  func.func @transform_1(%arg0: i32, %arg1: i32) -> (i32, i32) {
    %c0_i32 = arith.constant 0 : i32
    %c0_i32_0 = arith.constant 0 : i32
    %c0_i32_1 = arith.constant 0 : i32
    return %c0_i32, %c0_i32_0 : i32, i32
  }
  func.func @transform_2(%arg0: i32, %arg1: i32) -> (i32, i32) {
    %c0_i32 = arith.constant 0 : i32
    %c0_i32_0 = arith.constant 0 : i32
    %c0_i32_1 = arith.constant 0 : i32
    return %c0_i32, %c0_i32_0 : i32, i32
  }
  func.func @transform_3(%arg0: i32, %arg1: i32) -> (i32, i32) {
    %c1_i32 = arith.constant 1 : i32
    %0 = arith.muli %arg0, %c1_i32 : i32
    %1 = arith.addi %0, %arg1 : i32
    %c0_i32 = arith.constant 0 : i32
    %c0_i32_0 = arith.constant 0 : i32
    return %1, %c0_i32 : i32, i32
  }
}

module attributes {stable_mosaic.version = 11 : i64} {
  func.func @_conv_gemm_kernel(%arg0: i32, %arg1: i32, %arg2: memref<6x9x9x16xbf16, #tpu.memory_space<vmem>>, %arg3: memref<64x128xbf16, #tpu.memory_space<vmem>>, %arg4: memref<1x128xf32, #tpu.memory_space<vmem>>, %arg5: memref<384x128xbf16, #tpu.memory_space<vmem>>, %arg6: memref<384x64xbf16, #tpu.memory_space<vmem>>) attributes {dimension_semantics = [#tpu.dimension_semantics<parallel>, #tpu.dimension_semantics<arbitrary>], iteration_bounds = array<i64: 1, 1>, scalar_prefetch = 0 : i64, scratch_operands = 1 : i64, tpu.core_type = #tpu.core_type<tc>, window_params = [{transform_indices = @transform_0, window_bounds = array<i64: 6, 9, 9, 16>}, {pipeline_mode = #tpu.pipeline_mode<synchronous>, transform_indices = @transform_1, window_bounds = array<i64: 64, 128>}, {pipeline_mode = #tpu.pipeline_mode<synchronous>, transform_indices = @transform_2, window_bounds = array<i64: 1, 128>}, {transform_indices = @transform_3, window_bounds = array<i64: 384, 128>}]} {
    %c8_i32 = arith.constant 8 : i32
    %0 = arith.muli %arg1, %c8_i32 : i32
    %1 = tpu.assume_multiple %0, 8 : i32
    %c0_i32 = arith.constant 0 : i32
    %2 = arith.addi %1, %c0_i32 : i32
    %c0 = arith.constant 0 : index
    %3 = arith.index_cast %2 : i32 to index
    %c0_0 = arith.constant 0 : index
    %c0_1 = arith.constant 0 : index
    %4 = vector.load %arg2[%c0, %3, %c0_0, %c0_1] : memref<6x9x9x16xbf16, #tpu.memory_space<vmem>>, vector<6x8x8x16xbf16>
    %5 = vector.shape_cast %4 : vector<6x8x8x16xbf16> to vector<384x16xbf16>
    %c0_2 = arith.constant 0 : index
    %c0_3 = arith.constant 0 : index
    %6 = vector.load %arg6[%c0_2, %c0_3] : memref<384x64xbf16, #tpu.memory_space<vmem>>, vector<384x16xbf16>
    tpu.vector_store %arg6[%c0_2, %c0_3], %5 {strides = array<i32>} : memref<384x64xbf16, #tpu.memory_space<vmem>>, vector<384x16xbf16>,
    %c0_i32_4 = arith.constant 0 : i32
    %7 = arith.addi %1, %c0_i32_4 : i32
    %c0_5 = arith.constant 0 : index
    %8 = arith.index_cast %7 : i32 to index
    %c1 = arith.constant 1 : index
    %c0_6 = arith.constant 0 : index
    %9 = vector.load %arg2[%c0_5, %8, %c1, %c0_6] : memref<6x9x9x16xbf16, #tpu.memory_space<vmem>>, vector<6x8x8x16xbf16>
    %10 = vector.shape_cast %9 : vector<6x8x8x16xbf16> to vector<384x16xbf16>
    %c0_7 = arith.constant 0 : index
    %c16 = arith.constant 16 : index
    %11 = vector.load %arg6[%c0_7, %c16] : memref<384x64xbf16, #tpu.memory_space<vmem>>, vector<384x16xbf16>
    tpu.vector_store %arg6[%c0_7, %c16], %10 {strides = array<i32>} : memref<384x64xbf16, #tpu.memory_space<vmem>>, vector<384x16xbf16>,
    %c1_i32 = arith.constant 1 : i32
    %12 = arith.addi %1, %c1_i32 : i32
    %c0_8 = arith.constant 0 : index
    %13 = arith.index_cast %12 : i32 to index
    %c0_9 = arith.constant 0 : index
    %c0_10 = arith.constant 0 : index
    %14 = vector.load %arg2[%c0_8, %13, %c0_9, %c0_10] : memref<6x9x9x16xbf16, #tpu.memory_space<vmem>>, vector<6x8x8x16xbf16>
    %15 = vector.shape_cast %14 : vector<6x8x8x16xbf16> to vector<384x16xbf16>
    %c0_11 = arith.constant 0 : index
    %c32 = arith.constant 32 : index
    %16 = vector.load %arg6[%c0_11, %c32] : memref<384x64xbf16, #tpu.memory_space<vmem>>, vector<384x16xbf16>
    tpu.vector_store %arg6[%c0_11, %c32], %15 {strides = array<i32>} : memref<384x64xbf16, #tpu.memory_space<vmem>>, vector<384x16xbf16>,
    %c1_i32_12 = arith.constant 1 : i32
    %17 = arith.addi %1, %c1_i32_12 : i32
    %c0_13 = arith.constant 0 : index
    %18 = arith.index_cast %17 : i32 to index
    %c1_14 = arith.constant 1 : index
    %c0_15 = arith.constant 0 : index
    %19 = vector.load %arg2[%c0_13, %18, %c1_14, %c0_15] : memref<6x9x9x16xbf16, #tpu.memory_space<vmem>>, vector<6x8x8x16xbf16>
    %20 = vector.shape_cast %19 : vector<6x8x8x16xbf16> to vector<384x16xbf16>
    %c0_16 = arith.constant 0 : index
    %c48 = arith.constant 48 : index
    %21 = vector.load %arg6[%c0_16, %c48] : memref<384x64xbf16, #tpu.memory_space<vmem>>, vector<384x16xbf16>
    tpu.vector_store %arg6[%c0_16, %c48], %20 {strides = array<i32>} : memref<384x64xbf16, #tpu.memory_space<vmem>>, vector<384x16xbf16>,
    %c0_17 = arith.constant 0 : index
    %c0_18 = arith.constant 0 : index
    %22 = vector.load %arg6[%c0_17, %c0_18] : memref<384x64xbf16, #tpu.memory_space<vmem>>, vector<384x64xbf16>
    %c0_19 = arith.constant 0 : index
    %c0_20 = arith.constant 0 : index
    %23 = vector.load %arg3[%c0_19, %c0_20] : memref<64x128xbf16, #tpu.memory_space<vmem>>, vector<64x128xbf16>
    %cst = arith.constant dense<0.000000e+00> : vector<384x128xf32>
    %24 = tpu.matmul %22, %23, %cst {dimension_numbers = #tpu.dot_dimension_numbers<[1], [0], [0], [1], [0, 0, 1, 1], [], []>} : vector<384x64xbf16>, vector<64x128xbf16>, vector<384x128xf32> -> vector<384x128xf32>
    %c0_21 = arith.constant 0 : index
    %c0_22 = arith.constant 0 : index
    %25 = vector.load %arg4[%c0_21, %c0_22] : memref<1x128xf32, #tpu.memory_space<vmem>>, vector<1x128xf32>
    %26 = vector.broadcast %25 : vector<1x128xf32> to vector<384x128xf32>
    %27 = arith.addf %24, %26 : vector<384x128xf32>
    %28 = arith.truncf %27 : vector<384x128xf32> to vector<384x128xbf16>
    %c0_23 = arith.constant 0 : index
    %c0_24 = arith.constant 0 : index
    %29 = vector.load %arg5[%c0_23, %c0_24] : memref<384x128xbf16, #tpu.memory_space<vmem>>, vector<384x128xbf16>
    tpu.vector_store %arg5[%c0_23, %c0_24], %28 {strides = array<i32>} : memref<384x128xbf16, #tpu.memory_space<vmem>>, vector<384x128xbf16>,
    return
  }
  func.func @transform_0(%arg0: i32, %arg1: i32) -> (i32, i32, i32, i32) {
    %c0_i32 = arith.constant 0 : i32
    %c0_i32_0 = arith.constant 0 : i32
    %c0_i32_1 = arith.constant 0 : i32
    %c0_i32_2 = arith.constant 0 : i32
    return %arg0, %c0_i32, %c0_i32_0, %c0_i32_1 : i32, i32, i32, i32
  }
  func.func @transform_1(%arg0: i32, %arg1: i32) -> (i32, i32) {
    %c0_i32 = arith.constant 0 : i32
    %c0_i32_0 = arith.constant 0 : i32
    %c0_i32_1 = arith.constant 0 : i32
    return %c0_i32, %c0_i32_0 : i32, i32
  }
  func.func @transform_2(%arg0: i32, %arg1: i32) -> (i32, i32) {
    %c0_i32 = arith.constant 0 : i32
    %c0_i32_0 = arith.constant 0 : i32
    %c0_i32_1 = arith.constant 0 : i32
    return %c0_i32, %c0_i32_0 : i32, i32
  }
  func.func @transform_3(%arg0: i32, %arg1: i32) -> (i32, i32) {
    %c1_i32 = arith.constant 1 : i32
    %0 = arith.muli %arg0, %c1_i32 : i32
    %1 = arith.addi %0, %arg1 : i32
    %c0_i32 = arith.constant 0 : i32
    %c0_i32_0 = arith.constant 0 : i32
    return %1, %c0_i32 : i32, i32
  }
}

</mosaic_0001>

<llo_original>
// kernel: conv2d_deep_sym_forward.3
$region0: #{conv2d_deep_sym_forward.3}
  #allocation0 [shape = 'u32[]', space=smem, size = 0x4, offset = 0x4, fixed_abs, tag = 'smem constant byte address 0x4 - core index']
  #allocation1 [shape = 'u32[144,128]{1,0:T(1,128)}', space=vmem, size = 0x12000, scoped, tag = 'internal scratch']
  #allocation2 [shape = 'bf16[128,64]{1,0:T(16,128)(2,1)}', space=vmem, size = 0x8000, scoped, tag = 'scratch operand']
  %s0 = inlined_call_operand.vmem [shape: bf16[2,9,9,16], index: 0, kind: input, shape index: {}]
  %s1 = inlined_call_operand.vmem [shape: bf16[64,128], index: 1, kind: input, shape index: {}]
  %s2 = inlined_call_operand.vmem [shape: f32[1,128], index: 2, kind: input, shape index: {}]
  %s3 = inlined_call_operand.vmem [shape: bf16[128,128], index: 3, kind: output, shape index: {}]
  %s4 = sld [smem:[#allocation0]]
  $region22: #{conv2d_deep_sym_forward.3} parent=0
    _
  %s6 = ssub.s32 1, %s4
  %s7 = scalar_select 0, %s6, %s4
  // Predicated region
  $region2: #{conv2d_deep_sym_forward.3} parent=0 // pred_check
    _
  $region3: #{conv2d_deep_sym_forward.3} parent=0 // pred_check_branch
    %9 = sbr.rel (0) target = $region5
  $region4: #{conv2d_deep_sym_forward.3} parent=0 // pred_region
    _
  $region5: #{conv2d_deep_sym_forward.3} parent=0 // pred_fallthru
    _
  // Predicated region
  $region6: #{conv2d_deep_sym_forward.3} parent=0 // pred_check
    _
  $region7: #{conv2d_deep_sym_forward.3} parent=0 // pred_check_branch
    %11 = sbr.rel (0) target = $region9
  $region8: #{conv2d_deep_sym_forward.3} parent=0 // pred_region
    _
  $region9: #{conv2d_deep_sym_forward.3} parent=0 // pred_fallthru
    _
  // Predicated region
  $region10: #{conv2d_deep_sym_forward.3} parent=0 // pred_check
    _
  $region11: #{conv2d_deep_sym_forward.3} parent=0 // pred_check_branch
    %13 = sbr.rel (0) target = $region13
  $region12: #{conv2d_deep_sym_forward.3} parent=0 // pred_region
    _
  $region13: #{conv2d_deep_sym_forward.3} parent=0 // pred_fallthru
    _
  %s14 = sadd.s32 0, 0
  %s15 = smul.u32 16, %s14
  %p16 = scmp.lt.s32.totalorder %s15, 15
  %s17 = scalar_select %p16, %s15, 15
  %s18 = smul.addr %s17, 4
  %s19 = scalar_lea.vmem %s3, %s18
  %s20 = sadd.s32 0, 0
  %s21 = smul.u32 16, %s20
  %p22 = scmp.lt.s32.totalorder %s21, 15
  %s23 = scalar_select %p22, %s21, 15
  %s24 = smul.addr %s23, 4
  %s25 = scalar_lea.vmem %s3, %s24
  %s26 = sadd.s32 0, 0
  %s27 = smul.u32 16, %s26
  %s29 = smul.u32 0, 8
  %s30 = smul.u32 %s29, 2
  %s31 = smul.addr %s30, 4
  %s32 = scalar_lea.vmem %s0, %s31
  %v33 = vld [vmem:[%s32] sm:$0xf]
  %v34 = vld [vmem:[%s32 + $0x8] sm:$0xf]
  %v35 = vld [vmem:[%s32 + $0x10] sm:$0xf]
  %v36 = vld [vmem:[%s32 + $0x18] sm:$0xf]
  %v37 = vld [vmem:[%s32 + $0x20] sm:$0xf]
  %v38 = vld [vmem:[%s32 + $0x28] sm:$0xf]
  %v39 = vld [vmem:[%s32 + $0x30] sm:$0xf]
  %v40 = vld [vmem:[%s32 + $0x38] sm:$0xf]
  %v41 = vld [vmem:[%s32 + $0x48] sm:$0xf]
  %v42 = vld [vmem:[%s32 + $0x50] sm:$0xf]
  %v43 = vld [vmem:[%s32 + $0x58] sm:$0xf]
  %v44 = vld [vmem:[%s32 + $0x60] sm:$0xf]
  %v45 = vld [vmem:[%s32 + $0x68] sm:$0xf]
  %v46 = vld [vmem:[%s32 + $0x70] sm:$0xf]
  %v47 = vld [vmem:[%s32 + $0x78] sm:$0xf]
  %v48 = vld [vmem:[%s32 + $0x80] sm:$0xf]
  %v65 = vunpack.c.l.b16 %v33
  %v66 = vunpack.c.l.b16 %v34
  %v67 = vunpack.c.l.b16 %v35
  %v68 = vunpack.c.l.b16 %v36
  %v69 = vunpack.c.l.b16 %v37
  %v70 = vunpack.c.l.b16 %v38
  %v71 = vunpack.c.l.b16 %v39
  %v72 = vunpack.c.l.b16 %v40
  %v73 = vunpack.c.l.b16 %v41
  %v74 = vunpack.c.l.b16 %v42
  %v75 = vunpack.c.l.b16 %v43
  %v76 = vunpack.c.l.b16 %v44
  %v77 = vunpack.c.l.b16 %v45
  %v78 = vunpack.c.l.b16 %v46
  %v79 = vunpack.c.l.b16 %v47
  %v80 = vunpack.c.l.b16 %v48
  %v81 = vpack.c.b16 %v66, %v65
  %v82 = vpack.c.b16 %v68, %v67
  %v83 = vpack.c.b16 %v70, %v69
  %v84 = vpack.c.b16 %v72, %v71
  %v85 = vpack.c.b16 %v74, %v73
  %v86 = vpack.c.b16 %v76, %v75
  %v87 = vpack.c.b16 %v78, %v77
  %v88 = vpack.c.b16 %v80, %v79
  %vm97 = vcmask 130048
  %98 = vst.msk [vmem:[#allocation2] sm:$0xff] %vm97, %v81
  %99 = vst.msk [vmem:[#allocation2 + $0x8] sm:$0xff] %vm97, %v82
  %100 = vst.msk [vmem:[#allocation2 + $0x10] sm:$0xff] %vm97, %v83
  %101 = vst.msk [vmem:[#allocation2 + $0x18] sm:$0xff] %vm97, %v84
  %102 = vst.msk [vmem:[#allocation2 + $0x20] sm:$0xff] %vm97, %v85
  %103 = vst.msk [vmem:[#allocation2 + $0x28] sm:$0xff] %vm97, %v86
  %104 = vst.msk [vmem:[#allocation2 + $0x30] sm:$0xff] %vm97, %v87
  %105 = vst.msk [vmem:[#allocation2 + $0x38] sm:$0xff] %vm97, %v88
  %v106 = vld [vmem:[%s32] sm:$0xf]
  %v107 = vld [vmem:[%s32 + $0x4] sm:$0x1]
  %v108 = vld [vmem:[%s32 + $0x8] sm:$0xf]
  %v109 = vld [vmem:[%s32 + $0xc] sm:$0x1]
  %v110 = vld [vmem:[%s32 + $0x10] sm:$0xf]
  %v111 = vld [vmem:[%s32 + $0x14] sm:$0x1]
  %v112 = vld [vmem:[%s32 + $0x18] sm:$0xf]
  %v113 = vld [vmem:[%s32 + $0x1c] sm:$0x1]
  %v114 = vld [vmem:[%s32 + $0x20] sm:$0xf]
  %v115 = vld [vmem:[%s32 + $0x24] sm:$0x1]
  %v116 = vld [vmem:[%s32 + $0x28] sm:$0xf]
  %v117 = vld [vmem:[%s32 + $0x2c] sm:$0x1]
  %v118 = vld [vmem:[%s32 + $0x30] sm:$0xf]
  %v119 = vld [vmem:[%s32 + $0x34] sm:$0x1]
  %v120 = vld [vmem:[%s32 + $0x38] sm:$0xf]
  %v121 = vld [vmem:[%s32 + $0x3c] sm:$0x1]
  %v122 = vld [vmem:[%s32 + $0x48] sm:$0xf]
  %v123 = vld [vmem:[%s32 + $0x4c] sm:$0x1]
  %v124 = vld [vmem:[%s32 + $0x50] sm:$0xf]
  %v125 = vld [vmem:[%s32 + $0x54] sm:$0x1]
  %v126 = vld [vmem:[%s32 + $0x58] sm:$0xf]
  %v127 = vld [vmem:[%s32 + $0x5c] sm:$0x1]
  %v128 = vld [vmem:[%s32 + $0x60] sm:$0xf]
  %v129 = vld [vmem:[%s32 + $0x64] sm:$0x1]
  %v130 = vld [vmem:[%s32 + $0x68] sm:$0xf]
  %v131 = vld [vmem:[%s32 + $0x6c] sm:$0x1]
  %v132 = vld [vmem:[%s32 + $0x70] sm:$0xf]
  %v133 = vld [vmem:[%s32 + $0x74] sm:$0x1]
  %v134 = vld [vmem:[%s32 + $0x78] sm:$0xf]
  %v135 = vld [vmem:[%s32 + $0x7c] sm:$0x1]
  %v136 = vld [vmem:[%s32 + $0x80] sm:$0xf]
  %v137 = vld [vmem:[%s32 + $0x84] sm:$0x1]
  %vm138 = vsmask.f32 3328
  %vm139 = vsmask.f32 7440
  %vm140 = vmor %vm138, %vm139
  %v142 = vshrl.u32 %v106, 16
  %v144 = vrot.slane %v142, 4
  %v145 = vshll.u32 %v106, 16
  %v147 = vrot.slane %v145, 5
  %v148 = vor.u32 %v144, %v147
  %v149 = vrot.slane %v148, 4
  %v151 = vshll.u32 %v107, 16
  %v153 = vrot.slane %v151, 5
  %v154 = vsel %vm140, %v149, %v153
  %v156 = vshrl.u32 %v108, 16
  %v158 = vrot.slane %v156, 4
  %v159 = vshll.u32 %v108, 16
  %v161 = vrot.slane %v159, 5
  %v162 = vor.u32 %v158, %v161
  %v163 = vrot.slane %v162, 4
  %v165 = vshll.u32 %v109, 16
  %v167 = vrot.slane %v165, 5
  %v168 = vsel %vm140, %v163, %v167
  %v170 = vshrl.u32 %v110, 16
  %v172 = vrot.slane %v170, 4
  %v173 = vshll.u32 %v110, 16
  %v175 = vrot.slane %v173, 5
  %v176 = vor.u32 %v172, %v175
  %v177 = vrot.slane %v176, 4
  %v179 = vshll.u32 %v111, 16
  %v181 = vrot.slane %v179, 5
  %v182 = vsel %vm140, %v177, %v181
  %v184 = vshrl.u32 %v112, 16
  %v186 = vrot.slane %v184, 4
  %v187 = vshll.u32 %v112, 16
  %v189 = vrot.slane %v187, 5
  %v190 = vor.u32 %v186, %v189
  %v191 = vrot.slane %v190, 4
  %v193 = vshll.u32 %v113, 16
  %v195 = vrot.slane %v193, 5
  %v196 = vsel %vm140, %v191, %v195
  %v198 = vshrl.u32 %v114, 16
  %v200 = vrot.slane %v198, 4
  %v201 = vshll.u32 %v114, 16
  %v203 = vrot.slane %v201, 5
  %v204 = vor.u32 %v200, %v203
  %v205 = vrot.slane %v204, 4
  %v207 = vshll.u32 %v115, 16
  %v209 = vrot.slane %v207, 5
  %v210 = vsel %vm140, %v205, %v209
  %v212 = vshrl.u32 %v116, 16
  %v214 = vrot.slane %v212, 4
  %v215 = vshll.u32 %v116, 16
  %v217 = vrot.slane %v215, 5
  %v218 = vor.u32 %v214, %v217
  %v219 = vrot.slane %v218, 4
  %v221 = vshll.u32 %v117, 16
  %v223 = vrot.slane %v221, 5
  %v224 = vsel %vm140, %v219, %v223
  %v226 = vshrl.u32 %v118, 16
  %v228 = vrot.slane %v226, 4
  %v229 = vshll.u32 %v118, 16
  %v231 = vrot.slane %v229, 5
  %v232 = vor.u32 %v228, %v231
  %v233 = vrot.slane %v232, 4
  %v235 = vshll.u32 %v119, 16
  %v237 = vrot.slane %v235, 5
  %v238 = vsel %vm140, %v233, %v237
  %v240 = vshrl.u32 %v120, 16
  %v242 = vrot.slane %v240, 4
  %v243 = vshll.u32 %v120, 16
  %v245 = vrot.slane %v243, 5
  %v246 = vor.u32 %v242, %v245
  %v247 = vrot.slane %v246, 4
  %v249 = vshll.u32 %v121, 16
  %v251 = vrot.slane %v249, 5
  %v252 = vsel %vm140, %v247, %v251
  %v254 = vshrl.u32 %v122, 16
  %v256 = vrot.slane %v254, 4
  %v257 = vshll.u32 %v122, 16
  %v259 = vrot.slane %v257, 5
  %v260 = vor.u32 %v256, %v259
  %v261 = vrot.slane %v260, 4
  %v263 = vshll.u32 %v123, 16
  %v265 = vrot.slane %v263, 5
  %v266 = vsel %vm140, %v261, %v265
  %v268 = vshrl.u32 %v124, 16
  %v270 = vrot.slane %v268, 4
  %v271 = vshll.u32 %v124, 16
  %v273 = vrot.slane %v271, 5
  %v274 = vor.u32 %v270, %v273
  %v275 = vrot.slane %v274, 4
  %v277 = vshll.u32 %v125, 16
  %v279 = vrot.slane %v277, 5
  %v280 = vsel %vm140, %v275, %v279
  %v282 = vshrl.u32 %v126, 16
  %v284 = vrot.slane %v282, 4
  %v285 = vshll.u32 %v126, 16
  %v287 = vrot.slane %v285, 5
  %v288 = vor.u32 %v284, %v287
  %v289 = vrot.slane %v288, 4
  %v291 = vshll.u32 %v127, 16
  %v293 = vrot.slane %v291, 5
  %v294 = vsel %vm140, %v289, %v293
  %v296 = vshrl.u32 %v128, 16
  %v298 = vrot.slane %v296, 4
  %v299 = vshll.u32 %v128, 16
  %v301 = vrot.slane %v299, 5
  %v302 = vor.u32 %v298, %v301
  %v303 = vrot.slane %v302, 4
  %v305 = vshll.u32 %v129, 16
  %v307 = vrot.slane %v305, 5
  %v308 = vsel %vm140, %v303, %v307
  %v310 = vshrl.u32 %v130, 16
  %v312 = vrot.slane %v310, 4
  %v313 = vshll.u32 %v130, 16
  %v315 = vrot.slane %v313, 5
  %v316 = vor.u32 %v312, %v315
  %v317 = vrot.slane %v316, 4
  %v319 = vshll.u32 %v131, 16
  %v321 = vrot.slane %v319, 5
  %v322 = vsel %vm140, %v317, %v321
  %v324 = vshrl.u32 %v132, 16
  %v326 = vrot.slane %v324, 4
  %v327 = vshll.u32 %v132, 16
  %v329 = vrot.slane %v327, 5
  %v330 = vor.u32 %v326, %v329
  %v331 = vrot.slane %v330, 4
  %v333 = vshll.u32 %v133, 16
  %v335 = vrot.slane %v333, 5
  %v336 = vsel %vm140, %v331, %v335
  %v338 = vshrl.u32 %v134, 16
  %v340 = vrot.slane %v338, 4
  %v341 = vshll.u32 %v134, 16
  %v343 = vrot.slane %v341, 5
  %v344 = vor.u32 %v340, %v343
  %v345 = vrot.slane %v344, 4
  %v347 = vshll.u32 %v135, 16
  %v349 = vrot.slane %v347, 5
  %v350 = vsel %vm140, %v345, %v349
  %v352 = vshrl.u32 %v136, 16
  %v354 = vrot.slane %v352, 4
  %v355 = vshll.u32 %v136, 16
  %v357 = vrot.slane %v355, 5
  %v358 = vor.u32 %v354, %v357
  %v359 = vrot.slane %v358, 4
  %v361 = vshll.u32 %v137, 16
  %v363 = vrot.slane %v361, 5
  %v364 = vsel %vm140, %v359, %v363
  %v365 = vunpack.c.l.b16 %v154
  %v366 = vunpack.c.l.b16 %v168
  %v367 = vunpack.c.l.b16 %v182
  %v368 = vunpack.c.l.b16 %v196
  %v369 = vunpack.c.l.b16 %v210
  %v370 = vunpack.c.l.b16 %v224
  %v371 = vunpack.c.l.b16 %v238
  %v372 = vunpack.c.l.b16 %v252
  %v373 = vunpack.c.l.b16 %v266
  %v374 = vunpack.c.l.b16 %v280
  %v375 = vunpack.c.l.b16 %v294
  %v376 = vunpack.c.l.b16 %v308
  %v377 = vunpack.c.l.b16 %v322
  %v378 = vunpack.c.l.b16 %v336
  %v379 = vunpack.c.l.b16 %v350
  %v380 = vunpack.c.l.b16 %v364
  %v381 = vpack.c.b16 %v366, %v365
  %v382 = vpack.c.b16 %v368, %v367
  %v383 = vpack.c.b16 %v370, %v369
  %v384 = vpack.c.b16 %v372, %v371
  %v385 = vpack.c.b16 %v374, %v373
  %v386 = vpack.c.b16 %v376, %v375
  %v387 = vpack.c.b16 %v378, %v377
  %v388 = vpack.c.b16 %v380, %v379
  %389 = vrot.lane.b32.xlu0 %v381, 16
  %v390 = vpop.permute.xlu0 %389
  %391 = vrot.lane.b32.xlu0 %v382, 16
  %v392 = vpop.permute.xlu0 %391
  %393 = vrot.lane.b32.xlu0 %v383, 16
  %v394 = vpop.permute.xlu0 %393
  %395 = vrot.lane.b32.xlu0 %v384, 16
  %v396 = vpop.permute.xlu0 %395
  %397 = vrot.lane.b32.xlu0 %v385, 16
  %v398 = vpop.permute.xlu0 %397
  %399 = vrot.lane.b32.xlu0 %v386, 16
  %v400 = vpop.permute.xlu0 %399
  %401 = vrot.lane.b32.xlu0 %v387, 16
  %v402 = vpop.permute.xlu0 %401
  %403 = vrot.lane.b32.xlu0 %v388, 16
  %v404 = vpop.permute.xlu0 %403
  %vm413 = vcmask 261248
  %414 = vst.msk [vmem:[#allocation2] sm:$0xff] %vm413, %v390
  %415 = vst.msk [vmem:[#allocation2 + $0x8] sm:$0xff] %vm413, %v392
  %416 = vst.msk [vmem:[#allocation2 + $0x10] sm:$0xff] %vm413, %v394
  %417 = vst.msk [vmem:[#allocation2 + $0x18] sm:$0xff] %vm413, %v396
  %418 = vst.msk [vmem:[#allocation2 + $0x20] sm:$0xff] %vm413, %v398
  %419 = vst.msk [vmem:[#allocation2 + $0x28] sm:$0xff] %vm413, %v400
  %420 = vst.msk [vmem:[#allocation2 + $0x30] sm:$0xff] %vm413, %v402
  %421 = vst.msk [vmem:[#allocation2 + $0x38] sm:$0xff] %vm413, %v404
  %s422 = sadd.s32 %s29, 1
  %s423 = smul.u32 %s422, 2
  %s424 = smul.addr %s423, 4
  %s425 = scalar_lea.vmem %s0, %s424
  %v426 = vld [vmem:[%s425] sm:$0xf]
  %v427 = vld [vmem:[%s425 + $0x8] sm:$0xf]
  %v428 = vld [vmem:[%s425 + $0x10] sm:$0xf]
  %v429 = vld [vmem:[%s425 + $0x18] sm:$0xf]
  %v430 = vld [vmem:[%s425 + $0x20] sm:$0xf]
  %v431 = vld [vmem:[%s425 + $0x28] sm:$0xf]
  %v432 = vld [vmem:[%s425 + $0x30] sm:$0xf]
  %v433 = vld [vmem:[%s425 + $0x38] sm:$0xf]
  %v434 = vld [vmem:[%s425 + $0x48] sm:$0xf]
  %v435 = vld [vmem:[%s425 + $0x50] sm:$0xf]
  %v436 = vld [vmem:[%s425 + $0x58] sm:$0xf]
  %v437 = vld [vmem:[%s425 + $0x60] sm:$0xf]
  %v438 = vld [vmem:[%s425 + $0x68] sm:$0xf]
  %v439 = vld [vmem:[%s425 + $0x70] sm:$0xf]
  %v440 = vld [vmem:[%s425 + $0x78] sm:$0xf]
  %v441 = vld [vmem:[%s425 + $0x80] sm:$0xf]
  %v458 = vunpack.c.l.b16 %v426
  %v459 = vunpack.c.l.b16 %v427
  %v460 = vunpack.c.l.b16 %v428
  %v461 = vunpack.c.l.b16 %v429
  %v462 = vunpack.c.l.b16 %v430
  %v463 = vunpack.c.l.b16 %v431
  %v464 = vunpack.c.l.b16 %v432
  %v465 = vunpack.c.l.b16 %v433
  %v466 = vunpack.c.l.b16 %v434
  %v467 = vunpack.c.l.b16 %v435
  %v468 = vunpack.c.l.b16 %v436
  %v469 = vunpack.c.l.b16 %v437
  %v470 = vunpack.c.l.b16 %v438
  %v471 = vunpack.c.l.b16 %v439
  %v472 = vunpack.c.l.b16 %v440
  %v473 = vunpack.c.l.b16 %v441
  %v474 = vpack.c.b16 %v459, %v458
  %v475 = vpack.c.b16 %v461, %v460
  %v476 = vpack.c.b16 %v463, %v462
  %v477 = vpack.c.b16 %v465, %v464
  %v478 = vpack.c.b16 %v467, %v466
  %v479 = vpack.c.b16 %v469, %v468
  %v480 = vpack.c.b16 %v471, %v470
  %v481 = vpack.c.b16 %v473, %v472
  %482 = vrot.lane.b32.xlu0 %v474, 32
  %v483 = vpop.permute.xlu0 %482
  %484 = vrot.lane.b32.xlu0 %v475, 32
  %v485 = vpop.permute.xlu0 %484
  %486 = vrot.lane.b32.xlu0 %v476, 32
  %v487 = vpop.permute.xlu0 %486
  %488 = vrot.lane.b32.xlu0 %v477, 32
  %v489 = vpop.permute.xlu0 %488
  %490 = vrot.lane.b32.xlu0 %v478, 32
  %v491 = vpop.permute.xlu0 %490
  %492 = vrot.lane.b32.xlu0 %v479, 32
  %v493 = vpop.permute.xlu0 %492
  %494 = vrot.lane.b32.xlu0 %v480, 32
  %v495 = vpop.permute.xlu0 %494
  %496 = vrot.lane.b32.xlu0 %v481, 32
  %v497 = vpop.permute.xlu0 %496
  %vm506 = vcmask 392448
  %507 = vst.msk [vmem:[#allocation2] sm:$0xff] %vm506, %v483
  %508 = vst.msk [vmem:[#allocation2 + $0x8] sm:$0xff] %vm506, %v485
  %509 = vst.msk [vmem:[#allocation2 + $0x10] sm:$0xff] %vm506, %v487
  %510 = vst.msk [vmem:[#allocation2 + $0x18] sm:$0xff] %vm506, %v489
  %511 = vst.msk [vmem:[#allocation2 + $0x20] sm:$0xff] %vm506, %v491
  %512 = vst.msk [vmem:[#allocation2 + $0x28] sm:$0xff] %vm506, %v493
  %513 = vst.msk [vmem:[#allocation2 + $0x30] sm:$0xff] %vm506, %v495
  %514 = vst.msk [vmem:[#allocation2 + $0x38] sm:$0xff] %vm506, %v497
  %v515 = vld [vmem:[%s425] sm:$0xf]
  %v516 = vld [vmem:[%s425 + $0x4] sm:$0x1]
  %v517 = vld [vmem:[%s425 + $0x8] sm:$0xf]
  %v518 = vld [vmem:[%s425 + $0xc] sm:$0x1]
  %v519 = vld [vmem:[%s425 + $0x10] sm:$0xf]
  %v520 = vld [vmem:[%s425 + $0x14] sm:$0x1]
  %v521 = vld [vmem:[%s425 + $0x18] sm:$0xf]
  %v522 = vld [vmem:[%s425 + $0x1c] sm:$0x1]
  %v523 = vld [vmem:[%s425 + $0x20] sm:$0xf]
  %v524 = vld [vmem:[%s425 + $0x24] sm:$0x1]
  %v525 = vld [vmem:[%s425 + $0x28] sm:$0xf]
  %v526 = vld [vmem:[%s425 + $0x2c] sm:$0x1]
  %v527 = vld [vmem:[%s425 + $0x30] sm:$0xf]
  %v528 = vld [vmem:[%s425 + $0x34] sm:$0x1]
  %v529 = vld [vmem:[%s425 + $0x38] sm:$0xf]
  %v530 = vld [vmem:[%s425 + $0x3c] sm:$0x1]
  %v531 = vld [vmem:[%s425 + $0x48] sm:$0xf]
  %v532 = vld [vmem:[%s425 + $0x4c] sm:$0x1]
  %v533 = vld [vmem:[%s425 + $0x50] sm:$0xf]
  %v534 = vld [vmem:[%s425 + $0x54] sm:$0x1]
  %v535 = vld [vmem:[%s425 + $0x58] sm:$0xf]
  %v536 = vld [vmem:[%s425 + $0x5c] sm:$0x1]
  %v537 = vld [vmem:[%s425 + $0x60] sm:$0xf]
  %v538 = vld [vmem:[%s425 + $0x64] sm:$0x1]
  %v539 = vld [vmem:[%s425 + $0x68] sm:$0xf]
  %v540 = vld [vmem:[%s425 + $0x6c] sm:$0x1]
  %v541 = vld [vmem:[%s425 + $0x70] sm:$0xf]
  %v542 = vld [vmem:[%s425 + $0x74] sm:$0x1]
  %v543 = vld [vmem:[%s425 + $0x78] sm:$0xf]
  %v544 = vld [vmem:[%s425 + $0x7c] sm:$0x1]
  %v545 = vld [vmem:[%s425 + $0x80] sm:$0xf]
  %v546 = vld [vmem:[%s425 + $0x84] sm:$0x1]
  %v548 = vshrl.u32 %v515, 16
  %v550 = vrot.slane %v548, 4
  %v551 = vshll.u32 %v515, 16
  %v553 = vrot.slane %v551, 5
  %v554 = vor.u32 %v550, %v553
  %v555 = vrot.slane %v554, 4
  %v557 = vshll.u32 %v516, 16
  %v559 = vrot.slane %v557, 5
  %v560 = vsel %vm140, %v555, %v559
  %v562 = vshrl.u32 %v517, 16
  %v564 = vrot.slane %v562, 4
  %v565 = vshll.u32 %v517, 16
  %v567 = vrot.slane %v565, 5
  %v568 = vor.u32 %v564, %v567
  %v569 = vrot.slane %v568, 4
  %v571 = vshll.u32 %v518, 16
  %v573 = vrot.slane %v571, 5
  %v574 = vsel %vm140, %v569, %v573
  %v576 = vshrl.u32 %v519, 16
  %v578 = vrot.slane %v576, 4
  %v579 = vshll.u32 %v519, 16
  %v581 = vrot.slane %v579, 5
  %v582 = vor.u32 %v578, %v581
  %v583 = vrot.slane %v582, 4
  %v585 = vshll.u32 %v520, 16
  %v587 = vrot.slane %v585, 5
  %v588 = vsel %vm140, %v583, %v587
  %v590 = vshrl.u32 %v521, 16
  %v592 = vrot.slane %v590, 4
  %v593 = vshll.u32 %v521, 16
  %v595 = vrot.slane %v593, 5
  %v596 = vor.u32 %v592, %v595
  %v597 = vrot.slane %v596, 4
  %v599 = vshll.u32 %v522, 16
  %v601 = vrot.slane %v599, 5
  %v602 = vsel %vm140, %v597, %v601
  %v604 = vshrl.u32 %v523, 16
  %v606 = vrot.slane %v604, 4
  %v607 = vshll.u32 %v523, 16
  %v609 = vrot.slane %v607, 5
  %v610 = vor.u32 %v606, %v609
  %v611 = vrot.slane %v610, 4
  %v613 = vshll.u32 %v524, 16
  %v615 = vrot.slane %v613, 5
  %v616 = vsel %vm140, %v611, %v615
  %v618 = vshrl.u32 %v525, 16
  %v620 = vrot.slane %v618, 4
  %v621 = vshll.u32 %v525, 16
  %v623 = vrot.slane %v621, 5
  %v624 = vor.u32 %v620, %v623
  %v625 = vrot.slane %v624, 4
  %v627 = vshll.u32 %v526, 16
  %v629 = vrot.slane %v627, 5
  %v630 = vsel %vm140, %v625, %v629
  %v632 = vshrl.u32 %v527, 16
  %v634 = vrot.slane %v632, 4
  %v635 = vshll.u32 %v527, 16
  %v637 = vrot.slane %v635, 5
  %v638 = vor.u32 %v634, %v637
  %v639 = vrot.slane %v638, 4
  %v641 = vshll.u32 %v528, 16
  %v643 = vrot.slane %v641, 5
  %v644 = vsel %vm140, %v639, %v643
  %v646 = vshrl.u32 %v529, 16
  %v648 = vrot.slane %v646, 4
  %v649 = vshll.u32 %v529, 16
  %v651 = vrot.slane %v649, 5
  %v652 = vor.u32 %v648, %v651
  %v653 = vrot.slane %v652, 4
  %v655 = vshll.u32 %v530, 16
  %v657 = vrot.slane %v655, 5
  %v658 = vsel %vm140, %v653, %v657
  %v660 = vshrl.u32 %v531, 16
  %v662 = vrot.slane %v660, 4
  %v663 = vshll.u32 %v531, 16
  %v665 = vrot.slane %v663, 5
  %v666 = vor.u32 %v662, %v665
  %v667 = vrot.slane %v666, 4
  %v669 = vshll.u32 %v532, 16
  %v671 = vrot.slane %v669, 5
  %v672 = vsel %vm140, %v667, %v671
  %v674 = vshrl.u32 %v533, 16
  %v676 = vrot.slane %v674, 4
  %v677 = vshll.u32 %v533, 16
  %v679 = vrot.slane %v677, 5
  %v680 = vor.u32 %v676, %v679
  %v681 = vrot.slane %v680, 4
  %v683 = vshll.u32 %v534, 16
  %v685 = vrot.slane %v683, 5
  %v686 = vsel %vm140, %v681, %v685
  %v688 = vshrl.u32 %v535, 16
  %v690 = vrot.slane %v688, 4
  %v691 = vshll.u32 %v535, 16
  %v693 = vrot.slane %v691, 5
  %v694 = vor.u32 %v690, %v693
  %v695 = vrot.slane %v694, 4
  %v697 = vshll.u32 %v536, 16
  %v699 = vrot.slane %v697, 5
  %v700 = vsel %vm140, %v695, %v699
  %v702 = vshrl.u32 %v537, 16
  %v704 = vrot.slane %v702, 4
  %v705 = vshll.u32 %v537, 16
  %v707 = vrot.slane %v705, 5
  %v708 = vor.u32 %v704, %v707
  %v709 = vrot.slane %v708, 4
  %v711 = vshll.u32 %v538, 16
  %v713 = vrot.slane %v711, 5
  %v714 = vsel %vm140, %v709, %v713
  %v716 = vshrl.u32 %v539, 16
  %v718 = vrot.slane %v716, 4
  %v719 = vshll.u32 %v539, 16
  %v721 = vrot.slane %v719, 5
  %v722 = vor.u32 %v718, %v721
  %v723 = vrot.slane %v722, 4
  %v725 = vshll.u32 %v540, 16
  %v727 = vrot.slane %v725, 5
  %v728 = vsel %vm140, %v723, %v727
  %v730 = vshrl.u32 %v541, 16
  %v732 = vrot.slane %v730, 4
  %v733 = vshll.u32 %v541, 16
  %v735 = vrot.slane %v733, 5
  %v736 = vor.u32 %v732, %v735
  %v737 = vrot.slane %v736, 4
  %v739 = vshll.u32 %v542, 16
  %v741 = vrot.slane %v739, 5
  %v742 = vsel %vm140, %v737, %v741
  %v744 = vshrl.u32 %v543, 16
  %v746 = vrot.slane %v744, 4
  %v747 = vshll.u32 %v543, 16
  %v749 = vrot.slane %v747, 5
  %v750 = vor.u32 %v746, %v749
  %v751 = vrot.slane %v750, 4
  %v753 = vshll.u32 %v544, 16
  %v755 = vrot.slane %v753, 5
  %v756 = vsel %vm140, %v751, %v755
  %v758 = vshrl.u32 %v545, 16
  %v760 = vrot.slane %v758, 4
  %v761 = vshll.u32 %v545, 16
  %v763 = vrot.slane %v761, 5
  %v764 = vor.u32 %v760, %v763
  %v765 = vrot.slane %v764, 4
  %v767 = vshll.u32 %v546, 16
  %v769 = vrot.slane %v767, 5
  %v770 = vsel %vm140, %v765, %v769
  %v771 = vunpack.c.l.b16 %v560
  %v772 = vunpack.c.l.b16 %v574
  %v773 = vunpack.c.l.b16 %v588
  %v774 = vunpack.c.l.b16 %v602
  %v775 = vunpack.c.l.b16 %v616
  %v776 = vunpack.c.l.b16 %v630
  %v777 = vunpack.c.l.b16 %v644
  %v778 = vunpack.c.l.b16 %v658
  %v779 = vunpack.c.l.b16 %v672
  %v780 = vunpack.c.l.b16 %v686
  %v781 = vunpack.c.l.b16 %v700
  %v782 = vunpack.c.l.b16 %v714
  %v783 = vunpack.c.l.b16 %v728
  %v784 = vunpack.c.l.b16 %v742
  %v785 = vunpack.c.l.b16 %v756
  %v786 = vunpack.c.l.b16 %v770
  %v787 = vpack.c.b16 %v772, %v771
  %v788 = vpack.c.b16 %v774, %v773
  %v789 = vpack.c.b16 %v776, %v775
  %v790 = vpack.c.b16 %v778, %v777
  %v791 = vpack.c.b16 %v780, %v779
  %v792 = vpack.c.b16 %v782, %v781
  %v793 = vpack.c.b16 %v784, %v783
  %v794 = vpack.c.b16 %v786, %v785
  %795 = vrot.lane.b32.xlu0 %v787, 48
  %v796 = vpop.permute.xlu0 %795
  %797 = vrot.lane.b32.xlu0 %v788, 48
  %v798 = vpop.permute.xlu0 %797
  %799 = vrot.lane.b32.xlu0 %v789, 48
  %v800 = vpop.permute.xlu0 %799
  %801 = vrot.lane.b32.xlu0 %v790, 48
  %v802 = vpop.permute.xlu0 %801
  %803 = vrot.lane.b32.xlu0 %v791, 48
  %v804 = vpop.permute.xlu0 %803
  %805 = vrot.lane.b32.xlu0 %v792, 48
  %v806 = vpop.permute.xlu0 %805
  %807 = vrot.lane.b32.xlu0 %v793, 48
  %v808 = vpop.permute.xlu0 %807
  %809 = vrot.lane.b32.xlu0 %v794, 48
  %v810 = vpop.permute.xlu0 %809
  %vm819 = vcmask 523648
  %820 = vst.msk [vmem:[#allocation2] sm:$0xff] %vm819, %v796
  %821 = vst.msk [vmem:[#allocation2 + $0x8] sm:$0xff] %vm819, %v798
  %822 = vst.msk [vmem:[#allocation2 + $0x10] sm:$0xff] %vm819, %v800
  %823 = vst.msk [vmem:[#allocation2 + $0x18] sm:$0xff] %vm819, %v802
  %824 = vst.msk [vmem:[#allocation2 + $0x20] sm:$0xff] %vm819, %v804
  %825 = vst.msk [vmem:[#allocation2 + $0x28] sm:$0xff] %vm819, %v806
  %826 = vst.msk [vmem:[#allocation2 + $0x30] sm:$0xff] %vm819, %v808
  %827 = vst.msk [vmem:[#allocation2 + $0x38] sm:$0xff] %vm819, %v810
  %v828 = vld [vmem:[#allocation2] sm:$0xff]
  %v829 = vld [vmem:[#allocation2 + $0x8] sm:$0xff]
  %v830 = vld [vmem:[#allocation2 + $0x10] sm:$0xff]
  %v831 = vld [vmem:[#allocation2 + $0x18] sm:$0xff]
  %v832 = vld [vmem:[#allocation2 + $0x20] sm:$0xff]
  %v833 = vld [vmem:[#allocation2 + $0x28] sm:$0xff]
  %v834 = vld [vmem:[#allocation2 + $0x30] sm:$0xff]
  %v835 = vld [vmem:[#allocation2 + $0x38] sm:$0xff]
  %v836 = vld [vmem:[%s1] sm:$0xf]
  %v837 = vld [vmem:[%s1 + $0x4] sm:$0xf]
  %v838 = vld [vmem:[%s1 + $0x8] sm:$0xf]
  %v839 = vld [vmem:[%s1 + $0xc] sm:$0xf]
  %v840 = vld [vmem:[%s1 + $0x10] sm:$0xf]
  %v841 = vld [vmem:[%s1 + $0x14] sm:$0xf]
  %v842 = vld [vmem:[%s1 + $0x18] sm:$0xf]
  %v843 = vld [vmem:[%s1 + $0x1c] sm:$0xf]
  %v844 = vld [vmem:[%s2] sm:$0x1]
  %v846 = vlaneseq
  %v847 = vshrl.u32 %v846, 7
  %v848 = vsub.s32 0, %v847
  %v849 = vrot.slane %v844, %v848
  %v859 = vunpack.c.l.b16 %v836
  %v860 = vunpack.c.l.b16 %v837
  %v861 = vunpack.c.l.b16 %v838
  %v862 = vunpack.c.l.b16 %v839
  %v863 = vunpack.c.l.b16 %v840
  %v864 = vunpack.c.l.b16 %v841
  %v865 = vunpack.c.l.b16 %v842
  %v866 = vunpack.c.l.b16 %v843
  %v867 = vpack.c.b16 %v860, %v859
  %v868 = vpack.c.b16 %v862, %v861
  %v869 = vpack.c.b16 %v864, %v863
  %v870 = vpack.c.b16 %v866, %v865
  %vm875 = vcmask 523264
  %v877 = vsel %vm875, %v828, 0
  %v880 = vsel %vm875, %v829, 0
  %v883 = vsel %vm875, %v830, 0
  %v886 = vsel %vm875, %v831, 0
  %v889 = vsel %vm875, %v832, 0
  %v892 = vsel %vm875, %v833, 0
  %v895 = vsel %vm875, %v834, 0
  %v898 = vsel %vm875, %v835, 0
  %900 = vmatprep.subr.bf16.mxu0 0
  %901 = vmatpush1.bf16.msra.mxu0 %v867
  %902 = vmatprep.subr.bf16.mxu0 0
  %903 = vmatpush1.bf16.msra.mxu0 %v868
  %904 = vmatprep.subr.bf16.mxu0 0
  %905 = vmatpush1.bf16.msra.mxu0 %v869
  %906 = vmatprep.subr.bf16.mxu0 0
  %907 = vmatpush1.bf16.msra.mxu0 %v870
  %908 = vmatprep.subr.bf16.mxu0 0
  %909 = vmatpush1.bf16.msra.mxu0 0
  %910 = vmatprep.subr.bf16.mxu0 0
  %911 = vmatpush1.bf16.msra.mxu0 0
  %912 = vmatprep.subr.bf16.mxu0 0
  %913 = vmatpush1.bf16.msra.mxu0 0
  %914 = vmatprep.subr.bf16.mxu0 0
  %915 = vmatpush1.bf16.msra.mxu0 0
  %916 = vmatprep.subr.bf16.mxu0 0
  %917 = vmatpush1.bf16.msra.mxu0 0
  %918 = vmatprep.subr.bf16.mxu0 0
  %919 = vmatpush1.bf16.msra.mxu0 0
  %920 = vmatprep.subr.bf16.mxu0 0
  %921 = vmatpush1.bf16.msra.mxu0 0
  %922 = vmatprep.subr.bf16.mxu0 0
  %923 = vmatpush1.bf16.msra.mxu0 0
  %924 = vmatprep.subr.bf16.mxu0 0
  %925 = vmatpush1.bf16.msra.mxu0 0
  %926 = vmatprep.subr.bf16.mxu0 0
  %927 = vmatpush1.bf16.msra.mxu0 0
  %928 = vmatprep.subr.bf16.mxu0 0
  %929 = vmatpush1.bf16.msra.mxu0 0
  %930 = vmatprep.subr.bf16.mxu0 0
  %931 = vmatpush1.bf16.msra.mxu0 0
  %932 = vmatprep.mubr.bf16.mxu0 0
  %933 = vmatmul.mubr.bf16.gmra.mrb[0].mxu0 %v877
  %v934 = vpop.f32.mrb[0].mxu0
  %v935 = vadd.f32 %v849, %v934
  %v936 = vpop.f32.mrb[0].mxu0
  %v937 = vpop.f32.mrb[0].mxu0
  %v938 = vadd.f32 %v849, %v937
  %v939 = vpop.f32.mrb[0].mxu0
  %940 = vmatprep.mubr.bf16.mxu0 0
  %941 = vmatmul.mubr.bf16.gmra.mrb[0].mxu0 %v880
  %v942 = vpop.f32.mrb[0].mxu0
  %v943 = vadd.f32 %v849, %v942
  %v944 = vpop.f32.mrb[0].mxu0
  %v945 = vpop.f32.mrb[0].mxu0
  %v946 = vadd.f32 %v849, %v945
  %v947 = vpop.f32.mrb[0].mxu0
  %948 = vmatprep.mubr.bf16.mxu0 0
  %949 = vmatmul.mubr.bf16.gmra.mrb[0].mxu0 %v883
  %v950 = vpop.f32.mrb[0].mxu0
  %v951 = vadd.f32 %v849, %v950
  %v952 = vpop.f32.mrb[0].mxu0
  %v953 = vpop.f32.mrb[0].mxu0
  %v954 = vadd.f32 %v849, %v953
  %v955 = vpop.f32.mrb[0].mxu0
  %956 = vmatprep.mubr.bf16.mxu0 0
  %957 = vmatmul.mubr.bf16.gmra.mrb[0].mxu0 %v886
  %v958 = vpop.f32.mrb[0].mxu0
  %v959 = vadd.f32 %v849, %v958
  %v960 = vpop.f32.mrb[0].mxu0
  %v961 = vpop.f32.mrb[0].mxu0
  %v962 = vadd.f32 %v849, %v961
  %v963 = vpop.f32.mrb[0].mxu0
  %964 = vmatprep.mubr.bf16.mxu0 0
  %965 = vmatmul.mubr.bf16.gmra.mrb[0].mxu0 %v889
  %v966 = vpop.f32.mrb[0].mxu0
  %v967 = vadd.f32 %v849, %v966
  %v968 = vpop.f32.mrb[0].mxu0
  %v969 = vpop.f32.mrb[0].mxu0
  %v970 = vadd.f32 %v849, %v969
  %v971 = vpop.f32.mrb[0].mxu0
  %972 = vmatprep.mubr.bf16.mxu0 0
  %973 = vmatmul.mubr.bf16.gmra.mrb[0].mxu0 %v892
  %v974 = vpop.f32.mrb[0].mxu0
  %v975 = vadd.f32 %v849, %v974
  %v976 = vpop.f32.mrb[0].mxu0
  %v977 = vpop.f32.mrb[0].mxu0
  %v978 = vadd.f32 %v849, %v977
  %v979 = vpop.f32.mrb[0].mxu0
  %980 = vmatprep.mubr.bf16.mxu0 0
  %981 = vmatmul.mubr.bf16.gmra.mrb[0].mxu0 %v895
  %v982 = vpop.f32.mrb[0].mxu0
  %v983 = vadd.f32 %v849, %v982
  %v984 = vpop.f32.mrb[0].mxu0
  %v985 = vpop.f32.mrb[0].mxu0
  %v986 = vadd.f32 %v849, %v985
  %v987 = vpop.f32.mrb[0].mxu0
  %988 = vmatprep.mubr.bf16.mxu0 0
  %989 = vmatmul.mubr.bf16.gmra.mrb[0].mxu0 %v898
  %v990 = vpop.f32.mrb[0].mxu0
  %v991 = vadd.f32 %v849, %v990
  %v992 = vpop.f32.mrb[0].mxu0
  %v993 = vpop.f32.mrb[0].mxu0
  %v994 = vadd.f32 %v849, %v993
  %v995 = vpop.f32.mrb[0].mxu0
  %996 = vdwg.mxu0
  %v997 = vpack.c.bf16 %v938, %v935
  %v998 = vpack.c.bf16 %v946, %v943
  %v999 = vpack.c.bf16 %v954, %v951
  %v1000 = vpack.c.bf16 %v962, %v959
  %v1001 = vpack.c.bf16 %v970, %v967
  %v1002 = vpack.c.bf16 %v978, %v975
  %v1003 = vpack.c.bf16 %v986, %v983
  %v1004 = vpack.c.bf16 %v994, %v991
  %v1013 = vunpack.c.l.b16 %v997
  %v1014 = vunpack.c.h.b16 %v997
  %v1015 = vunpack.c.l.b16 %v998
  %v1016 = vunpack.c.h.b16 %v998
  %v1017 = vunpack.c.l.b16 %v999
  %v1018 = vunpack.c.h.b16 %v999
  %v1019 = vunpack.c.l.b16 %v1000
  %v1020 = vunpack.c.h.b16 %v1000
  %v1021 = vunpack.c.l.b16 %v1001
  %v1022 = vunpack.c.h.b16 %v1001
  %v1023 = vunpack.c.l.b16 %v1002
  %v1024 = vunpack.c.h.b16 %v1002
  %v1025 = vunpack.c.l.b16 %v1003
  %v1026 = vunpack.c.h.b16 %v1003
  %v1027 = vunpack.c.l.b16 %v1004
  %v1028 = vunpack.c.h.b16 %v1004
  %v1029 = vpack.c.b16 %v1013, %v1013
  %v1030 = vpack.c.b16 %v1014, %v1014
  %v1031 = vpack.c.b16 %v1015, %v1015
  %v1032 = vpack.c.b16 %v1016, %v1016
  %v1033 = vpack.c.b16 %v1017, %v1017
  %v1034 = vpack.c.b16 %v1018, %v1018
  %v1035 = vpack.c.b16 %v1019, %v1019
  %v1036 = vpack.c.b16 %v1020, %v1020
  %v1037 = vpack.c.b16 %v1021, %v1021
  %v1038 = vpack.c.b16 %v1022, %v1022
  %v1039 = vpack.c.b16 %v1023, %v1023
  %v1040 = vpack.c.b16 %v1024, %v1024
  %v1041 = vpack.c.b16 %v1025, %v1025
  %v1042 = vpack.c.b16 %v1026, %v1026
  %v1043 = vpack.c.b16 %v1027, %v1027
  %v1044 = vpack.c.b16 %v1028, %v1028
  %1061 = vst [vmem:[%s25] sm:$0xf] %v1029
  %1062 = vst [vmem:[%s25 + $0x4] sm:$0xf] %v1030
  %1063 = vst [vmem:[%s25 + $0x8] sm:$0xf] %v1031
  %1064 = vst [vmem:[%s25 + $0xc] sm:$0xf] %v1032
  %1065 = vst [vmem:[%s25 + $0x10] sm:$0xf] %v1033
  %1066 = vst [vmem:[%s25 + $0x14] sm:$0xf] %v1034
  %1067 = vst [vmem:[%s25 + $0x18] sm:$0xf] %v1035
  %1068 = vst [vmem:[%s25 + $0x1c] sm:$0xf] %v1036
  %1069 = vst [vmem:[%s25 + $0x20] sm:$0xf] %v1037
  %1070 = vst [vmem:[%s25 + $0x24] sm:$0xf] %v1038
  %1071 = vst [vmem:[%s25 + $0x28] sm:$0xf] %v1039
  %1072 = vst [vmem:[%s25 + $0x2c] sm:$0xf] %v1040
  %1073 = vst [vmem:[%s25 + $0x30] sm:$0xf] %v1041
  %1074 = vst [vmem:[%s25 + $0x34] sm:$0xf] %v1042
  %1075 = vst [vmem:[%s25 + $0x38] sm:$0xf] %v1043
  %1076 = vst [vmem:[%s25 + $0x3c] sm:$0xf] %v1044
  %s1077 = sadd.s32 0, 0
  %s1078 = smul.u32 16, %s1077
  %p1079 = scmp.lt.s32.totalorder %s1078, 15
  %s1080 = scalar_select %p1079, %s1078, 15
  %s1081 = smul.addr %s1080, 4
  %s1082 = scalar_lea.vmem %s3, %s1081
  // Predicated region
  $region14: #{conv2d_deep_sym_forward.3} parent=0 // pred_check
    _
  $region15: #{conv2d_deep_sym_forward.3} parent=0 // pred_check_branch
    %1084 = sbr.rel (0) target = $region17
  $region16: #{conv2d_deep_sym_forward.3} parent=0 // pred_region
    %s1085 = sadd.s32 0, 0
    %s1086 = smul.u32 16, %s1085
  $region17: #{conv2d_deep_sym_forward.3} parent=0 // pred_fallthru
    _
  // Predicated region
  $region18: #{conv2d_deep_sym_forward.3} parent=0 // pred_check
    _
  $region19: #{conv2d_deep_sym_forward.3} parent=0 // pred_check_branch
    %1088 = sbr.rel (0) target = $region21
  $region20: #{conv2d_deep_sym_forward.3} parent=0 // pred_region
    %s1089 = sadd.s32 0, 0
    %s1090 = smul.u32 16, %s1089
    %p1091 = scmp.lt.s32.totalorder %s1090, 15
    %s1092 = scalar_select %p1091, %s1090, 15
    %s1093 = smul.addr %s1092, 4
    %s1094 = scalar_lea.vmem %s3, %s1093
  $region21: #{conv2d_deep_sym_forward.3} parent=0 // pred_fallthru
    _

// kernel: conv2d_deep_sym_forward.2
$region0: #{conv2d_deep_sym_forward.2}
  #allocation0 [shape = 'u32[]', space=smem, size = 0x4, offset = 0x4, fixed_abs, tag = 'smem constant byte address 0x4 - core index']
  #allocation1 [shape = 'u32[144,128]{1,0:T(1,128)}', space=vmem, size = 0x12000, scoped, tag = 'internal scratch']
  #allocation2 [shape = 'bf16[384,64]{1,0:T(16,128)(2,1)}', space=vmem, size = 0x18000, scoped, tag = 'scratch operand']
  %s0 = inlined_call_operand.vmem [shape: bf16[6,9,9,16], index: 0, kind: input, shape index: {}]
  %s1 = inlined_call_operand.vmem [shape: bf16[64,128], index: 1, kind: input, shape index: {}]
  %s2 = inlined_call_operand.vmem [shape: f32[1,128], index: 2, kind: input, shape index: {}]
  %s3 = inlined_call_operand.vmem [shape: bf16[384,128], index: 3, kind: output, shape index: {}]
  %s4 = sld [smem:[#allocation0]]
  $region22: #{conv2d_deep_sym_forward.2} parent=0
    _
  %s6 = ssub.s32 1, %s4
  %s7 = scalar_select 0, %s6, %s4
  // Predicated region
  $region2: #{conv2d_deep_sym_forward.2} parent=0 // pred_check
    _
  $region3: #{conv2d_deep_sym_forward.2} parent=0 // pred_check_branch
    %9 = sbr.rel (0) target = $region5
  $region4: #{conv2d_deep_sym_forward.2} parent=0 // pred_region
    _
  $region5: #{conv2d_deep_sym_forward.2} parent=0 // pred_fallthru
    _
  // Predicated region
  $region6: #{conv2d_deep_sym_forward.2} parent=0 // pred_check
    _
  $region7: #{conv2d_deep_sym_forward.2} parent=0 // pred_check_branch
    %11 = sbr.rel (0) target = $region9
  $region8: #{conv2d_deep_sym_forward.2} parent=0 // pred_region
    _
  $region9: #{conv2d_deep_sym_forward.2} parent=0 // pred_fallthru
    _
  // Predicated region
  $region10: #{conv2d_deep_sym_forward.2} parent=0 // pred_check
    _
  $region11: #{conv2d_deep_sym_forward.2} parent=0 // pred_check_branch
    %13 = sbr.rel (0) target = $region13
  $region12: #{conv2d_deep_sym_forward.2} parent=0 // pred_region
    _
  $region13: #{conv2d_deep_sym_forward.2} parent=0 // pred_fallthru
    _
  %s14 = sadd.s32 0, 0
  %s15 = smul.u32 48, %s14
  %p16 = scmp.lt.s32.totalorder %s15, 47
  %s17 = scalar_select %p16, %s15, 47
  %s18 = smul.addr %s17, 4
  %s19 = scalar_lea.vmem %s3, %s18
  %s20 = sadd.s32 0, 0
  %s21 = smul.u32 48, %s20
  %p22 = scmp.lt.s32.totalorder %s21, 47
  %s23 = scalar_select %p22, %s21, 47
  %s24 = smul.addr %s23, 4
  %s25 = scalar_lea.vmem %s3, %s24
  %s26 = sadd.s32 0, 0
  %s27 = smul.u32 48, %s26
  %s29 = smul.u32 0, 8
  %s30 = smul.u32 %s29, 2
  %s31 = smul.addr %s30, 4
  %s32 = scalar_lea.vmem %s0, %s31
  %v33 = vld [vmem:[%s32] sm:$0xf]
  %v34 = vld [vmem:[%s32 + $0x8] sm:$0xf]
  %v35 = vld [vmem:[%s32 + $0x10] sm:$0xf]
  %v36 = vld [vmem:[%s32 + $0x18] sm:$0xf]
  %v37 = vld [vmem:[%s32 + $0x20] sm:$0xf]
  %v38 = vld [vmem:[%s32 + $0x28] sm:$0xf]
  %v39 = vld [vmem:[%s32 + $0x30] sm:$0xf]
  %v40 = vld [vmem:[%s32 + $0x38] sm:$0xf]
  %v41 = vld [vmem:[%s32 + $0x48] sm:$0xf]
  %v42 = vld [vmem:[%s32 + $0x50] sm:$0xf]
  %v43 = vld [vmem:[%s32 + $0x58] sm:$0xf]
  %v44 = vld [vmem:[%s32 + $0x60] sm:$0xf]
  %v45 = vld [vmem:[%s32 + $0x68] sm:$0xf]
  %v46 = vld [vmem:[%s32 + $0x70] sm:$0xf]
  %v47 = vld [vmem:[%s32 + $0x78] sm:$0xf]
  %v48 = vld [vmem:[%s32 + $0x80] sm:$0xf]
  %v49 = vld [vmem:[%s32 + $0x90] sm:$0xf]
  %v50 = vld [vmem:[%s32 + $0x98] sm:$0xf]
  %v51 = vld [vmem:[%s32 + $0xa0] sm:$0xf]
  %v52 = vld [vmem:[%s32 + $0xa8] sm:$0xf]
  %v53 = vld [vmem:[%s32 + $0xb0] sm:$0xf]
  %v54 = vld [vmem:[%s32 + $0xb8] sm:$0xf]
  %v55 = vld [vmem:[%s32 + $0xc0] sm:$0xf]
  %v56 = vld [vmem:[%s32 + $0xc8] sm:$0xf]
  %v57 = vld [vmem:[%s32 + $0xd8] sm:$0xf]
  %v58 = vld [vmem:[%s32 + $0xe0] sm:$0xf]
  %v59 = vld [vmem:[%s32 + $0xe8] sm:$0xf]
  %v60 = vld [vmem:[%s32 + $0xf0] sm:$0xf]
  %v61 = vld [vmem:[%s32 + $0xf8] sm:$0xf]
  %v62 = vld [vmem:[%s32 + $0x100] sm:$0xf]
  %v63 = vld [vmem:[%s32 + $0x108] sm:$0xf]
  %v64 = vld [vmem:[%s32 + $0x110] sm:$0xf]
  %v65 = vld [vmem:[%s32 + $0x120] sm:$0xf]
  %v66 = vld [vmem:[%s32 + $0x128] sm:$0xf]
  %v67 = vld [vmem:[%s32 + $0x130] sm:$0xf]
  %v68 = vld [vmem:[%s32 + $0x138] sm:$0xf]
  %v69 = vld [vmem:[%s32 + $0x140] sm:$0xf]
  %v70 = vld [vmem:[%s32 + $0x148] sm:$0xf]
  %v71 = vld [vmem:[%s32 + $0x150] sm:$0xf]
  %v72 = vld [vmem:[%s32 + $0x158] sm:$0xf]
  %v73 = vld [vmem:[%s32 + $0x168] sm:$0xf]
  %v74 = vld [vmem:[%s32 + $0x170] sm:$0xf]
  %v75 = vld [vmem:[%s32 + $0x178] sm:$0xf]
  %v76 = vld [vmem:[%s32 + $0x180] sm:$0xf]
  %v77 = vld [vmem:[%s32 + $0x188] sm:$0xf]
  %v78 = vld [vmem:[%s32 + $0x190] sm:$0xf]
  %v79 = vld [vmem:[%s32 + $0x198] sm:$0xf]
  %v80 = vld [vmem:[%s32 + $0x1a0] sm:$0xf]
  %v129 = vunpack.c.l.b16 %v33
  %v130 = vunpack.c.l.b16 %v34
  %v131 = vunpack.c.l.b16 %v35
  %v132 = vunpack.c.l.b16 %v36
  %v133 = vunpack.c.l.b16 %v37
  %v134 = vunpack.c.l.b16 %v38
  %v135 = vunpack.c.l.b16 %v39
  %v136 = vunpack.c.l.b16 %v40
  %v137 = vunpack.c.l.b16 %v41
  %v138 = vunpack.c.l.b16 %v42
  %v139 = vunpack.c.l.b16 %v43
  %v140 = vunpack.c.l.b16 %v44
  %v141 = vunpack.c.l.b16 %v45
  %v142 = vunpack.c.l.b16 %v46
  %v143 = vunpack.c.l.b16 %v47
  %v144 = vunpack.c.l.b16 %v48
  %v145 = vunpack.c.l.b16 %v49
  %v146 = vunpack.c.l.b16 %v50
  %v147 = vunpack.c.l.b16 %v51
  %v148 = vunpack.c.l.b16 %v52
  %v149 = vunpack.c.l.b16 %v53
  %v150 = vunpack.c.l.b16 %v54
  %v151 = vunpack.c.l.b16 %v55
  %v152 = vunpack.c.l.b16 %v56
  %v153 = vunpack.c.l.b16 %v57
  %v154 = vunpack.c.l.b16 %v58
  %v155 = vunpack.c.l.b16 %v59
  %v156 = vunpack.c.l.b16 %v60
  %v157 = vunpack.c.l.b16 %v61
  %v158 = vunpack.c.l.b16 %v62
  %v159 = vunpack.c.l.b16 %v63
  %v160 = vunpack.c.l.b16 %v64
  %v161 = vunpack.c.l.b16 %v65
  %v162 = vunpack.c.l.b16 %v66
  %v163 = vunpack.c.l.b16 %v67
  %v164 = vunpack.c.l.b16 %v68
  %v165 = vunpack.c.l.b16 %v69
  %v166 = vunpack.c.l.b16 %v70
  %v167 = vunpack.c.l.b16 %v71
  %v168 = vunpack.c.l.b16 %v72
  %v169 = vunpack.c.l.b16 %v73
  %v170 = vunpack.c.l.b16 %v74
  %v171 = vunpack.c.l.b16 %v75
  %v172 = vunpack.c.l.b16 %v76
  %v173 = vunpack.c.l.b16 %v77
  %v174 = vunpack.c.l.b16 %v78
  %v175 = vunpack.c.l.b16 %v79
  %v176 = vunpack.c.l.b16 %v80
  %v177 = vpack.c.b16 %v130, %v129
  %v178 = vpack.c.b16 %v132, %v131
  %v179 = vpack.c.b16 %v134, %v133
  %v180 = vpack.c.b16 %v136, %v135
  %v181 = vpack.c.b16 %v138, %v137
  %v182 = vpack.c.b16 %v140, %v139
  %v183 = vpack.c.b16 %v142, %v141
  %v184 = vpack.c.b16 %v144, %v143
  %v185 = vpack.c.b16 %v146, %v145
  %v186 = vpack.c.b16 %v148, %v147
  %v187 = vpack.c.b16 %v150, %v149
  %v188 = vpack.c.b16 %v152, %v151
  %v189 = vpack.c.b16 %v154, %v153
  %v190 = vpack.c.b16 %v156, %v155
  %v191 = vpack.c.b16 %v158, %v157
  %v192 = vpack.c.b16 %v160, %v159
  %v193 = vpack.c.b16 %v162, %v161
  %v194 = vpack.c.b16 %v164, %v163
  %v195 = vpack.c.b16 %v166, %v165
  %v196 = vpack.c.b16 %v168, %v167
  %v197 = vpack.c.b16 %v170, %v169
  %v198 = vpack.c.b16 %v172, %v171
  %v199 = vpack.c.b16 %v174, %v173
  %v200 = vpack.c.b16 %v176, %v175
  %vm225 = vcmask 130048
  %226 = vst.msk [vmem:[#allocation2] sm:$0xff] %vm225, %v177
  %227 = vst.msk [vmem:[#allocation2 + $0x8] sm:$0xff] %vm225, %v178
  %228 = vst.msk [vmem:[#allocation2 + $0x10] sm:$0xff] %vm225, %v179
  %229 = vst.msk [vmem:[#allocation2 + $0x18] sm:$0xff] %vm225, %v180
  %230 = vst.msk [vmem:[#allocation2 + $0x20] sm:$0xff] %vm225, %v181
  %231 = vst.msk [vmem:[#allocation2 + $0x28] sm:$0xff] %vm225, %v182
  %232 = vst.msk [vmem:[#allocation2 + $0x30] sm:$0xff] %vm225, %v183
  %233 = vst.msk [vmem:[#allocation2 + $0x38] sm:$0xff] %vm225, %v184
  %234 = vst.msk [vmem:[#allocation2 + $0x40] sm:$0xff] %vm225, %v185
  %235 = vst.msk [vmem:[#allocation2 + $0x48] sm:$0xff] %vm225, %v186
  %236 = vst.msk [vmem:[#allocation2 + $0x50] sm:$0xff] %vm225, %v187
  %237 = vst.msk [vmem:[#allocation2 + $0x58] sm:$0xff] %vm225, %v188
  %238 = vst.msk [vmem:[#allocation2 + $0x60] sm:$0xff] %vm225, %v189
  %239 = vst.msk [vmem:[#allocation2 + $0x68] sm:$0xff] %vm225, %v190
  %240 = vst.msk [vmem:[#allocation2 + $0x70] sm:$0xff] %vm225, %v191
  %241 = vst.msk [vmem:[#allocation2 + $0x78] sm:$0xff] %vm225, %v192
  %242 = vst.msk [vmem:[#allocation2 + $0x80] sm:$0xff] %vm225, %v193
  %243 = vst.msk [vmem:[#allocation2 + $0x88] sm:$0xff] %vm225, %v194
  %244 = vst.msk [vmem:[#allocation2 + $0x90] sm:$0xff] %vm225, %v195
  %245 = vst.msk [vmem:[#allocation2 + $0x98] sm:$0xff] %vm225, %v196
  %246 = vst.msk [vmem:[#allocation2 + $0xa0] sm:$0xff] %vm225, %v197
  %247 = vst.msk [vmem:[#allocation2 + $0xa8] sm:$0xff] %vm225, %v198
  %248 = vst.msk [vmem:[#allocation2 + $0xb0] sm:$0xff] %vm225, %v199
  %249 = vst.msk [vmem:[#allocation2 + $0xb8] sm:$0xff] %vm225, %v200
  %v250 = vld [vmem:[%s32] sm:$0xf]
  %v251 = vld [vmem:[%s32 + $0x4] sm:$0x1]
  %v252 = vld [vmem:[%s32 + $0x8] sm:$0xf]
  %v253 = vld [vmem:[%s32 + $0xc] sm:$0x1]
  %v254 = vld [vmem:[%s32 + $0x10] sm:$0xf]
  %v255 = vld [vmem:[%s32 + $0x14] sm:$0x1]
  %v256 = vld [vmem:[%s32 + $0x18] sm:$0xf]
  %v257 = vld [vmem:[%s32 + $0x1c] sm:$0x1]
  %v258 = vld [vmem:[%s32 + $0x20] sm:$0xf]
  %v259 = vld [vmem:[%s32 + $0x24] sm:$0x1]
  %v260 = vld [vmem:[%s32 + $0x28] sm:$0xf]
  %v261 = vld [vmem:[%s32 + $0x2c] sm:$0x1]
  %v262 = vld [vmem:[%s32 + $0x30] sm:$0xf]
  %v263 = vld [vmem:[%s32 + $0x34] sm:$0x1]
  %v264 = vld [vmem:[%s32 + $0x38] sm:$0xf]
  %v265 = vld [vmem:[%s32 + $0x3c] sm:$0x1]
  %v266 = vld [vmem:[%s32 + $0x48] sm:$0xf]
  %v267 = vld [vmem:[%s32 + $0x4c] sm:$0x1]
  %v268 = vld [vmem:[%s32 + $0x50] sm:$0xf]
  %v269 = vld [vmem:[%s32 + $0x54] sm:$0x1]
  %v270 = vld [vmem:[%s32 + $0x58] sm:$0xf]
  %v271 = vld [vmem:[%s32 + $0x5c] sm:$0x1]
  %v272 = vld [vmem:[%s32 + $0x60] sm:$0xf]
  %v273 = vld [vmem:[%s32 + $0x64] sm:$0x1]
  %v274 = vld [vmem:[%s32 + $0x68] sm:$0xf]
  %v275 = vld [vmem:[%s32 + $0x6c] sm:$0x1]
  %v276 = vld [vmem:[%s32 + $0x70] sm:$0xf]
  %v277 = vld [vmem:[%s32 + $0x74] sm:$0x1]
  %v278 = vld [vmem:[%s32 + $0x78] sm:$0xf]
  %v279 = vld [vmem:[%s32 + $0x7c] sm:$0x1]
  %v280 = vld [vmem:[%s32 + $0x80] sm:$0xf]
  %v281 = vld [vmem:[%s32 + $0x84] sm:$0x1]
  %v282 = vld [vmem:[%s32 + $0x90] sm:$0xf]
  %v283 = vld [vmem:[%s32 + $0x94] sm:$0x1]
  %v284 = vld [vmem:[%s32 + $0x98] sm:$0xf]
  %v285 = vld [vmem:[%s32 + $0x9c] sm:$0x1]
  %v286 = vld [vmem:[%s32 + $0xa0] sm:$0xf]
  %v287 = vld [vmem:[%s32 + $0xa4] sm:$0x1]
  %v288 = vld [vmem:[%s32 + $0xa8] sm:$0xf]
  %v289 = vld [vmem:[%s32 + $0xac] sm:$0x1]
  %v290 = vld [vmem:[%s32 + $0xb0] sm:$0xf]
  %v291 = vld [vmem:[%s32 + $0xb4] sm:$0x1]
  %v292 = vld [vmem:[%s32 + $0xb8] sm:$0xf]
  %v293 = vld [vmem:[%s32 + $0xbc] sm:$0x1]
  %v294 = vld [vmem:[%s32 + $0xc0] sm:$0xf]
  %v295 = vld [vmem:[%s32 + $0xc4] sm:$0x1]
  %v296 = vld [vmem:[%s32 + $0xc8] sm:$0xf]
  %v297 = vld [vmem:[%s32 + $0xcc] sm:$0x1]
  %v298 = vld [vmem:[%s32 + $0xd8] sm:$0xf]
  %v299 = vld [vmem:[%s32 + $0xdc] sm:$0x1]
  %v300 = vld [vmem:[%s32 + $0xe0] sm:$0xf]
  %v301 = vld [vmem:[%s32 + $0xe4] sm:$0x1]
  %v302 = vld [vmem:[%s32 + $0xe8] sm:$0xf]
  %v303 = vld [vmem:[%s32 + $0xec] sm:$0x1]
  %v304 = vld [vmem:[%s32 + $0xf0] sm:$0xf]
  %v305 = vld [vmem:[%s32 + $0xf4] sm:$0x1]
  %v306 = vld [vmem:[%s32 + $0xf8] sm:$0xf]
  %v307 = vld [vmem:[%s32 + $0xfc] sm:$0x1]
  %v308 = vld [vmem:[%s32 + $0x100] sm:$0xf]
  %v309 = vld [vmem:[%s32 + $0x104] sm:$0x1]
  %v310 = vld [vmem:[%s32 + $0x108] sm:$0xf]
  %v311 = vld [vmem:[%s32 + $0x10c] sm:$0x1]
  %v312 = vld [vmem:[%s32 + $0x110] sm:$0xf]
  %v313 = vld [vmem:[%s32 + $0x114] sm:$0x1]
  %v314 = vld [vmem:[%s32 + $0x120] sm:$0xf]
  %v315 = vld [vmem:[%s32 + $0x124] sm:$0x1]
  %v316 = vld [vmem:[%s32 + $0x128] sm:$0xf]
  %v317 = vld [vmem:[%s32 + $0x12c] sm:$0x1]
  %v318 = vld [vmem:[%s32 + $0x130] sm:$0xf]
  %v319 = vld [vmem:[%s32 + $0x134] sm:$0x1]
  %v320 = vld [vmem:[%s32 + $0x138] sm:$0xf]
  %v321 = vld [vmem:[%s32 + $0x13c] sm:$0x1]
  %v322 = vld [vmem:[%s32 + $0x140] sm:$0xf]
  %v323 = vld [vmem:[%s32 + $0x144] sm:$0x1]
  %v324 = vld [vmem:[%s32 + $0x148] sm:$0xf]
  %v325 = vld [vmem:[%s32 + $0x14c] sm:$0x1]
  %v326 = vld [vmem:[%s32 + $0x150] sm:$0xf]
  %v327 = vld [vmem:[%s32 + $0x154] sm:$0x1]
  %v328 = vld [vmem:[%s32 + $0x158] sm:$0xf]
  %v329 = vld [vmem:[%s32 + $0x15c] sm:$0x1]
  %v330 = vld [vmem:[%s32 + $0x168] sm:$0xf]
  %v331 = vld [vmem:[%s32 + $0x16c] sm:$0x1]
  %v332 = vld [vmem:[%s32 + $0x170] sm:$0xf]
  %v333 = vld [vmem:[%s32 + $0x174] sm:$0x1]
  %v334 = vld [vmem:[%s32 + $0x178] sm:$0xf]
  %v335 = vld [vmem:[%s32 + $0x17c] sm:$0x1]
  %v336 = vld [vmem:[%s32 + $0x180] sm:$0xf]
  %v337 = vld [vmem:[%s32 + $0x184] sm:$0x1]
  %v338 = vld [vmem:[%s32 + $0x188] sm:$0xf]
  %v339 = vld [vmem:[%s32 + $0x18c] sm:$0x1]
  %v340 = vld [vmem:[%s32 + $0x190] sm:$0xf]
  %v341 = vld [vmem:[%s32 + $0x194] sm:$0x1]
  %v342 = vld [vmem:[%s32 + $0x198] sm:$0xf]
  %v343 = vld [vmem:[%s32 + $0x19c] sm:$0x1]
  %v344 = vld [vmem:[%s32 + $0x1a0] sm:$0xf]
  %v345 = vld [vmem:[%s32 + $0x1a4] sm:$0x1]
  %vm346 = vsmask.f32 3328
  %vm347 = vsmask.f32 7440
  %vm348 = vmor %vm346, %vm347
  %v350 = vshrl.u32 %v250, 16
  %v352 = vrot.slane %v350, 4
  %v353 = vshll.u32 %v250, 16
  %v355 = vrot.slane %v353, 5
  %v356 = vor.u32 %v352, %v355
  %v357 = vrot.slane %v356, 4
  %v359 = vshll.u32 %v251, 16
  %v361 = vrot.slane %v359, 5
  %v362 = vsel %vm348, %v357, %v361
  %v364 = vshrl.u32 %v252, 16
  %v366 = vrot.slane %v364, 4
  %v367 = vshll.u32 %v252, 16
  %v369 = vrot.slane %v367, 5
  %v370 = vor.u32 %v366, %v369
  %v371 = vrot.slane %v370, 4
  %v373 = vshll.u32 %v253, 16
  %v375 = vrot.slane %v373, 5
  %v376 = vsel %vm348, %v371, %v375
  %v378 = vshrl.u32 %v254, 16
  %v380 = vrot.slane %v378, 4
  %v381 = vshll.u32 %v254, 16
  %v383 = vrot.slane %v381, 5
  %v384 = vor.u32 %v380, %v383
  %v385 = vrot.slane %v384, 4
  %v387 = vshll.u32 %v255, 16
  %v389 = vrot.slane %v387, 5
  %v390 = vsel %vm348, %v385, %v389
  %v392 = vshrl.u32 %v256, 16
  %v394 = vrot.slane %v392, 4
  %v395 = vshll.u32 %v256, 16
  %v397 = vrot.slane %v395, 5
  %v398 = vor.u32 %v394, %v397
  %v399 = vrot.slane %v398, 4
  %v401 = vshll.u32 %v257, 16
  %v403 = vrot.slane %v401, 5
  %v404 = vsel %vm348, %v399, %v403
  %v406 = vshrl.u32 %v258, 16
  %v408 = vrot.slane %v406, 4
  %v409 = vshll.u32 %v258, 16
  %v411 = vrot.slane %v409, 5
  %v412 = vor.u32 %v408, %v411
  %v413 = vrot.slane %v412, 4
  %v415 = vshll.u32 %v259, 16
  %v417 = vrot.slane %v415, 5
  %v418 = vsel %vm348, %v413, %v417
  %v420 = vshrl.u32 %v260, 16
  %v422 = vrot.slane %v420, 4
  %v423 = vshll.u32 %v260, 16
  %v425 = vrot.slane %v423, 5
  %v426 = vor.u32 %v422, %v425
  %v427 = vrot.slane %v426, 4
  %v429 = vshll.u32 %v261, 16
  %v431 = vrot.slane %v429, 5
  %v432 = vsel %vm348, %v427, %v431
  %v434 = vshrl.u32 %v262, 16
  %v436 = vrot.slane %v434, 4
  %v437 = vshll.u32 %v262, 16
  %v439 = vrot.slane %v437, 5
  %v440 = vor.u32 %v436, %v439
  %v441 = vrot.slane %v440, 4
  %v443 = vshll.u32 %v263, 16
  %v445 = vrot.slane %v443, 5
  %v446 = vsel %vm348, %v441, %v445
  %v448 = vshrl.u32 %v264, 16
  %v450 = vrot.slane %v448, 4
  %v451 = vshll.u32 %v264, 16
  %v453 = vrot.slane %v451, 5
  %v454 = vor.u32 %v450, %v453
  %v455 = vrot.slane %v454, 4
  %v457 = vshll.u32 %v265, 16
  %v459 = vrot.slane %v457, 5
  %v460 = vsel %vm348, %v455, %v459
  %v462 = vshrl.u32 %v266, 16
  %v464 = vrot.slane %v462, 4
  %v465 = vshll.u32 %v266, 16
  %v467 = vrot.slane %v465, 5
  %v468 = vor.u32 %v464, %v467
  %v469 = vrot.slane %v468, 4
  %v471 = vshll.u32 %v267, 16
  %v473 = vrot.slane %v471, 5
  %v474 = vsel %vm348, %v469, %v473
  %v476 = vshrl.u32 %v268, 16
  %v478 = vrot.slane %v476, 4
  %v479 = vshll.u32 %v268, 16
  %v481 = vrot.slane %v479, 5
  %v482 = vor.u32 %v478, %v481
  %v483 = vrot.slane %v482, 4
  %v485 = vshll.u32 %v269, 16
  %v487 = vrot.slane %v485, 5
  %v488 = vsel %vm348, %v483, %v487
  %v490 = vshrl.u32 %v270, 16
  %v492 = vrot.slane %v490, 4
  %v493 = vshll.u32 %v270, 16
  %v495 = vrot.slane %v493, 5
  %v496 = vor.u32 %v492, %v495
  %v497 = vrot.slane %v496, 4
  %v499 = vshll.u32 %v271, 16
  %v501 = vrot.slane %v499, 5
  %v502 = vsel %vm348, %v497, %v501
  %v504 = vshrl.u32 %v272, 16
  %v506 = vrot.slane %v504, 4
  %v507 = vshll.u32 %v272, 16
  %v509 = vrot.slane %v507, 5
  %v510 = vor.u32 %v506, %v509
  %v511 = vrot.slane %v510, 4
  %v513 = vshll.u32 %v273, 16
  %v515 = vrot.slane %v513, 5
  %v516 = vsel %vm348, %v511, %v515
  %v518 = vshrl.u32 %v274, 16
  %v520 = vrot.slane %v518, 4
  %v521 = vshll.u32 %v274, 16
  %v523 = vrot.slane %v521, 5
  %v524 = vor.u32 %v520, %v523
  %v525 = vrot.slane %v524, 4
  %v527 = vshll.u32 %v275, 16
  %v529 = vrot.slane %v527, 5
  %v530 = vsel %vm348, %v525, %v529
  %v532 = vshrl.u32 %v276, 16
  %v534 = vrot.slane %v532, 4
  %v535 = vshll.u32 %v276, 16
  %v537 = vrot.slane %v535, 5
  %v538 = vor.u32 %v534, %v537
  %v539 = vrot.slane %v538, 4
  %v541 = vshll.u32 %v277, 16
  %v543 = vrot.slane %v541, 5
  %v544 = vsel %vm348, %v539, %v543
  %v546 = vshrl.u32 %v278, 16
  %v548 = vrot.slane %v546, 4
  %v549 = vshll.u32 %v278, 16
  %v551 = vrot.slane %v549, 5
  %v552 = vor.u32 %v548, %v551
  %v553 = vrot.slane %v552, 4
  %v555 = vshll.u32 %v279, 16
  %v557 = vrot.slane %v555, 5
  %v558 = vsel %vm348, %v553, %v557
  %v560 = vshrl.u32 %v280, 16
  %v562 = vrot.slane %v560, 4
  %v563 = vshll.u32 %v280, 16
  %v565 = vrot.slane %v563, 5
  %v566 = vor.u32 %v562, %v565
  %v567 = vrot.slane %v566, 4
  %v569 = vshll.u32 %v281, 16
  %v571 = vrot.slane %v569, 5
  %v572 = vsel %vm348, %v567, %v571
  %v574 = vshrl.u32 %v282, 16
  %v576 = vrot.slane %v574, 4
  %v577 = vshll.u32 %v282, 16
  %v579 = vrot.slane %v577, 5
  %v580 = vor.u32 %v576, %v579
  %v581 = vrot.slane %v580, 4
  %v583 = vshll.u32 %v283, 16
  %v585 = vrot.slane %v583, 5
  %v586 = vsel %vm348, %v581, %v585
  %v588 = vshrl.u32 %v284, 16
  %v590 = vrot.slane %v588, 4
  %v591 = vshll.u32 %v284, 16
  %v593 = vrot.slane %v591, 5
  %v594 = vor.u32 %v590, %v593
  %v595 = vrot.slane %v594, 4
  %v597 = vshll.u32 %v285, 16
  %v599 = vrot.slane %v597, 5
  %v600 = vsel %vm348, %v595, %v599
  %v602 = vshrl.u32 %v286, 16
  %v604 = vrot.slane %v602, 4
  %v605 = vshll.u32 %v286, 16
  %v607 = vrot.slane %v605, 5
  %v608 = vor.u32 %v604, %v607
  %v609 = vrot.slane %v608, 4
  %v611 = vshll.u32 %v287, 16
  %v613 = vrot.slane %v611, 5
  %v614 = vsel %vm348, %v609, %v613
  %v616 = vshrl.u32 %v288, 16
  %v618 = vrot.slane %v616, 4
  %v619 = vshll.u32 %v288, 16
  %v621 = vrot.slane %v619, 5
  %v622 = vor.u32 %v618, %v621
  %v623 = vrot.slane %v622, 4
  %v625 = vshll.u32 %v289, 16
  %v627 = vrot.slane %v625, 5
  %v628 = vsel %vm348, %v623, %v627
  %v630 = vshrl.u32 %v290, 16
  %v632 = vrot.slane %v630, 4
  %v633 = vshll.u32 %v290, 16
  %v635 = vrot.slane %v633, 5
  %v636 = vor.u32 %v632, %v635
  %v637 = vrot.slane %v636, 4
  %v639 = vshll.u32 %v291, 16
  %v641 = vrot.slane %v639, 5
  %v642 = vsel %vm348, %v637, %v641
  %v644 = vshrl.u32 %v292, 16
  %v646 = vrot.slane %v644, 4
  %v647 = vshll.u32 %v292, 16
  %v649 = vrot.slane %v647, 5
  %v650 = vor.u32 %v646, %v649
  %v651 = vrot.slane %v650, 4
  %v653 = vshll.u32 %v293, 16
  %v655 = vrot.slane %v653, 5
  %v656 = vsel %vm348, %v651, %v655
  %v658 = vshrl.u32 %v294, 16
  %v660 = vrot.slane %v658, 4
  %v661 = vshll.u32 %v294, 16
  %v663 = vrot.slane %v661, 5
  %v664 = vor.u32 %v660, %v663
  %v665 = vrot.slane %v664, 4
  %v667 = vshll.u32 %v295, 16
  %v669 = vrot.slane %v667, 5
  %v670 = vsel %vm348, %v665, %v669
  %v672 = vshrl.u32 %v296, 16
  %v674 = vrot.slane %v672, 4
  %v675 = vshll.u32 %v296, 16
  %v677 = vrot.slane %v675, 5
  %v678 = vor.u32 %v674, %v677
  %v679 = vrot.slane %v678, 4
  %v681 = vshll.u32 %v297, 16
  %v683 = vrot.slane %v681, 5
  %v684 = vsel %vm348, %v679, %v683
  %v686 = vshrl.u32 %v298, 16
  %v688 = vrot.slane %v686, 4
  %v689 = vshll.u32 %v298, 16
  %v691 = vrot.slane %v689, 5
  %v692 = vor.u32 %v688, %v691
  %v693 = vrot.slane %v692, 4
  %v695 = vshll.u32 %v299, 16
  %v697 = vrot.slane %v695, 5
  %v698 = vsel %vm348, %v693, %v697
  %v700 = vshrl.u32 %v300, 16
  %v702 = vrot.slane %v700, 4
  %v703 = vshll.u32 %v300, 16
  %v705 = vrot.slane %v703, 5
  %v706 = vor.u32 %v702, %v705
  %v707 = vrot.slane %v706, 4
  %v709 = vshll.u32 %v301, 16
  %v711 = vrot.slane %v709, 5
  %v712 = vsel %vm348, %v707, %v711
  %v714 = vshrl.u32 %v302, 16
  %v716 = vrot.slane %v714, 4
  %v717 = vshll.u32 %v302, 16
  %v719 = vrot.slane %v717, 5
  %v720 = vor.u32 %v716, %v719
  %v721 = vrot.slane %v720, 4
  %v723 = vshll.u32 %v303, 16
  %v725 = vrot.slane %v723, 5
  %v726 = vsel %vm348, %v721, %v725
  %v728 = vshrl.u32 %v304, 16
  %v730 = vrot.slane %v728, 4
  %v731 = vshll.u32 %v304, 16
  %v733 = vrot.slane %v731, 5
  %v734 = vor.u32 %v730, %v733
  %v735 = vrot.slane %v734, 4
  %v737 = vshll.u32 %v305, 16
  %v739 = vrot.slane %v737, 5
  %v740 = vsel %vm348, %v735, %v739
  %v742 = vshrl.u32 %v306, 16
  %v744 = vrot.slane %v742, 4
  %v745 = vshll.u32 %v306, 16
  %v747 = vrot.slane %v745, 5
  %v748 = vor.u32 %v744, %v747
  %v749 = vrot.slane %v748, 4
  %v751 = vshll.u32 %v307, 16
  %v753 = vrot.slane %v751, 5
  %v754 = vsel %vm348, %v749, %v753
  %v756 = vshrl.u32 %v308, 16
  %v758 = vrot.slane %v756, 4
  %v759 = vshll.u32 %v308, 16
  %v761 = vrot.slane %v759, 5
  %v762 = vor.u32 %v758, %v761
  %v763 = vrot.slane %v762, 4
  %v765 = vshll.u32 %v309, 16
  %v767 = vrot.slane %v765, 5
  %v768 = vsel %vm348, %v763, %v767
  %v770 = vshrl.u32 %v310, 16
  %v772 = vrot.slane %v770, 4
  %v773 = vshll.u32 %v310, 16
  %v775 = vrot.slane %v773, 5
  %v776 = vor.u32 %v772, %v775
  %v777 = vrot.slane %v776, 4
  %v779 = vshll.u32 %v311, 16
  %v781 = vrot.slane %v779, 5
  %v782 = vsel %vm348, %v777, %v781
  %v784 = vshrl.u32 %v312, 16
  %v786 = vrot.slane %v784, 4
  %v787 = vshll.u32 %v312, 16
  %v789 = vrot.slane %v787, 5
  %v790 = vor.u32 %v786, %v789
  %v791 = vrot.slane %v790, 4
  %v793 = vshll.u32 %v313, 16
  %v795 = vrot.slane %v793, 5
  %v796 = vsel %vm348, %v791, %v795
  %v798 = vshrl.u32 %v314, 16
  %v800 = vrot.slane %v798, 4
  %v801 = vshll.u32 %v314, 16
  %v803 = vrot.slane %v801, 5
  %v804 = vor.u32 %v800, %v803
  %v805 = vrot.slane %v804, 4
  %v807 = vshll.u32 %v315, 16
  %v809 = vrot.slane %v807, 5
  %v810 = vsel %vm348, %v805, %v809
  %v812 = vshrl.u32 %v316, 16
  %v814 = vrot.slane %v812, 4
  %v815 = vshll.u32 %v316, 16
  %v817 = vrot.slane %v815, 5
  %v818 = vor.u32 %v814, %v817
  %v819 = vrot.slane %v818, 4
  %v821 = vshll.u32 %v317, 16
  %v823 = vrot.slane %v821, 5
  %v824 = vsel %vm348, %v819, %v823
  %v826 = vshrl.u32 %v318, 16
  %v828 = vrot.slane %v826, 4
  %v829 = vshll.u32 %v318, 16
  %v831 = vrot.slane %v829, 5
  %v832 = vor.u32 %v828, %v831
  %v833 = vrot.slane %v832, 4
  %v835 = vshll.u32 %v319, 16
  %v837 = vrot.slane %v835, 5
  %v838 = vsel %vm348, %v833, %v837
  %v840 = vshrl.u32 %v320, 16
  %v842 = vrot.slane %v840, 4
  %v843 = vshll.u32 %v320, 16
  %v845 = vrot.slane %v843, 5
  %v846 = vor.u32 %v842, %v845
  %v847 = vrot.slane %v846, 4
  %v849 = vshll.u32 %v321, 16
  %v851 = vrot.slane %v849, 5
  %v852 = vsel %vm348, %v847, %v851
  %v854 = vshrl.u32 %v322, 16
  %v856 = vrot.slane %v854, 4
  %v857 = vshll.u32 %v322, 16
  %v859 = vrot.slane %v857, 5
  %v860 = vor.u32 %v856, %v859
  %v861 = vrot.slane %v860, 4
  %v863 = vshll.u32 %v323, 16
  %v865 = vrot.slane %v863, 5
  %v866 = vsel %vm348, %v861, %v865
  %v868 = vshrl.u32 %v324, 16
  %v870 = vrot.slane %v868, 4
  %v871 = vshll.u32 %v324, 16
  %v873 = vrot.slane %v871, 5
  %v874 = vor.u32 %v870, %v873
  %v875 = vrot.slane %v874, 4
  %v877 = vshll.u32 %v325, 16
  %v879 = vrot.slane %v877, 5
  %v880 = vsel %vm348, %v875, %v879
  %v882 = vshrl.u32 %v326, 16
  %v884 = vrot.slane %v882, 4
  %v885 = vshll.u32 %v326, 16
  %v887 = vrot.slane %v885, 5
  %v888 = vor.u32 %v884, %v887
  %v889 = vrot.slane %v888, 4
  %v891 = vshll.u32 %v327, 16
  %v893 = vrot.slane %v891, 5
  %v894 = vsel %vm348, %v889, %v893
  %v896 = vshrl.u32 %v328, 16
  %v898 = vrot.slane %v896, 4
  %v899 = vshll.u32 %v328, 16
  %v901 = vrot.slane %v899, 5
  %v902 = vor.u32 %v898, %v901
  %v903 = vrot.slane %v902, 4
  %v905 = vshll.u32 %v329, 16
  %v907 = vrot.slane %v905, 5
  %v908 = vsel %vm348, %v903, %v907
  %v910 = vshrl.u32 %v330, 16
  %v912 = vrot.slane %v910, 4
  %v913 = vshll.u32 %v330, 16
  %v915 = vrot.slane %v913, 5
  %v916 = vor.u32 %v912, %v915
  %v917 = vrot.slane %v916, 4
  %v919 = vshll.u32 %v331, 16
  %v921 = vrot.slane %v919, 5
  %v922 = vsel %vm348, %v917, %v921
  %v924 = vshrl.u32 %v332, 16
  %v926 = vrot.slane %v924, 4
  %v927 = vshll.u32 %v332, 16
  %v929 = vrot.slane %v927, 5
  %v930 = vor.u32 %v926, %v929
  %v931 = vrot.slane %v930, 4
  %v933 = vshll.u32 %v333, 16
  %v935 = vrot.slane %v933, 5
  %v936 = vsel %vm348, %v931, %v935
  %v938 = vshrl.u32 %v334, 16
  %v940 = vrot.slane %v938, 4
  %v941 = vshll.u32 %v334, 16
  %v943 = vrot.slane %v941, 5
  %v944 = vor.u32 %v940, %v943
  %v945 = vrot.slane %v944, 4
  %v947 = vshll.u32 %v335, 16
  %v949 = vrot.slane %v947, 5
  %v950 = vsel %vm348, %v945, %v949
  %v952 = vshrl.u32 %v336, 16
  %v954 = vrot.slane %v952, 4
  %v955 = vshll.u32 %v336, 16
  %v957 = vrot.slane %v955, 5
  %v958 = vor.u32 %v954, %v957
  %v959 = vrot.slane %v958, 4
  %v961 = vshll.u32 %v337, 16
  %v963 = vrot.slane %v961, 5
  %v964 = vsel %vm348, %v959, %v963
  %v966 = vshrl.u32 %v338, 16
  %v968 = vrot.slane %v966, 4
  %v969 = vshll.u32 %v338, 16
  %v971 = vrot.slane %v969, 5
  %v972 = vor.u32 %v968, %v971
  %v973 = vrot.slane %v972, 4
  %v975 = vshll.u32 %v339, 16
  %v977 = vrot.slane %v975, 5
  %v978 = vsel %vm348, %v973, %v977
  %v980 = vshrl.u32 %v340, 16
  %v982 = vrot.slane %v980, 4
  %v983 = vshll.u32 %v340, 16
  %v985 = vrot.slane %v983, 5
  %v986 = vor.u32 %v982, %v985
  %v987 = vrot.slane %v986, 4
  %v989 = vshll.u32 %v341, 16
  %v991 = vrot.slane %v989, 5
  %v992 = vsel %vm348, %v987, %v991
  %v994 = vshrl.u32 %v342, 16
  %v996 = vrot.slane %v994, 4
  %v997 = vshll.u32 %v342, 16
  %v999 = vrot.slane %v997, 5
  %v1000 = vor.u32 %v996, %v999
  %v1001 = vrot.slane %v1000, 4
  %v1003 = vshll.u32 %v343, 16
  %v1005 = vrot.slane %v1003, 5
  %v1006 = vsel %vm348, %v1001, %v1005
  %v1008 = vshrl.u32 %v344, 16
  %v1010 = vrot.slane %v1008, 4
  %v1011 = vshll.u32 %v344, 16
  %v1013 = vrot.slane %v1011, 5
  %v1014 = vor.u32 %v1010, %v1013
  %v1015 = vrot.slane %v1014, 4
  %v1017 = vshll.u32 %v345, 16
  %v1019 = vrot.slane %v1017, 5
  %v1020 = vsel %vm348, %v1015, %v1019
  %v1021 = vunpack.c.l.b16 %v362
  %v1022 = vunpack.c.l.b16 %v376
  %v1023 = vunpack.c.l.b16 %v390
  %v1024 = vunpack.c.l.b16 %v404
  %v1025 = vunpack.c.l.b16 %v418
  %v1026 = vunpack.c.l.b16 %v432
  %v1027 = vunpack.c.l.b16 %v446
  %v1028 = vunpack.c.l.b16 %v460
  %v1029 = vunpack.c.l.b16 %v474
  %v1030 = vunpack.c.l.b16 %v488
  %v1031 = vunpack.c.l.b16 %v502
  %v1032 = vunpack.c.l.b16 %v516
  %v1033 = vunpack.c.l.b16 %v530
  %v1034 = vunpack.c.l.b16 %v544
  %v1035 = vunpack.c.l.b16 %v558
  %v1036 = vunpack.c.l.b16 %v572
  %v1037 = vunpack.c.l.b16 %v586
  %v1038 = vunpack.c.l.b16 %v600
  %v1039 = vunpack.c.l.b16 %v614
  %v1040 = vunpack.c.l.b16 %v628
  %v1041 = vunpack.c.l.b16 %v642
  %v1042 = vunpack.c.l.b16 %v656
  %v1043 = vunpack.c.l.b16 %v670
  %v1044 = vunpack.c.l.b16 %v684
  %v1045 = vunpack.c.l.b16 %v698
  %v1046 = vunpack.c.l.b16 %v712
  %v1047 = vunpack.c.l.b16 %v726
  %v1048 = vunpack.c.l.b16 %v740
  %v1049 = vunpack.c.l.b16 %v754
  %v1050 = vunpack.c.l.b16 %v768
  %v1051 = vunpack.c.l.b16 %v782
  %v1052 = vunpack.c.l.b16 %v796
  %v1053 = vunpack.c.l.b16 %v810
  %v1054 = vunpack.c.l.b16 %v824
  %v1055 = vunpack.c.l.b16 %v838
  %v1056 = vunpack.c.l.b16 %v852
  %v1057 = vunpack.c.l.b16 %v866
  %v1058 = vunpack.c.l.b16 %v880
  %v1059 = vunpack.c.l.b16 %v894
  %v1060 = vunpack.c.l.b16 %v908
  %v1061 = vunpack.c.l.b16 %v922
  %v1062 = vunpack.c.l.b16 %v936
  %v1063 = vunpack.c.l.b16 %v950
  %v1064 = vunpack.c.l.b16 %v964
  %v1065 = vunpack.c.l.b16 %v978
  %v1066 = vunpack.c.l.b16 %v992
  %v1067 = vunpack.c.l.b16 %v1006
  %v1068 = vunpack.c.l.b16 %v1020
  %v1069 = vpack.c.b16 %v1022, %v1021
  %v1070 = vpack.c.b16 %v1024, %v1023
  %v1071 = vpack.c.b16 %v1026, %v1025
  %v1072 = vpack.c.b16 %v1028, %v1027
  %v1073 = vpack.c.b16 %v1030, %v1029
  %v1074 = vpack.c.b16 %v1032, %v1031
  %v1075 = vpack.c.b16 %v1034, %v1033
  %v1076 = vpack.c.b16 %v1036, %v1035
  %v1077 = vpack.c.b16 %v1038, %v1037
  %v1078 = vpack.c.b16 %v1040, %v1039
  %v1079 = vpack.c.b16 %v1042, %v1041
  %v1080 = vpack.c.b16 %v1044, %v1043
  %v1081 = vpack.c.b16 %v1046, %v1045
  %v1082 = vpack.c.b16 %v1048, %v1047
  %v1083 = vpack.c.b16 %v1050, %v1049
  %v1084 = vpack.c.b16 %v1052, %v1051
  %v1085 = vpack.c.b16 %v1054, %v1053
  %v1086 = vpack.c.b16 %v1056, %v1055
  %v1087 = vpack.c.b16 %v1058, %v1057
  %v1088 = vpack.c.b16 %v1060, %v1059
  %v1089 = vpack.c.b16 %v1062, %v1061
  %v1090 = vpack.c.b16 %v1064, %v1063
  %v1091 = vpack.c.b16 %v1066, %v1065
  %v1092 = vpack.c.b16 %v1068, %v1067
  %1093 = vrot.lane.b32.xlu0 %v1069, 16
  %v1094 = vpop.permute.xlu0 %1093
  %1095 = vrot.lane.b32.xlu0 %v1070, 16
  %v1096 = vpop.permute.xlu0 %1095
  %1097 = vrot.lane.b32.xlu0 %v1071, 16
  %v1098 = vpop.permute.xlu0 %1097
  %1099 = vrot.lane.b32.xlu0 %v1072, 16
  %v1100 = vpop.permute.xlu0 %1099
  %1101 = vrot.lane.b32.xlu0 %v1073, 16
  %v1102 = vpop.permute.xlu0 %1101
  %1103 = vrot.lane.b32.xlu0 %v1074, 16
  %v1104 = vpop.permute.xlu0 %1103
  %1105 = vrot.lane.b32.xlu0 %v1075, 16
  %v1106 = vpop.permute.xlu0 %1105
  %1107 = vrot.lane.b32.xlu0 %v1076, 16
  %v1108 = vpop.permute.xlu0 %1107
  %1109 = vrot.lane.b32.xlu0 %v1077, 16
  %v1110 = vpop.permute.xlu0 %1109
  %1111 = vrot.lane.b32.xlu0 %v1078, 16
  %v1112 = vpop.permute.xlu0 %1111
  %1113 = vrot.lane.b32.xlu0 %v1079, 16
  %v1114 = vpop.permute.xlu0 %1113
  %1115 = vrot.lane.b32.xlu0 %v1080, 16
  %v1116 = vpop.permute.xlu0 %1115
  %1117 = vrot.lane.b32.xlu0 %v1081, 16
  %v1118 = vpop.permute.xlu0 %1117
  %1119 = vrot.lane.b32.xlu0 %v1082, 16
  %v1120 = vpop.permute.xlu0 %1119
  %1121 = vrot.lane.b32.xlu0 %v1083, 16
  %v1122 = vpop.permute.xlu0 %1121
  %1123 = vrot.lane.b32.xlu0 %v1084, 16
  %v1124 = vpop.permute.xlu0 %1123
  %1125 = vrot.lane.b32.xlu0 %v1085, 16
  %v1126 = vpop.permute.xlu0 %1125
  %1127 = vrot.lane.b32.xlu0 %v1086, 16
  %v1128 = vpop.permute.xlu0 %1127
  %1129 = vrot.lane.b32.xlu0 %v1087, 16
  %v1130 = vpop.permute.xlu0 %1129
  %1131 = vrot.lane.b32.xlu0 %v1088, 16
  %v1132 = vpop.permute.xlu0 %1131
  %1133 = vrot.lane.b32.xlu0 %v1089, 16
  %v1134 = vpop.permute.xlu0 %1133
  %1135 = vrot.lane.b32.xlu0 %v1090, 16
  %v1136 = vpop.permute.xlu0 %1135
  %1137 = vrot.lane.b32.xlu0 %v1091, 16
  %v1138 = vpop.permute.xlu0 %1137
  %1139 = vrot.lane.b32.xlu0 %v1092, 16
  %v1140 = vpop.permute.xlu0 %1139
  %vm1165 = vcmask 261248
  %1166 = vst.msk [vmem:[#allocation2] sm:$0xff] %vm1165, %v1094
  %1167 = vst.msk [vmem:[#allocation2 + $0x8] sm:$0xff] %vm1165, %v1096
  %1168 = vst.msk [vmem:[#allocation2 + $0x10] sm:$0xff] %vm1165, %v1098
  %1169 = vst.msk [vmem:[#allocation2 + $0x18] sm:$0xff] %vm1165, %v1100
  %1170 = vst.msk [vmem:[#allocation2 + $0x20] sm:$0xff] %vm1165, %v1102
  %1171 = vst.msk [vmem:[#allocation2 + $0x28] sm:$0xff] %vm1165, %v1104
  %1172 = vst.msk [vmem:[#allocation2 + $0x30] sm:$0xff] %vm1165, %v1106
  %1173 = vst.msk [vmem:[#allocation2 + $0x38] sm:$0xff] %vm1165, %v1108
  %1174 = vst.msk [vmem:[#allocation2 + $0x40] sm:$0xff] %vm1165, %v1110
  %1175 = vst.msk [vmem:[#allocation2 + $0x48] sm:$0xff] %vm1165, %v1112
  %1176 = vst.msk [vmem:[#allocation2 + $0x50] sm:$0xff] %vm1165, %v1114
  %1177 = vst.msk [vmem:[#allocation2 + $0x58] sm:$0xff] %vm1165, %v1116
  %1178 = vst.msk [vmem:[#allocation2 + $0x60] sm:$0xff] %vm1165, %v1118
  %1179 = vst.msk [vmem:[#allocation2 + $0x68] sm:$0xff] %vm1165, %v1120
  %1180 = vst.msk [vmem:[#allocation2 + $0x70] sm:$0xff] %vm1165, %v1122
  %1181 = vst.msk [vmem:[#allocation2 + $0x78] sm:$0xff] %vm1165, %v1124
  %1182 = vst.msk [vmem:[#allocation2 + $0x80] sm:$0xff] %vm1165, %v1126
  %1183 = vst.msk [vmem:[#allocation2 + $0x88] sm:$0xff] %vm1165, %v1128
  %1184 = vst.msk [vmem:[#allocation2 + $0x90] sm:$0xff] %vm1165, %v1130
  %1185 = vst.msk [vmem:[#allocation2 + $0x98] sm:$0xff] %vm1165, %v1132
  %1186 = vst.msk [vmem:[#allocation2 + $0xa0] sm:$0xff] %vm1165, %v1134
  %1187 = vst.msk [vmem:[#allocation2 + $0xa8] sm:$0xff] %vm1165, %v1136
  %1188 = vst.msk [vmem:[#allocation2 + $0xb0] sm:$0xff] %vm1165, %v1138
  %1189 = vst.msk [vmem:[#allocation2 + $0xb8] sm:$0xff] %vm1165, %v1140
  %s1190 = sadd.s32 %s29, 1
  %s1191 = smul.u32 %s1190, 2
  %s1192 = smul.addr %s1191, 4
  %s1193 = scalar_lea.vmem %s0, %s1192
  %v1194 = vld [vmem:[%s1193] sm:$0xf]
  %v1195 = vld [vmem:[%s1193 + $0x8] sm:$0xf]
  %v1196 = vld [vmem:[%s1193 + $0x10] sm:$0xf]
  %v1197 = vld [vmem:[%s1193 + $0x18] sm:$0xf]
  %v1198 = vld [vmem:[%s1193 + $0x20] sm:$0xf]
  %v1199 = vld [vmem:[%s1193 + $0x28] sm:$0xf]
  %v1200 = vld [vmem:[%s1193 + $0x30] sm:$0xf]
  %v1201 = vld [vmem:[%s1193 + $0x38] sm:$0xf]
  %v1202 = vld [vmem:[%s1193 + $0x48] sm:$0xf]
  %v1203 = vld [vmem:[%s1193 + $0x50] sm:$0xf]
  %v1204 = vld [vmem:[%s1193 + $0x58] sm:$0xf]
  %v1205 = vld [vmem:[%s1193 + $0x60] sm:$0xf]
  %v1206 = vld [vmem:[%s1193 + $0x68] sm:$0xf]
  %v1207 = vld [vmem:[%s1193 + $0x70] sm:$0xf]
  %v1208 = vld [vmem:[%s1193 + $0x78] sm:$0xf]
  %v1209 = vld [vmem:[%s1193 + $0x80] sm:$0xf]
  %v1210 = vld [vmem:[%s1193 + $0x90] sm:$0xf]
  %v1211 = vld [vmem:[%s1193 + $0x98] sm:$0xf]
  %v1212 = vld [vmem:[%s1193 + $0xa0] sm:$0xf]
  %v1213 = vld [vmem:[%s1193 + $0xa8] sm:$0xf]
  %v1214 = vld [vmem:[%s1193 + $0xb0] sm:$0xf]
  %v1215 = vld [vmem:[%s1193 + $0xb8] sm:$0xf]
  %v1216 = vld [vmem:[%s1193 + $0xc0] sm:$0xf]
  %v1217 = vld [vmem:[%s1193 + $0xc8] sm:$0xf]
  %v1218 = vld [vmem:[%s1193 + $0xd8] sm:$0xf]
  %v1219 = vld [vmem:[%s1193 + $0xe0] sm:$0xf]
  %v1220 = vld [vmem:[%s1193 + $0xe8] sm:$0xf]
  %v1221 = vld [vmem:[%s1193 + $0xf0] sm:$0xf]
  %v1222 = vld [vmem:[%s1193 + $0xf8] sm:$0xf]
  %v1223 = vld [vmem:[%s1193 + $0x100] sm:$0xf]
  %v1224 = vld [vmem:[%s1193 + $0x108] sm:$0xf]
  %v1225 = vld [vmem:[%s1193 + $0x110] sm:$0xf]
  %v1226 = vld [vmem:[%s1193 + $0x120] sm:$0xf]
  %v1227 = vld [vmem:[%s1193 + $0x128] sm:$0xf]
  %v1228 = vld [vmem:[%s1193 + $0x130] sm:$0xf]
  %v1229 = vld [vmem:[%s1193 + $0x138] sm:$0xf]
  %v1230 = vld [vmem:[%s1193 + $0x140] sm:$0xf]
  %v1231 = vld [vmem:[%s1193 + $0x148] sm:$0xf]
  %v1232 = vld [vmem:[%s1193 + $0x150] sm:$0xf]
  %v1233 = vld [vmem:[%s1193 + $0x158] sm:$0xf]
  %v1234 = vld [vmem:[%s1193 + $0x168] sm:$0xf]
  %v1235 = vld [vmem:[%s1193 + $0x170] sm:$0xf]
  %v1236 = vld [vmem:[%s1193 + $0x178] sm:$0xf]
  %v1237 = vld [vmem:[%s1193 + $0x180] sm:$0xf]
  %v1238 = vld [vmem:[%s1193 + $0x188] sm:$0xf]
  %v1239 = vld [vmem:[%s1193 + $0x190] sm:$0xf]
  %v1240 = vld [vmem:[%s1193 + $0x198] sm:$0xf]
  %v1241 = vld [vmem:[%s1193 + $0x1a0] sm:$0xf]
  %v1290 = vunpack.c.l.b16 %v1194
  %v1291 = vunpack.c.l.b16 %v1195
  %v1292 = vunpack.c.l.b16 %v1196
  %v1293 = vunpack.c.l.b16 %v1197
  %v1294 = vunpack.c.l.b16 %v1198
  %v1295 = vunpack.c.l.b16 %v1199
  %v1296 = vunpack.c.l.b16 %v1200
  %v1297 = vunpack.c.l.b16 %v1201
  %v1298 = vunpack.c.l.b16 %v1202
  %v1299 = vunpack.c.l.b16 %v1203
  %v1300 = vunpack.c.l.b16 %v1204
  %v1301 = vunpack.c.l.b16 %v1205
  %v1302 = vunpack.c.l.b16 %v1206
  %v1303 = vunpack.c.l.b16 %v1207
  %v1304 = vunpack.c.l.b16 %v1208
  %v1305 = vunpack.c.l.b16 %v1209
  %v1306 = vunpack.c.l.b16 %v1210
  %v1307 = vunpack.c.l.b16 %v1211
  %v1308 = vunpack.c.l.b16 %v1212
  %v1309 = vunpack.c.l.b16 %v1213
  %v1310 = vunpack.c.l.b16 %v1214
  %v1311 = vunpack.c.l.b16 %v1215
  %v1312 = vunpack.c.l.b16 %v1216
  %v1313 = vunpack.c.l.b16 %v1217
  %v1314 = vunpack.c.l.b16 %v1218
  %v1315 = vunpack.c.l.b16 %v1219
  %v1316 = vunpack.c.l.b16 %v1220
  %v1317 = vunpack.c.l.b16 %v1221
  %v1318 = vunpack.c.l.b16 %v1222
  %v1319 = vunpack.c.l.b16 %v1223
  %v1320 = vunpack.c.l.b16 %v1224
  %v1321 = vunpack.c.l.b16 %v1225
  %v1322 = vunpack.c.l.b16 %v1226
  %v1323 = vunpack.c.l.b16 %v1227
  %v1324 = vunpack.c.l.b16 %v1228
  %v1325 = vunpack.c.l.b16 %v1229
  %v1326 = vunpack.c.l.b16 %v1230
  %v1327 = vunpack.c.l.b16 %v1231
  %v1328 = vunpack.c.l.b16 %v1232
  %v1329 = vunpack.c.l.b16 %v1233
  %v1330 = vunpack.c.l.b16 %v1234
  %v1331 = vunpack.c.l.b16 %v1235
  %v1332 = vunpack.c.l.b16 %v1236
  %v1333 = vunpack.c.l.b16 %v1237
  %v1334 = vunpack.c.l.b16 %v1238
  %v1335 = vunpack.c.l.b16 %v1239
  %v1336 = vunpack.c.l.b16 %v1240
  %v1337 = vunpack.c.l.b16 %v1241
  %v1338 = vpack.c.b16 %v1291, %v1290
  %v1339 = vpack.c.b16 %v1293, %v1292
  %v1340 = vpack.c.b16 %v1295, %v1294
  %v1341 = vpack.c.b16 %v1297, %v1296
  %v1342 = vpack.c.b16 %v1299, %v1298
  %v1343 = vpack.c.b16 %v1301, %v1300
  %v1344 = vpack.c.b16 %v1303, %v1302
  %v1345 = vpack.c.b16 %v1305, %v1304
  %v1346 = vpack.c.b16 %v1307, %v1306
  %v1347 = vpack.c.b16 %v1309, %v1308
  %v1348 = vpack.c.b16 %v1311, %v1310
  %v1349 = vpack.c.b16 %v1313, %v1312
  %v1350 = vpack.c.b16 %v1315, %v1314
  %v1351 = vpack.c.b16 %v1317, %v1316
  %v1352 = vpack.c.b16 %v1319, %v1318
  %v1353 = vpack.c.b16 %v1321, %v1320
  %v1354 = vpack.c.b16 %v1323, %v1322
  %v1355 = vpack.c.b16 %v1325, %v1324
  %v1356 = vpack.c.b16 %v1327, %v1326
  %v1357 = vpack.c.b16 %v1329, %v1328
  %v1358 = vpack.c.b16 %v1331, %v1330
  %v1359 = vpack.c.b16 %v1333, %v1332
  %v1360 = vpack.c.b16 %v1335, %v1334
  %v1361 = vpack.c.b16 %v1337, %v1336
  %1362 = vrot.lane.b32.xlu0 %v1338, 32
  %v1363 = vpop.permute.xlu0 %1362
  %1364 = vrot.lane.b32.xlu0 %v1339, 32
  %v1365 = vpop.permute.xlu0 %1364
  %1366 = vrot.lane.b32.xlu0 %v1340, 32
  %v1367 = vpop.permute.xlu0 %1366
  %1368 = vrot.lane.b32.xlu0 %v1341, 32
  %v1369 = vpop.permute.xlu0 %1368
  %1370 = vrot.lane.b32.xlu0 %v1342, 32
  %v1371 = vpop.permute.xlu0 %1370
  %1372 = vrot.lane.b32.xlu0 %v1343, 32
  %v1373 = vpop.permute.xlu0 %1372
  %1374 = vrot.lane.b32.xlu0 %v1344, 32
  %v1375 = vpop.permute.xlu0 %1374
  %1376 = vrot.lane.b32.xlu0 %v1345, 32
  %v1377 = vpop.permute.xlu0 %1376
  %1378 = vrot.lane.b32.xlu0 %v1346, 32
  %v1379 = vpop.permute.xlu0 %1378
  %1380 = vrot.lane.b32.xlu0 %v1347, 32
  %v1381 = vpop.permute.xlu0 %1380
  %1382 = vrot.lane.b32.xlu0 %v1348, 32
  %v1383 = vpop.permute.xlu0 %1382
  %1384 = vrot.lane.b32.xlu0 %v1349, 32
  %v1385 = vpop.permute.xlu0 %1384
  %1386 = vrot.lane.b32.xlu0 %v1350, 32
  %v1387 = vpop.permute.xlu0 %1386
  %1388 = vrot.lane.b32.xlu0 %v1351, 32
  %v1389 = vpop.permute.xlu0 %1388
  %1390 = vrot.lane.b32.xlu0 %v1352, 32
  %v1391 = vpop.permute.xlu0 %1390
  %1392 = vrot.lane.b32.xlu0 %v1353, 32
  %v1393 = vpop.permute.xlu0 %1392
  %1394 = vrot.lane.b32.xlu0 %v1354, 32
  %v1395 = vpop.permute.xlu0 %1394
  %1396 = vrot.lane.b32.xlu0 %v1355, 32
  %v1397 = vpop.permute.xlu0 %1396
  %1398 = vrot.lane.b32.xlu0 %v1356, 32
  %v1399 = vpop.permute.xlu0 %1398
  %1400 = vrot.lane.b32.xlu0 %v1357, 32
  %v1401 = vpop.permute.xlu0 %1400
  %1402 = vrot.lane.b32.xlu0 %v1358, 32
  %v1403 = vpop.permute.xlu0 %1402
  %1404 = vrot.lane.b32.xlu0 %v1359, 32
  %v1405 = vpop.permute.xlu0 %1404
  %1406 = vrot.lane.b32.xlu0 %v1360, 32
  %v1407 = vpop.permute.xlu0 %1406
  %1408 = vrot.lane.b32.xlu0 %v1361, 32
  %v1409 = vpop.permute.xlu0 %1408
  %vm1434 = vcmask 392448
  %1435 = vst.msk [vmem:[#allocation2] sm:$0xff] %vm1434, %v1363
  %1436 = vst.msk [vmem:[#allocation2 + $0x8] sm:$0xff] %vm1434, %v1365
  %1437 = vst.msk [vmem:[#allocation2 + $0x10] sm:$0xff] %vm1434, %v1367
  %1438 = vst.msk [vmem:[#allocation2 + $0x18] sm:$0xff] %vm1434, %v1369
  %1439 = vst.msk [vmem:[#allocation2 + $0x20] sm:$0xff] %vm1434, %v1371
  %1440 = vst.msk [vmem:[#allocation2 + $0x28] sm:$0xff] %vm1434, %v1373
  %1441 = vst.msk [vmem:[#allocation2 + $0x30] sm:$0xff] %vm1434, %v1375
  %1442 = vst.msk [vmem:[#allocation2 + $0x38] sm:$0xff] %vm1434, %v1377
  %1443 = vst.msk [vmem:[#allocation2 + $0x40] sm:$0xff] %vm1434, %v1379
  %1444 = vst.msk [vmem:[#allocation2 + $0x48] sm:$0xff] %vm1434, %v1381
  %1445 = vst.msk [vmem:[#allocation2 + $0x50] sm:$0xff] %vm1434, %v1383
  %1446 = vst.msk [vmem:[#allocation2 + $0x58] sm:$0xff] %vm1434, %v1385
  %1447 = vst.msk [vmem:[#allocation2 + $0x60] sm:$0xff] %vm1434, %v1387
  %1448 = vst.msk [vmem:[#allocation2 + $0x68] sm:$0xff] %vm1434, %v1389
  %1449 = vst.msk [vmem:[#allocation2 + $0x70] sm:$0xff] %vm1434, %v1391
  %1450 = vst.msk [vmem:[#allocation2 + $0x78] sm:$0xff] %vm1434, %v1393
  %1451 = vst.msk [vmem:[#allocation2 + $0x80] sm:$0xff] %vm1434, %v1395
  %1452 = vst.msk [vmem:[#allocation2 + $0x88] sm:$0xff] %vm1434, %v1397
  %1453 = vst.msk [vmem:[#allocation2 + $0x90] sm:$0xff] %vm1434, %v1399
  %1454 = vst.msk [vmem:[#allocation2 + $0x98] sm:$0xff] %vm1434, %v1401
  %1455 = vst.msk [vmem:[#allocation2 + $0xa0] sm:$0xff] %vm1434, %v1403
  %1456 = vst.msk [vmem:[#allocation2 + $0xa8] sm:$0xff] %vm1434, %v1405
  %1457 = vst.msk [vmem:[#allocation2 + $0xb0] sm:$0xff] %vm1434, %v1407
  %1458 = vst.msk [vmem:[#allocation2 + $0xb8] sm:$0xff] %vm1434, %v1409
  %v1459 = vld [vmem:[%s1193] sm:$0xf]
  %v1460 = vld [vmem:[%s1193 + $0x4] sm:$0x1]
  %v1461 = vld [vmem:[%s1193 + $0x8] sm:$0xf]
  %v1462 = vld [vmem:[%s1193 + $0xc] sm:$0x1]
  %v1463 = vld [vmem:[%s1193 + $0x10] sm:$0xf]
  %v1464 = vld [vmem:[%s1193 + $0x14] sm:$0x1]
  %v1465 = vld [vmem:[%s1193 + $0x18] sm:$0xf]
  %v1466 = vld [vmem:[%s1193 + $0x1c] sm:$0x1]
  %v1467 = vld [vmem:[%s1193 + $0x20] sm:$0xf]
  %v1468 = vld [vmem:[%s1193 + $0x24] sm:$0x1]
  %v1469 = vld [vmem:[%s1193 + $0x28] sm:$0xf]
  %v1470 = vld [vmem:[%s1193 + $0x2c] sm:$0x1]
  %v1471 = vld [vmem:[%s1193 + $0x30] sm:$0xf]
  %v1472 = vld [vmem:[%s1193 + $0x34] sm:$0x1]
  %v1473 = vld [vmem:[%s1193 + $0x38] sm:$0xf]
  %v1474 = vld [vmem:[%s1193 + $0x3c] sm:$0x1]
  %v1475 = vld [vmem:[%s1193 + $0x48] sm:$0xf]
  %v1476 = vld [vmem:[%s1193 + $0x4c] sm:$0x1]
  %v1477 = vld [vmem:[%s1193 + $0x50] sm:$0xf]
  %v1478 = vld [vmem:[%s1193 + $0x54] sm:$0x1]
  %v1479 = vld [vmem:[%s1193 + $0x58] sm:$0xf]
  %v1480 = vld [vmem:[%s1193 + $0x5c] sm:$0x1]
  %v1481 = vld [vmem:[%s1193 + $0x60] sm:$0xf]
  %v1482 = vld [vmem:[%s1193 + $0x64] sm:$0x1]
  %v1483 = vld [vmem:[%s1193 + $0x68] sm:$0xf]
  %v1484 = vld [vmem:[%s1193 + $0x6c] sm:$0x1]
  %v1485 = vld [vmem:[%s1193 + $0x70] sm:$0xf]
  %v1486 = vld [vmem:[%s1193 + $0x74] sm:$0x1]
  %v1487 = vld [vmem:[%s1193 + $0x78] sm:$0xf]
  %v1488 = vld [vmem:[%s1193 + $0x7c] sm:$0x1]
  %v1489 = vld [vmem:[%s1193 + $0x80] sm:$0xf]
  %v1490 = vld [vmem:[%s1193 + $0x84] sm:$0x1]
  %v1491 = vld [vmem:[%s1193 + $0x90] sm:$0xf]
  %v1492 = vld [vmem:[%s1193 + $0x94] sm:$0x1]
  %v1493 = vld [vmem:[%s1193 + $0x98] sm:$0xf]
  %v1494 = vld [vmem:[%s1193 + $0x9c] sm:$0x1]
  %v1495 = vld [vmem:[%s1193 + $0xa0] sm:$0xf]
  %v1496 = vld [vmem:[%s1193 + $0xa4] sm:$0x1]
  %v1497 = vld [vmem:[%s1193 + $0xa8] sm:$0xf]
  %v1498 = vld [vmem:[%s1193 + $0xac] sm:$0x1]
  %v1499 = vld [vmem:[%s1193 + $0xb0] sm:$0xf]
  %v1500 = vld [vmem:[%s1193 + $0xb4] sm:$0x1]
  %v1501 = vld [vmem:[%s1193 + $0xb8] sm:$0xf]
  %v1502 = vld [vmem:[%s1193 + $0xbc] sm:$0x1]
  %v1503 = vld [vmem:[%s1193 + $0xc0] sm:$0xf]
  %v1504 = vld [vmem:[%s1193 + $0xc4] sm:$0x1]
  %v1505 = vld [vmem:[%s1193 + $0xc8] sm:$0xf]
  %v1506 = vld [vmem:[%s1193 + $0xcc] sm:$0x1]
  %v1507 = vld [vmem:[%s1193 + $0xd8] sm:$0xf]
  %v1508 = vld [vmem:[%s1193 + $0xdc] sm:$0x1]
  %v1509 = vld [vmem:[%s1193 + $0xe0] sm:$0xf]
  %v1510 = vld [vmem:[%s1193 + $0xe4] sm:$0x1]
  %v1511 = vld [vmem:[%s1193 + $0xe8] sm:$0xf]
  %v1512 = vld [vmem:[%s1193 + $0xec] sm:$0x1]
  %v1513 = vld [vmem:[%s1193 + $0xf0] sm:$0xf]
  %v1514 = vld [vmem:[%s1193 + $0xf4] sm:$0x1]
  %v1515 = vld [vmem:[%s1193 + $0xf8] sm:$0xf]
  %v1516 = vld [vmem:[%s1193 + $0xfc] sm:$0x1]
  %v1517 = vld [vmem:[%s1193 + $0x100] sm:$0xf]
  %v1518 = vld [vmem:[%s1193 + $0x104] sm:$0x1]
  %v1519 = vld [vmem:[%s1193 + $0x108] sm:$0xf]
  %v1520 = vld [vmem:[%s1193 + $0x10c] sm:$0x1]
  %v1521 = vld [vmem:[%s1193 + $0x110] sm:$0xf]
  %v1522 = vld [vmem:[%s1193 + $0x114] sm:$0x1]
  %v1523 = vld [vmem:[%s1193 + $0x120] sm:$0xf]
  %v1524 = vld [vmem:[%s1193 + $0x124] sm:$0x1]
  %v1525 = vld [vmem:[%s1193 + $0x128] sm:$0xf]
  %v1526 = vld [vmem:[%s1193 + $0x12c] sm:$0x1]
  %v1527 = vld [vmem:[%s1193 + $0x130] sm:$0xf]
  %v1528 = vld [vmem:[%s1193 + $0x134] sm:$0x1]
  %v1529 = vld [vmem:[%s1193 + $0x138] sm:$0xf]
  %v1530 = vld [vmem:[%s1193 + $0x13c] sm:$0x1]
  %v1531 = vld [vmem:[%s1193 + $0x140] sm:$0xf]
  %v1532 = vld [vmem:[%s1193 + $0x144] sm:$0x1]
  %v1533 = vld [vmem:[%s1193 + $0x148] sm:$0xf]
  %v1534 = vld [vmem:[%s1193 + $0x14c] sm:$0x1]
  %v1535 = vld [vmem:[%s1193 + $0x150] sm:$0xf]
  %v1536 = vld [vmem:[%s1193 + $0x154] sm:$0x1]
  %v1537 = vld [vmem:[%s1193 + $0x158] sm:$0xf]
  %v1538 = vld [vmem:[%s1193 + $0x15c] sm:$0x1]
  %v1539 = vld [vmem:[%s1193 + $0x168] sm:$0xf]
  %v1540 = vld [vmem:[%s1193 + $0x16c] sm:$0x1]
  %v1541 = vld [vmem:[%s1193 + $0x170] sm:$0xf]
  %v1542 = vld [vmem:[%s1193 + $0x174] sm:$0x1]
  %v1543 = vld [vmem:[%s1193 + $0x178] sm:$0xf]
  %v1544 = vld [vmem:[%s1193 + $0x17c] sm:$0x1]
  %v1545 = vld [vmem:[%s1193 + $0x180] sm:$0xf]
  %v1546 = vld [vmem:[%s1193 + $0x184] sm:$0x1]
  %v1547 = vld [vmem:[%s1193 + $0x188] sm:$0xf]
  %v1548 = vld [vmem:[%s1193 + $0x18c] sm:$0x1]
  %v1549 = vld [vmem:[%s1193 + $0x190] sm:$0xf]
  %v1550 = vld [vmem:[%s1193 + $0x194] sm:$0x1]
  %v1551 = vld [vmem:[%s1193 + $0x198] sm:$0xf]
  %v1552 = vld [vmem:[%s1193 + $0x19c] sm:$0x1]
  %v1553 = vld [vmem:[%s1193 + $0x1a0] sm:$0xf]
  %v1554 = vld [vmem:[%s1193 + $0x1a4] sm:$0x1]
  %v1556 = vshrl.u32 %v1459, 16
  %v1558 = vrot.slane %v1556, 4
  %v1559 = vshll.u32 %v1459, 16
  %v1561 = vrot.slane %v1559, 5
  %v1562 = vor.u32 %v1558, %v1561
  %v1563 = vrot.slane %v1562, 4
  %v1565 = vshll.u32 %v1460, 16
  %v1567 = vrot.slane %v1565, 5
  %v1568 = vsel %vm348, %v1563, %v1567
  %v1570 = vshrl.u32 %v1461, 16
  %v1572 = vrot.slane %v1570, 4
  %v1573 = vshll.u32 %v1461, 16
  %v1575 = vrot.slane %v1573, 5
  %v1576 = vor.u32 %v1572, %v1575
  %v1577 = vrot.slane %v1576, 4
  %v1579 = vshll.u32 %v1462, 16
  %v1581 = vrot.slane %v1579, 5
  %v1582 = vsel %vm348, %v1577, %v1581
  %v1584 = vshrl.u32 %v1463, 16
  %v1586 = vrot.slane %v1584, 4
  %v1587 = vshll.u32 %v1463, 16
  %v1589 = vrot.slane %v1587, 5
  %v1590 = vor.u32 %v1586, %v1589
  %v1591 = vrot.slane %v1590, 4
  %v1593 = vshll.u32 %v1464, 16
  %v1595 = vrot.slane %v1593, 5
  %v1596 = vsel %vm348, %v1591, %v1595
  %v1598 = vshrl.u32 %v1465, 16
  %v1600 = vrot.slane %v1598, 4
  %v1601 = vshll.u32 %v1465, 16
  %v1603 = vrot.slane %v1601, 5
  %v1604 = vor.u32 %v1600, %v1603
  %v1605 = vrot.slane %v1604, 4
  %v1607 = vshll.u32 %v1466, 16
  %v1609 = vrot.slane %v1607, 5
  %v1610 = vsel %vm348, %v1605, %v1609
  %v1612 = vshrl.u32 %v1467, 16
  %v1614 = vrot.slane %v1612, 4
  %v1615 = vshll.u32 %v1467, 16
  %v1617 = vrot.slane %v1615, 5
  %v1618 = vor.u32 %v1614, %v1617
  %v1619 = vrot.slane %v1618, 4
  %v1621 = vshll.u32 %v1468, 16
  %v1623 = vrot.slane %v1621, 5
  %v1624 = vsel %vm348, %v1619, %v1623
  %v1626 = vshrl.u32 %v1469, 16
  %v1628 = vrot.slane %v1626, 4
  %v1629 = vshll.u32 %v1469, 16
  %v1631 = vrot.slane %v1629, 5
  %v1632 = vor.u32 %v1628, %v1631
  %v1633 = vrot.slane %v1632, 4
  %v1635 = vshll.u32 %v1470, 16
  %v1637 = vrot.slane %v1635, 5
  %v1638 = vsel %vm348, %v1633, %v1637
  %v1640 = vshrl.u32 %v1471, 16
  %v1642 = vrot.slane %v1640, 4
  %v1643 = vshll.u32 %v1471, 16
  %v1645 = vrot.slane %v1643, 5
  %v1646 = vor.u32 %v1642, %v1645
  %v1647 = vrot.slane %v1646, 4
  %v1649 = vshll.u32 %v1472, 16
  %v1651 = vrot.slane %v1649, 5
  %v1652 = vsel %vm348, %v1647, %v1651
  %v1654 = vshrl.u32 %v1473, 16
  %v1656 = vrot.slane %v1654, 4
  %v1657 = vshll.u32 %v1473, 16
  %v1659 = vrot.slane %v1657, 5
  %v1660 = vor.u32 %v1656, %v1659
  %v1661 = vrot.slane %v1660, 4
  %v1663 = vshll.u32 %v1474, 16
  %v1665 = vrot.slane %v1663, 5
  %v1666 = vsel %vm348, %v1661, %v1665
  %v1668 = vshrl.u32 %v1475, 16
  %v1670 = vrot.slane %v1668, 4
  %v1671 = vshll.u32 %v1475, 16
  %v1673 = vrot.slane %v1671, 5
  %v1674 = vor.u32 %v1670, %v1673
  %v1675 = vrot.slane %v1674, 4
  %v1677 = vshll.u32 %v1476, 16
  %v1679 = vrot.slane %v1677, 5
  %v1680 = vsel %vm348, %v1675, %v1679
  %v1682 = vshrl.u32 %v1477, 16
  %v1684 = vrot.slane %v1682, 4
  %v1685 = vshll.u32 %v1477, 16
  %v1687 = vrot.slane %v1685, 5
  %v1688 = vor.u32 %v1684, %v1687
  %v1689 = vrot.slane %v1688, 4
  %v1691 = vshll.u32 %v1478, 16
  %v1693 = vrot.slane %v1691, 5
  %v1694 = vsel %vm348, %v1689, %v1693
  %v1696 = vshrl.u32 %v1479, 16
  %v1698 = vrot.slane %v1696, 4
  %v1699 = vshll.u32 %v1479, 16
  %v1701 = vrot.slane %v1699, 5
  %v1702 = vor.u32 %v1698, %v1701
  %v1703 = vrot.slane %v1702, 4
  %v1705 = vshll.u32 %v1480, 16
  %v1707 = vrot.slane %v1705, 5
  %v1708 = vsel %vm348, %v1703, %v1707
  %v1710 = vshrl.u32 %v1481, 16
  %v1712 = vrot.slane %v1710, 4
  %v1713 = vshll.u32 %v1481, 16
  %v1715 = vrot.slane %v1713, 5
  %v1716 = vor.u32 %v1712, %v1715
  %v1717 = vrot.slane %v1716, 4
  %v1719 = vshll.u32 %v1482, 16
  %v1721 = vrot.slane %v1719, 5
  %v1722 = vsel %vm348, %v1717, %v1721
  %v1724 = vshrl.u32 %v1483, 16
  %v1726 = vrot.slane %v1724, 4
  %v1727 = vshll.u32 %v1483, 16
  %v1729 = vrot.slane %v1727, 5
  %v1730 = vor.u32 %v1726, %v1729
  %v1731 = vrot.slane %v1730, 4
  %v1733 = vshll.u32 %v1484, 16
  %v1735 = vrot.slane %v1733, 5
  %v1736 = vsel %vm348, %v1731, %v1735
  %v1738 = vshrl.u32 %v1485, 16
  %v1740 = vrot.slane %v1738, 4
  %v1741 = vshll.u32 %v1485, 16
  %v1743 = vrot.slane %v1741, 5
  %v1744 = vor.u32 %v1740, %v1743
  %v1745 = vrot.slane %v1744, 4
  %v1747 = vshll.u32 %v1486, 16
  %v1749 = vrot.slane %v1747, 5
  %v1750 = vsel %vm348, %v1745, %v1749
  %v1752 = vshrl.u32 %v1487, 16
  %v1754 = vrot.slane %v1752, 4
  %v1755 = vshll.u32 %v1487, 16
  %v1757 = vrot.slane %v1755, 5
  %v1758 = vor.u32 %v1754, %v1757
  %v1759 = vrot.slane %v1758, 4
  %v1761 = vshll.u32 %v1488, 16
  %v1763 = vrot.slane %v1761, 5
  %v1764 = vsel %vm348, %v1759, %v1763
  %v1766 = vshrl.u32 %v1489, 16
  %v1768 = vrot.slane %v1766, 4
  %v1769 = vshll.u32 %v1489, 16
  %v1771 = vrot.slane %v1769, 5
  %v1772 = vor.u32 %v1768, %v1771
  %v1773 = vrot.slane %v1772, 4
  %v1775 = vshll.u32 %v1490, 16
  %v1777 = vrot.slane %v1775, 5
  %v1778 = vsel %vm348, %v1773, %v1777
  %v1780 = vshrl.u32 %v1491, 16
  %v1782 = vrot.slane %v1780, 4
  %v1783 = vshll.u32 %v1491, 16
  %v1785 = vrot.slane %v1783, 5
  %v1786 = vor.u32 %v1782, %v1785
  %v1787 = vrot.slane %v1786, 4
  %v1789 = vshll.u32 %v1492, 16
  %v1791 = vrot.slane %v1789, 5
  %v1792 = vsel %vm348, %v1787, %v1791
  %v1794 = vshrl.u32 %v1493, 16
  %v1796 = vrot.slane %v1794, 4
  %v1797 = vshll.u32 %v1493, 16
  %v1799 = vrot.slane %v1797, 5
  %v1800 = vor.u32 %v1796, %v1799
  %v1801 = vrot.slane %v1800, 4
  %v1803 = vshll.u32 %v1494, 16
  %v1805 = vrot.slane %v1803, 5
  %v1806 = vsel %vm348, %v1801, %v1805
  %v1808 = vshrl.u32 %v1495, 16
  %v1810 = vrot.slane %v1808, 4
  %v1811 = vshll.u32 %v1495, 16
  %v1813 = vrot.slane %v1811, 5
  %v1814 = vor.u32 %v1810, %v1813
  %v1815 = vrot.slane %v1814, 4
  %v1817 = vshll.u32 %v1496, 16
  %v1819 = vrot.slane %v1817, 5
  %v1820 = vsel %vm348, %v1815, %v1819
  %v1822 = vshrl.u32 %v1497, 16
  %v1824 = vrot.slane %v1822, 4
  %v1825 = vshll.u32 %v1497, 16
  %v1827 = vrot.slane %v1825, 5
  %v1828 = vor.u32 %v1824, %v1827
  %v1829 = vrot.slane %v1828, 4
  %v1831 = vshll.u32 %v1498, 16
  %v1833 = vrot.slane %v1831, 5
  %v1834 = vsel %vm348, %v1829, %v1833
  %v1836 = vshrl.u32 %v1499, 16
  %v1838 = vrot.slane %v1836, 4
  %v1839 = vshll.u32 %v1499, 16
  %v1841 = vrot.slane %v1839, 5
  %v1842 = vor.u32 %v1838, %v1841
  %v1843 = vrot.slane %v1842, 4
  %v1845 = vshll.u32 %v1500, 16
  %v1847 = vrot.slane %v1845, 5
  %v1848 = vsel %vm348, %v1843, %v1847
  %v1850 = vshrl.u32 %v1501, 16
  %v1852 = vrot.slane %v1850, 4
  %v1853 = vshll.u32 %v1501, 16
  %v1855 = vrot.slane %v1853, 5
  %v1856 = vor.u32 %v1852, %v1855
  %v1857 = vrot.slane %v1856, 4
  %v1859 = vshll.u32 %v1502, 16
  %v1861 = vrot.slane %v1859, 5
  %v1862 = vsel %vm348, %v1857, %v1861
  %v1864 = vshrl.u32 %v1503, 16
  %v1866 = vrot.slane %v1864, 4
  %v1867 = vshll.u32 %v1503, 16
  %v1869 = vrot.slane %v1867, 5
  %v1870 = vor.u32 %v1866, %v1869
  %v1871 = vrot.slane %v1870, 4
  %v1873 = vshll.u32 %v1504, 16
  %v1875 = vrot.slane %v1873, 5
  %v1876 = vsel %vm348, %v1871, %v1875
  %v1878 = vshrl.u32 %v1505, 16
  %v1880 = vrot.slane %v1878, 4
  %v1881 = vshll.u32 %v1505, 16
  %v1883 = vrot.slane %v1881, 5
  %v1884 = vor.u32 %v1880, %v1883
  %v1885 = vrot.slane %v1884, 4
  %v1887 = vshll.u32 %v1506, 16
  %v1889 = vrot.slane %v1887, 5
  %v1890 = vsel %vm348, %v1885, %v1889
  %v1892 = vshrl.u32 %v1507, 16
  %v1894 = vrot.slane %v1892, 4
  %v1895 = vshll.u32 %v1507, 16
  %v1897 = vrot.slane %v1895, 5
  %v1898 = vor.u32 %v1894, %v1897
  %v1899 = vrot.slane %v1898, 4
  %v1901 = vshll.u32 %v1508, 16
  %v1903 = vrot.slane %v1901, 5
  %v1904 = vsel %vm348, %v1899, %v1903
  %v1906 = vshrl.u32 %v1509, 16
  %v1908 = vrot.slane %v1906, 4
  %v1909 = vshll.u32 %v1509, 16
  %v1911 = vrot.slane %v1909, 5
  %v1912 = vor.u32 %v1908, %v1911
  %v1913 = vrot.slane %v1912, 4
  %v1915 = vshll.u32 %v1510, 16
  %v1917 = vrot.slane %v1915, 5
  %v1918 = vsel %vm348, %v1913, %v1917
  %v1920 = vshrl.u32 %v1511, 16
  %v1922 = vrot.slane %v1920, 4
  %v1923 = vshll.u32 %v1511, 16
  %v1925 = vrot.slane %v1923, 5
  %v1926 = vor.u32 %v1922, %v1925
  %v1927 = vrot.slane %v1926, 4
  %v1929 = vshll.u32 %v1512, 16
  %v1931 = vrot.slane %v1929, 5
  %v1932 = vsel %vm348, %v1927, %v1931
  %v1934 = vshrl.u32 %v1513, 16
  %v1936 = vrot.slane %v1934, 4
  %v1937 = vshll.u32 %v1513, 16
  %v1939 = vrot.slane %v1937, 5
  %v1940 = vor.u32 %v1936, %v1939
  %v1941 = vrot.slane %v1940, 4
  %v1943 = vshll.u32 %v1514, 16
  %v1945 = vrot.slane %v1943, 5
  %v1946 = vsel %vm348, %v1941, %v1945
  %v1948 = vshrl.u32 %v1515, 16
  %v1950 = vrot.slane %v1948, 4
  %v1951 = vshll.u32 %v1515, 16
  %v1953 = vrot.slane %v1951, 5
  %v1954 = vor.u32 %v1950, %v1953
  %v1955 = vrot.slane %v1954, 4
  %v1957 = vshll.u32 %v1516, 16
  %v1959 = vrot.slane %v1957, 5
  %v1960 = vsel %vm348, %v1955, %v1959
  %v1962 = vshrl.u32 %v1517, 16
  %v1964 = vrot.slane %v1962, 4
  %v1965 = vshll.u32 %v1517, 16
  %v1967 = vrot.slane %v1965, 5
  %v1968 = vor.u32 %v1964, %v1967
  %v1969 = vrot.slane %v1968, 4
  %v1971 = vshll.u32 %v1518, 16
  %v1973 = vrot.slane %v1971, 5
  %v1974 = vsel %vm348, %v1969, %v1973
  %v1976 = vshrl.u32 %v1519, 16
  %v1978 = vrot.slane %v1976, 4
  %v1979 = vshll.u32 %v1519, 16
  %v1981 = vrot.slane %v1979, 5
  %v1982 = vor.u32 %v1978, %v1981
  %v1983 = vrot.slane %v1982, 4
  %v1985 = vshll.u32 %v1520, 16
  %v1987 = vrot.slane %v1985, 5
  %v1988 = vsel %vm348, %v1983, %v1987
  %v1990 = vshrl.u32 %v1521, 16
  %v1992 = vrot.slane %v1990, 4
  %v1993 = vshll.u32 %v1521, 16
  %v1995 = vrot.slane %v1993, 5
  %v1996 = vor.u32 %v1992, %v1995
  %v1997 = vrot.slane %v1996, 4
  %v1999 = vshll.u32 %v1522, 16
  %v2001 = vrot.slane %v1999, 5
  %v2002 = vsel %vm348, %v1997, %v2001
  %v2004 = vshrl.u32 %v1523, 16
  %v2006 = vrot.slane %v2004, 4
  %v2007 = vshll.u32 %v1523, 16
  %v2009 = vrot.slane %v2007, 5
  %v2010 = vor.u32 %v2006, %v2009
  %v2011 = vrot.slane %v2010, 4
  %v2013 = vshll.u32 %v1524, 16
  %v2015 = vrot.slane %v2013, 5
  %v2016 = vsel %vm348, %v2011, %v2015
  %v2018 = vshrl.u32 %v1525, 16
  %v2020 = vrot.slane %v2018, 4
  %v2021 = vshll.u32 %v1525, 16
  %v2023 = vrot.slane %v2021, 5
  %v2024 = vor.u32 %v2020, %v2023
  %v2025 = vrot.slane %v2024, 4
  %v2027 = vshll.u32 %v1526, 16
  %v2029 = vrot.slane %v2027, 5
  %v2030 = vsel %vm348, %v2025, %v2029
  %v2032 = vshrl.u32 %v1527, 16
  %v2034 = vrot.slane %v2032, 4
  %v2035 = vshll.u32 %v1527, 16
  %v2037 = vrot.slane %v2035, 5
  %v2038 = vor.u32 %v2034, %v2037
  %v2039 = vrot.slane %v2038, 4
  %v2041 = vshll.u32 %v1528, 16
  %v2043 = vrot.slane %v2041, 5
  %v2044 = vsel %vm348, %v2039, %v2043
  %v2046 = vshrl.u32 %v1529, 16
  %v2048 = vrot.slane %v2046, 4
  %v2049 = vshll.u32 %v1529, 16
  %v2051 = vrot.slane %v2049, 5
  %v2052 = vor.u32 %v2048, %v2051
  %v2053 = vrot.slane %v2052, 4
  %v2055 = vshll.u32 %v1530, 16
  %v2057 = vrot.slane %v2055, 5
  %v2058 = vsel %vm348, %v2053, %v2057
  %v2060 = vshrl.u32 %v1531, 16
  %v2062 = vrot.slane %v2060, 4
  %v2063 = vshll.u32 %v1531, 16
  %v2065 = vrot.slane %v2063, 5
  %v2066 = vor.u32 %v2062, %v2065
  %v2067 = vrot.slane %v2066, 4
  %v2069 = vshll.u32 %v1532, 16
  %v2071 = vrot.slane %v2069, 5
  %v2072 = vsel %vm348, %v2067, %v2071
  %v2074 = vshrl.u32 %v1533, 16
  %v2076 = vrot.slane %v2074, 4
  %v2077 = vshll.u32 %v1533, 16
  %v2079 = vrot.slane %v2077, 5
  %v2080 = vor.u32 %v2076, %v2079
  %v2081 = vrot.slane %v2080, 4
  %v2083 = vshll.u32 %v1534, 16
  %v2085 = vrot.slane %v2083, 5
  %v2086 = vsel %vm348, %v2081, %v2085
  %v2088 = vshrl.u32 %v1535, 16
  %v2090 = vrot.slane %v2088, 4
  %v2091 = vshll.u32 %v1535, 16
  %v2093 = vrot.slane %v2091, 5
  %v2094 = vor.u32 %v2090, %v2093
  %v2095 = vrot.slane %v2094, 4
  %v2097 = vshll.u32 %v1536, 16
  %v2099 = vrot.slane %v2097, 5
  %v2100 = vsel %vm348, %v2095, %v2099
  %v2102 = vshrl.u32 %v1537, 16
  %v2104 = vrot.slane %v2102, 4
  %v2105 = vshll.u32 %v1537, 16
  %v2107 = vrot.slane %v2105, 5
  %v2108 = vor.u32 %v2104, %v2107
  %v2109 = vrot.slane %v2108, 4
  %v2111 = vshll.u32 %v1538, 16
  %v2113 = vrot.slane %v2111, 5
  %v2114 = vsel %vm348, %v2109, %v2113
  %v2116 = vshrl.u32 %v1539, 16
  %v2118 = vrot.slane %v2116, 4
  %v2119 = vshll.u32 %v1539, 16
  %v2121 = vrot.slane %v2119, 5
  %v2122 = vor.u32 %v2118, %v2121
  %v2123 = vrot.slane %v2122, 4
  %v2125 = vshll.u32 %v1540, 16
  %v2127 = vrot.slane %v2125, 5
  %v2128 = vsel %vm348, %v2123, %v2127
  %v2130 = vshrl.u32 %v1541, 16
  %v2132 = vrot.slane %v2130, 4
  %v2133 = vshll.u32 %v1541, 16
  %v2135 = vrot.slane %v2133, 5
  %v2136 = vor.u32 %v2132, %v2135
  %v2137 = vrot.slane %v2136, 4
  %v2139 = vshll.u32 %v1542, 16
  %v2141 = vrot.slane %v2139, 5
  %v2142 = vsel %vm348, %v2137, %v2141
  %v2144 = vshrl.u32 %v1543, 16
  %v2146 = vrot.slane %v2144, 4
  %v2147 = vshll.u32 %v1543, 16
  %v2149 = vrot.slane %v2147, 5
  %v2150 = vor.u32 %v2146, %v2149
  %v2151 = vrot.slane %v2150, 4
  %v2153 = vshll.u32 %v1544, 16
  %v2155 = vrot.slane %v2153, 5
  %v2156 = vsel %vm348, %v2151, %v2155
  %v2158 = vshrl.u32 %v1545, 16
  %v2160 = vrot.slane %v2158, 4
  %v2161 = vshll.u32 %v1545, 16
  %v2163 = vrot.slane %v2161, 5
  %v2164 = vor.u32 %v2160, %v2163
  %v2165 = vrot.slane %v2164, 4
  %v2167 = vshll.u32 %v1546, 16
  %v2169 = vrot.slane %v2167, 5
  %v2170 = vsel %vm348, %v2165, %v2169
  %v2172 = vshrl.u32 %v1547, 16
  %v2174 = vrot.slane %v2172, 4
  %v2175 = vshll.u32 %v1547, 16
  %v2177 = vrot.slane %v2175, 5
  %v2178 = vor.u32 %v2174, %v2177
  %v2179 = vrot.slane %v2178, 4
  %v2181 = vshll.u32 %v1548, 16
  %v2183 = vrot.slane %v2181, 5
  %v2184 = vsel %vm348, %v2179, %v2183
  %v2186 = vshrl.u32 %v1549, 16
  %v2188 = vrot.slane %v2186, 4
  %v2189 = vshll.u32 %v1549, 16
  %v2191 = vrot.slane %v2189, 5
  %v2192 = vor.u32 %v2188, %v2191
  %v2193 = vrot.slane %v2192, 4
  %v2195 = vshll.u32 %v1550, 16
  %v2197 = vrot.slane %v2195, 5
  %v2198 = vsel %vm348, %v2193, %v2197
  %v2200 = vshrl.u32 %v1551, 16
  %v2202 = vrot.slane %v2200, 4
  %v2203 = vshll.u32 %v1551, 16
  %v2205 = vrot.slane %v2203, 5
  %v2206 = vor.u32 %v2202, %v2205
  %v2207 = vrot.slane %v2206, 4
  %v2209 = vshll.u32 %v1552, 16
  %v2211 = vrot.slane %v2209, 5
  %v2212 = vsel %vm348, %v2207, %v2211
  %v2214 = vshrl.u32 %v1553, 16
  %v2216 = vrot.slane %v2214, 4
  %v2217 = vshll.u32 %v1553, 16
  %v2219 = vrot.slane %v2217, 5
  %v2220 = vor.u32 %v2216, %v2219
  %v2221 = vrot.slane %v2220, 4
  %v2223 = vshll.u32 %v1554, 16
  %v2225 = vrot.slane %v2223, 5
  %v2226 = vsel %vm348, %v2221, %v2225
  %v2227 = vunpack.c.l.b16 %v1568
  %v2228 = vunpack.c.l.b16 %v1582
  %v2229 = vunpack.c.l.b16 %v1596
  %v2230 = vunpack.c.l.b16 %v1610
  %v2231 = vunpack.c.l.b16 %v1624
  %v2232 = vunpack.c.l.b16 %v1638
  %v2233 = vunpack.c.l.b16 %v1652
  %v2234 = vunpack.c.l.b16 %v1666
  %v2235 = vunpack.c.l.b16 %v1680
  %v2236 = vunpack.c.l.b16 %v1694
  %v2237 = vunpack.c.l.b16 %v1708
  %v2238 = vunpack.c.l.b16 %v1722
  %v2239 = vunpack.c.l.b16 %v1736
  %v2240 = vunpack.c.l.b16 %v1750
  %v2241 = vunpack.c.l.b16 %v1764
  %v2242 = vunpack.c.l.b16 %v1778
  %v2243 = vunpack.c.l.b16 %v1792
  %v2244 = vunpack.c.l.b16 %v1806
  %v2245 = vunpack.c.l.b16 %v1820
  %v2246 = vunpack.c.l.b16 %v1834
  %v2247 = vunpack.c.l.b16 %v1848
  %v2248 = vunpack.c.l.b16 %v1862
  %v2249 = vunpack.c.l.b16 %v1876
  %v2250 = vunpack.c.l.b16 %v1890
  %v2251 = vunpack.c.l.b16 %v1904
  %v2252 = vunpack.c.l.b16 %v1918
  %v2253 = vunpack.c.l.b16 %v1932
  %v2254 = vunpack.c.l.b16 %v1946
  %v2255 = vunpack.c.l.b16 %v1960
  %v2256 = vunpack.c.l.b16 %v1974
  %v2257 = vunpack.c.l.b16 %v1988
  %v2258 = vunpack.c.l.b16 %v2002
  %v2259 = vunpack.c.l.b16 %v2016
  %v2260 = vunpack.c.l.b16 %v2030
  %v2261 = vunpack.c.l.b16 %v2044
  %v2262 = vunpack.c.l.b16 %v2058
  %v2263 = vunpack.c.l.b16 %v2072
  %v2264 = vunpack.c.l.b16 %v2086
  %v2265 = vunpack.c.l.b16 %v2100
  %v2266 = vunpack.c.l.b16 %v2114
  %v2267 = vunpack.c.l.b16 %v2128
  %v2268 = vunpack.c.l.b16 %v2142
  %v2269 = vunpack.c.l.b16 %v2156
  %v2270 = vunpack.c.l.b16 %v2170
  %v2271 = vunpack.c.l.b16 %v2184
  %v2272 = vunpack.c.l.b16 %v2198
  %v2273 = vunpack.c.l.b16 %v2212
  %v2274 = vunpack.c.l.b16 %v2226
  %v2275 = vpack.c.b16 %v2228, %v2227
  %v2276 = vpack.c.b16 %v2230, %v2229
  %v2277 = vpack.c.b16 %v2232, %v2231
  %v2278 = vpack.c.b16 %v2234, %v2233
  %v2279 = vpack.c.b16 %v2236, %v2235
  %v2280 = vpack.c.b16 %v2238, %v2237
  %v2281 = vpack.c.b16 %v2240, %v2239
  %v2282 = vpack.c.b16 %v2242, %v2241
  %v2283 = vpack.c.b16 %v2244, %v2243
  %v2284 = vpack.c.b16 %v2246, %v2245
  %v2285 = vpack.c.b16 %v2248, %v2247
  %v2286 = vpack.c.b16 %v2250, %v2249
  %v2287 = vpack.c.b16 %v2252, %v2251
  %v2288 = vpack.c.b16 %v2254, %v2253
  %v2289 = vpack.c.b16 %v2256, %v2255
  %v2290 = vpack.c.b16 %v2258, %v2257
  %v2291 = vpack.c.b16 %v2260, %v2259
  %v2292 = vpack.c.b16 %v2262, %v2261
  %v2293 = vpack.c.b16 %v2264, %v2263
  %v2294 = vpack.c.b16 %v2266, %v2265
  %v2295 = vpack.c.b16 %v2268, %v2267
  %v2296 = vpack.c.b16 %v2270, %v2269
  %v2297 = vpack.c.b16 %v2272, %v2271
  %v2298 = vpack.c.b16 %v2274, %v2273
  %2299 = vrot.lane.b32.xlu0 %v2275, 48
  %v2300 = vpop.permute.xlu0 %2299
  %2301 = vrot.lane.b32.xlu0 %v2276, 48
  %v2302 = vpop.permute.xlu0 %2301
  %2303 = vrot.lane.b32.xlu0 %v2277, 48
  %v2304 = vpop.permute.xlu0 %2303
  %2305 = vrot.lane.b32.xlu0 %v2278, 48
  %v2306 = vpop.permute.xlu0 %2305
  %2307 = vrot.lane.b32.xlu0 %v2279, 48
  %v2308 = vpop.permute.xlu0 %2307
  %2309 = vrot.lane.b32.xlu0 %v2280, 48
  %v2310 = vpop.permute.xlu0 %2309
  %2311 = vrot.lane.b32.xlu0 %v2281, 48
  %v2312 = vpop.permute.xlu0 %2311
  %2313 = vrot.lane.b32.xlu0 %v2282, 48
  %v2314 = vpop.permute.xlu0 %2313
  %2315 = vrot.lane.b32.xlu0 %v2283, 48
  %v2316 = vpop.permute.xlu0 %2315
  %2317 = vrot.lane.b32.xlu0 %v2284, 48
  %v2318 = vpop.permute.xlu0 %2317
  %2319 = vrot.lane.b32.xlu0 %v2285, 48
  %v2320 = vpop.permute.xlu0 %2319
  %2321 = vrot.lane.b32.xlu0 %v2286, 48
  %v2322 = vpop.permute.xlu0 %2321
  %2323 = vrot.lane.b32.xlu0 %v2287, 48
  %v2324 = vpop.permute.xlu0 %2323
  %2325 = vrot.lane.b32.xlu0 %v2288, 48
  %v2326 = vpop.permute.xlu0 %2325
  %2327 = vrot.lane.b32.xlu0 %v2289, 48
  %v2328 = vpop.permute.xlu0 %2327
  %2329 = vrot.lane.b32.xlu0 %v2290, 48
  %v2330 = vpop.permute.xlu0 %2329
  %2331 = vrot.lane.b32.xlu0 %v2291, 48
  %v2332 = vpop.permute.xlu0 %2331
  %2333 = vrot.lane.b32.xlu0 %v2292, 48
  %v2334 = vpop.permute.xlu0 %2333
  %2335 = vrot.lane.b32.xlu0 %v2293, 48
  %v2336 = vpop.permute.xlu0 %2335
  %2337 = vrot.lane.b32.xlu0 %v2294, 48
  %v2338 = vpop.permute.xlu0 %2337
  %2339 = vrot.lane.b32.xlu0 %v2295, 48
  %v2340 = vpop.permute.xlu0 %2339
  %2341 = vrot.lane.b32.xlu0 %v2296, 48
  %v2342 = vpop.permute.xlu0 %2341
  %2343 = vrot.lane.b32.xlu0 %v2297, 48
  %v2344 = vpop.permute.xlu0 %2343
  %2345 = vrot.lane.b32.xlu0 %v2298, 48
  %v2346 = vpop.permute.xlu0 %2345
  %vm2371 = vcmask 523648
  %2372 = vst.msk [vmem:[#allocation2] sm:$0xff] %vm2371, %v2300
  %2373 = vst.msk [vmem:[#allocation2 + $0x8] sm:$0xff] %vm2371, %v2302
  %2374 = vst.msk [vmem:[#allocation2 + $0x10] sm:$0xff] %vm2371, %v2304
  %2375 = vst.msk [vmem:[#allocation2 + $0x18] sm:$0xff] %vm2371, %v2306
  %2376 = vst.msk [vmem:[#allocation2 + $0x20] sm:$0xff] %vm2371, %v2308
  %2377 = vst.msk [vmem:[#allocation2 + $0x28] sm:$0xff] %vm2371, %v2310
  %2378 = vst.msk [vmem:[#allocation2 + $0x30] sm:$0xff] %vm2371, %v2312
  %2379 = vst.msk [vmem:[#allocation2 + $0x38] sm:$0xff] %vm2371, %v2314
  %2380 = vst.msk [vmem:[#allocation2 + $0x40] sm:$0xff] %vm2371, %v2316
  %2381 = vst.msk [vmem:[#allocation2 + $0x48] sm:$0xff] %vm2371, %v2318
  %2382 = vst.msk [vmem:[#allocation2 + $0x50] sm:$0xff] %vm2371, %v2320
  %2383 = vst.msk [vmem:[#allocation2 + $0x58] sm:$0xff] %vm2371, %v2322
  %2384 = vst.msk [vmem:[#allocation2 + $0x60] sm:$0xff] %vm2371, %v2324
  %2385 = vst.msk [vmem:[#allocation2 + $0x68] sm:$0xff] %vm2371, %v2326
  %2386 = vst.msk [vmem:[#allocation2 + $0x70] sm:$0xff] %vm2371, %v2328
  %2387 = vst.msk [vmem:[#allocation2 + $0x78] sm:$0xff] %vm2371, %v2330
  %2388 = vst.msk [vmem:[#allocation2 + $0x80] sm:$0xff] %vm2371, %v2332
  %2389 = vst.msk [vmem:[#allocation2 + $0x88] sm:$0xff] %vm2371, %v2334
  %2390 = vst.msk [vmem:[#allocation2 + $0x90] sm:$0xff] %vm2371, %v2336
  %2391 = vst.msk [vmem:[#allocation2 + $0x98] sm:$0xff] %vm2371, %v2338
  %2392 = vst.msk [vmem:[#allocation2 + $0xa0] sm:$0xff] %vm2371, %v2340
  %2393 = vst.msk [vmem:[#allocation2 + $0xa8] sm:$0xff] %vm2371, %v2342
  %2394 = vst.msk [vmem:[#allocation2 + $0xb0] sm:$0xff] %vm2371, %v2344
  %2395 = vst.msk [vmem:[#allocation2 + $0xb8] sm:$0xff] %vm2371, %v2346
  %v2396 = vld [vmem:[#allocation2] sm:$0xff]
  %v2397 = vld [vmem:[#allocation2 + $0x8] sm:$0xff]
  %v2398 = vld [vmem:[#allocation2 + $0x10] sm:$0xff]
  %v2399 = vld [vmem:[#allocation2 + $0x18] sm:$0xff]
  %v2400 = vld [vmem:[#allocation2 + $0x20] sm:$0xff]
  %v2401 = vld [vmem:[#allocation2 + $0x28] sm:$0xff]
  %v2402 = vld [vmem:[#allocation2 + $0x30] sm:$0xff]
  %v2403 = vld [vmem:[#allocation2 + $0x38] sm:$0xff]
  %v2404 = vld [vmem:[#allocation2 + $0x40] sm:$0xff]
  %v2405 = vld [vmem:[#allocation2 + $0x48] sm:$0xff]
  %v2406 = vld [vmem:[#allocation2 + $0x50] sm:$0xff]
  %v2407 = vld [vmem:[#allocation2 + $0x58] sm:$0xff]
  %v2408 = vld [vmem:[#allocation2 + $0x60] sm:$0xff]
  %v2409 = vld [vmem:[#allocation2 + $0x68] sm:$0xff]
  %v2410 = vld [vmem:[#allocation2 + $0x70] sm:$0xff]
  %v2411 = vld [vmem:[#allocation2 + $0x78] sm:$0xff]
  %v2412 = vld [vmem:[#allocation2 + $0x80] sm:$0xff]
  %v2413 = vld [vmem:[#allocation2 + $0x88] sm:$0xff]
  %v2414 = vld [vmem:[#allocation2 + $0x90] sm:$0xff]
  %v2415 = vld [vmem:[#allocation2 + $0x98] sm:$0xff]
  %v2416 = vld [vmem:[#allocation2 + $0xa0] sm:$0xff]
  %v2417 = vld [vmem:[#allocation2 + $0xa8] sm:$0xff]
  %v2418 = vld [vmem:[#allocation2 + $0xb0] sm:$0xff]
  %v2419 = vld [vmem:[#allocation2 + $0xb8] sm:$0xff]
  %v2420 = vld [vmem:[%s1] sm:$0xf]
  %v2421 = vld [vmem:[%s1 + $0x4] sm:$0xf]
  %v2422 = vld [vmem:[%s1 + $0x8] sm:$0xf]
  %v2423 = vld [vmem:[%s1 + $0xc] sm:$0xf]
  %v2424 = vld [vmem:[%s1 + $0x10] sm:$0xf]
  %v2425 = vld [vmem:[%s1 + $0x14] sm:$0xf]
  %v2426 = vld [vmem:[%s1 + $0x18] sm:$0xf]
  %v2427 = vld [vmem:[%s1 + $0x1c] sm:$0xf]
  %v2428 = vld [vmem:[%s2] sm:$0x1]
  %v2430 = vlaneseq
  %v2431 = vshrl.u32 %v2430, 7
  %v2432 = vsub.s32 0, %v2431
  %v2433 = vrot.slane %v2428, %v2432
  %v2443 = vunpack.c.l.b16 %v2420
  %v2444 = vunpack.c.l.b16 %v2421
  %v2445 = vunpack.c.l.b16 %v2422
  %v2446 = vunpack.c.l.b16 %v2423
  %v2447 = vunpack.c.l.b16 %v2424
  %v2448 = vunpack.c.l.b16 %v2425
  %v2449 = vunpack.c.l.b16 %v2426
  %v2450 = vunpack.c.l.b16 %v2427
  %v2451 = vpack.c.b16 %v2444, %v2443
  %v2452 = vpack.c.b16 %v2446, %v2445
  %v2453 = vpack.c.b16 %v2448, %v2447
  %v2454 = vpack.c.b16 %v2450, %v2449
  %vm2459 = vcmask 523264
  %v2461 = vsel %vm2459, %v2396, 0
  %v2464 = vsel %vm2459, %v2397, 0
  %v2467 = vsel %vm2459, %v2398, 0
  %v2470 = vsel %vm2459, %v2399, 0
  %v2473 = vsel %vm2459, %v2400, 0
  %v2476 = vsel %vm2459, %v2401, 0
  %v2479 = vsel %vm2459, %v2402, 0
  %v2482 = vsel %vm2459, %v2403, 0
  %v2485 = vsel %vm2459, %v2404, 0
  %v2488 = vsel %vm2459, %v2405, 0
  %v2491 = vsel %vm2459, %v2406, 0
  %v2494 = vsel %vm2459, %v2407, 0
  %v2497 = vsel %vm2459, %v2408, 0
  %v2500 = vsel %vm2459, %v2409, 0
  %v2503 = vsel %vm2459, %v2410, 0
  %v2506 = vsel %vm2459, %v2411, 0
  %v2509 = vsel %vm2459, %v2412, 0
  %v2512 = vsel %vm2459, %v2413, 0
  %v2515 = vsel %vm2459, %v2414, 0
  %v2518 = vsel %vm2459, %v2415, 0
  %v2521 = vsel %vm2459, %v2416, 0
  %v2524 = vsel %vm2459, %v2417, 0
  %v2527 = vsel %vm2459, %v2418, 0
  %v2530 = vsel %vm2459, %v2419, 0
  %2532 = vmatprep.subr.bf16.mxu0 0
  %2533 = vmatpush1.bf16.msra.mxu0 %v2451
  %2534 = vmatprep.subr.bf16.mxu0 0
  %2535 = vmatpush1.bf16.msra.mxu0 %v2452
  %2536 = vmatprep.subr.bf16.mxu0 0
  %2537 = vmatpush1.bf16.msra.mxu0 %v2453
  %2538 = vmatprep.subr.bf16.mxu0 0
  %2539 = vmatpush1.bf16.msra.mxu0 %v2454
  %2540 = vmatprep.subr.bf16.mxu0 0
  %2541 = vmatpush1.bf16.msra.mxu0 0
  %2542 = vmatprep.subr.bf16.mxu0 0
  %2543 = vmatpush1.bf16.msra.mxu0 0
  %2544 = vmatprep.subr.bf16.mxu0 0
  %2545 = vmatpush1.bf16.msra.mxu0 0
  %2546 = vmatprep.subr.bf16.mxu0 0
  %2547 = vmatpush1.bf16.msra.mxu0 0
  %2548 = vmatprep.subr.bf16.mxu0 0
  %2549 = vmatpush1.bf16.msra.mxu0 0
  %2550 = vmatprep.subr.bf16.mxu0 0
  %2551 = vmatpush1.bf16.msra.mxu0 0
  %2552 = vmatprep.subr.bf16.mxu0 0
  %2553 = vmatpush1.bf16.msra.mxu0 0
  %2554 = vmatprep.subr.bf16.mxu0 0
  %2555 = vmatpush1.bf16.msra.mxu0 0
  %2556 = vmatprep.subr.bf16.mxu0 0
  %2557 = vmatpush1.bf16.msra.mxu0 0
  %2558 = vmatprep.subr.bf16.mxu0 0
  %2559 = vmatpush1.bf16.msra.mxu0 0
  %2560 = vmatprep.subr.bf16.mxu0 0
  %2561 = vmatpush1.bf16.msra.mxu0 0
  %2562 = vmatprep.subr.bf16.mxu0 0
  %2563 = vmatpush1.bf16.msra.mxu0 0
  %2564 = vmatprep.mubr.bf16.mxu0 0
  %2565 = vmatmul.mubr.bf16.gmra.mrb[0].mxu0 %v2461
  %v2566 = vpop.f32.mrb[0].mxu0
  %v2567 = vadd.f32 %v2433, %v2566
  %v2568 = vpop.f32.mrb[0].mxu0
  %v2569 = vpop.f32.mrb[0].mxu0
  %v2570 = vadd.f32 %v2433, %v2569
  %v2571 = vpop.f32.mrb[0].mxu0
  %2572 = vmatprep.mubr.bf16.mxu0 0
  %2573 = vmatmul.mubr.bf16.gmra.mrb[0].mxu0 %v2464
  %v2574 = vpop.f32.mrb[0].mxu0
  %v2575 = vadd.f32 %v2433, %v2574
  %v2576 = vpop.f32.mrb[0].mxu0
  %v2577 = vpop.f32.mrb[0].mxu0
  %v2578 = vadd.f32 %v2433, %v2577
  %v2579 = vpop.f32.mrb[0].mxu0
  %2580 = vmatprep.mubr.bf16.mxu0 0
  %2581 = vmatmul.mubr.bf16.gmra.mrb[0].mxu0 %v2467
  %v2582 = vpop.f32.mrb[0].mxu0
  %v2583 = vadd.f32 %v2433, %v2582
  %v2584 = vpop.f32.mrb[0].mxu0
  %v2585 = vpop.f32.mrb[0].mxu0
  %v2586 = vadd.f32 %v2433, %v2585
  %v2587 = vpop.f32.mrb[0].mxu0
  %2588 = vmatprep.mubr.bf16.mxu0 0
  %2589 = vmatmul.mubr.bf16.gmra.mrb[0].mxu0 %v2470
  %v2590 = vpop.f32.mrb[0].mxu0
  %v2591 = vadd.f32 %v2433, %v2590
  %v2592 = vpop.f32.mrb[0].mxu0
  %v2593 = vpop.f32.mrb[0].mxu0
  %v2594 = vadd.f32 %v2433, %v2593
  %v2595 = vpop.f32.mrb[0].mxu0
  %2596 = vmatprep.mubr.bf16.mxu0 0
  %2597 = vmatmul.mubr.bf16.gmra.mrb[0].mxu0 %v2473
  %v2598 = vpop.f32.mrb[0].mxu0
  %v2599 = vadd.f32 %v2433, %v2598
  %v2600 = vpop.f32.mrb[0].mxu0
  %v2601 = vpop.f32.mrb[0].mxu0
  %v2602 = vadd.f32 %v2433, %v2601
  %v2603 = vpop.f32.mrb[0].mxu0
  %2604 = vmatprep.mubr.bf16.mxu0 0
  %2605 = vmatmul.mubr.bf16.gmra.mrb[0].mxu0 %v2476
  %v2606 = vpop.f32.mrb[0].mxu0
  %v2607 = vadd.f32 %v2433, %v2606
  %v2608 = vpop.f32.mrb[0].mxu0
  %v2609 = vpop.f32.mrb[0].mxu0
  %v2610 = vadd.f32 %v2433, %v2609
  %v2611 = vpop.f32.mrb[0].mxu0
  %2612 = vmatprep.mubr.bf16.mxu0 0
  %2613 = vmatmul.mubr.bf16.gmra.mrb[0].mxu0 %v2479
  %v2614 = vpop.f32.mrb[0].mxu0
  %v2615 = vadd.f32 %v2433, %v2614
  %v2616 = vpop.f32.mrb[0].mxu0
  %v2617 = vpop.f32.mrb[0].mxu0
  %v2618 = vadd.f32 %v2433, %v2617
  %v2619 = vpop.f32.mrb[0].mxu0
  %2620 = vmatprep.mubr.bf16.mxu0 0
  %2621 = vmatmul.mubr.bf16.gmra.mrb[0].mxu0 %v2482
  %v2622 = vpop.f32.mrb[0].mxu0
  %v2623 = vadd.f32 %v2433, %v2622
  %v2624 = vpop.f32.mrb[0].mxu0
  %v2625 = vpop.f32.mrb[0].mxu0
  %v2626 = vadd.f32 %v2433, %v2625
  %v2627 = vpop.f32.mrb[0].mxu0
  %2628 = vmatprep.mubr.bf16.mxu0 0
  %2629 = vmatmul.mubr.bf16.gmra.mrb[0].mxu0 %v2485
  %v2630 = vpop.f32.mrb[0].mxu0
  %v2631 = vadd.f32 %v2433, %v2630
  %v2632 = vpop.f32.mrb[0].mxu0
  %v2633 = vpop.f32.mrb[0].mxu0
  %v2634 = vadd.f32 %v2433, %v2633
  %v2635 = vpop.f32.mrb[0].mxu0
  %2636 = vmatprep.mubr.bf16.mxu0 0
  %2637 = vmatmul.mubr.bf16.gmra.mrb[0].mxu0 %v2488
  %v2638 = vpop.f32.mrb[0].mxu0
  %v2639 = vadd.f32 %v2433, %v2638
  %v2640 = vpop.f32.mrb[0].mxu0
  %v2641 = vpop.f32.mrb[0].mxu0
  %v2642 = vadd.f32 %v2433, %v2641
  %v2643 = vpop.f32.mrb[0].mxu0
  %2644 = vmatprep.mubr.bf16.mxu0 0
  %2645 = vmatmul.mubr.bf16.gmra.mrb[0].mxu0 %v2491
  %v2646 = vpop.f32.mrb[0].mxu0
  %v2647 = vadd.f32 %v2433, %v2646
  %v2648 = vpop.f32.mrb[0].mxu0
  %v2649 = vpop.f32.mrb[0].mxu0
  %v2650 = vadd.f32 %v2433, %v2649
  %v2651 = vpop.f32.mrb[0].mxu0
  %2652 = vmatprep.mubr.bf16.mxu0 0
  %2653 = vmatmul.mubr.bf16.gmra.mrb[0].mxu0 %v2494
  %v2654 = vpop.f32.mrb[0].mxu0
  %v2655 = vadd.f32 %v2433, %v2654
  %v2656 = vpop.f32.mrb[0].mxu0
  %v2657 = vpop.f32.mrb[0].mxu0
  %v2658 = vadd.f32 %v2433, %v2657
  %v2659 = vpop.f32.mrb[0].mxu0
  %2660 = vmatprep.mubr.bf16.mxu0 0
  %2661 = vmatmul.mubr.bf16.gmra.mrb[0].mxu0 %v2497
  %v2662 = vpop.f32.mrb[0].mxu0
  %v2663 = vadd.f32 %v2433, %v2662
  %v2664 = vpop.f32.mrb[0].mxu0
  %v2665 = vpop.f32.mrb[0].mxu0
  %v2666 = vadd.f32 %v2433, %v2665
  %v2667 = vpop.f32.mrb[0].mxu0
  %2668 = vmatprep.mubr.bf16.mxu0 0
  %2669 = vmatmul.mubr.bf16.gmra.mrb[0].mxu0 %v2500
  %v2670 = vpop.f32.mrb[0].mxu0
  %v2671 = vadd.f32 %v2433, %v2670
  %v2672 = vpop.f32.mrb[0].mxu0
  %v2673 = vpop.f32.mrb[0].mxu0
  %v2674 = vadd.f32 %v2433, %v2673
  %v2675 = vpop.f32.mrb[0].mxu0
  %2676 = vmatprep.mubr.bf16.mxu0 0
  %2677 = vmatmul.mubr.bf16.gmra.mrb[0].mxu0 %v2503
  %v2678 = vpop.f32.mrb[0].mxu0
  %v2679 = vadd.f32 %v2433, %v2678
  %v2680 = vpop.f32.mrb[0].mxu0
  %v2681 = vpop.f32.mrb[0].mxu0
  %v2682 = vadd.f32 %v2433, %v2681
  %v2683 = vpop.f32.mrb[0].mxu0
  %2684 = vmatprep.mubr.bf16.mxu0 0
  %2685 = vmatmul.mubr.bf16.gmra.mrb[0].mxu0 %v2506
  %v2686 = vpop.f32.mrb[0].mxu0
  %v2687 = vadd.f32 %v2433, %v2686
  %v2688 = vpop.f32.mrb[0].mxu0
  %v2689 = vpop.f32.mrb[0].mxu0
  %v2690 = vadd.f32 %v2433, %v2689
  %v2691 = vpop.f32.mrb[0].mxu0
  %2692 = vmatprep.mubr.bf16.mxu0 0
  %2693 = vmatmul.mubr.bf16.gmra.mrb[0].mxu0 %v2509
  %v2694 = vpop.f32.mrb[0].mxu0
  %v2695 = vadd.f32 %v2433, %v2694
  %v2696 = vpop.f32.mrb[0].mxu0
  %v2697 = vpop.f32.mrb[0].mxu0
  %v2698 = vadd.f32 %v2433, %v2697
  %v2699 = vpop.f32.mrb[0].mxu0
  %2700 = vmatprep.mubr.bf16.mxu0 0
  %2701 = vmatmul.mubr.bf16.gmra.mrb[0].mxu0 %v2512
  %v2702 = vpop.f32.mrb[0].mxu0
  %v2703 = vadd.f32 %v2433, %v2702
  %v2704 = vpop.f32.mrb[0].mxu0
  %v2705 = vpop.f32.mrb[0].mxu0
  %v2706 = vadd.f32 %v2433, %v2705
  %v2707 = vpop.f32.mrb[0].mxu0
  %2708 = vmatprep.mubr.bf16.mxu0 0
  %2709 = vmatmul.mubr.bf16.gmra.mrb[0].mxu0 %v2515
  %v2710 = vpop.f32.mrb[0].mxu0
  %v2711 = vadd.f32 %v2433, %v2710
  %v2712 = vpop.f32.mrb[0].mxu0
  %v2713 = vpop.f32.mrb[0].mxu0
  %v2714 = vadd.f32 %v2433, %v2713
  %v2715 = vpop.f32.mrb[0].mxu0
  %2716 = vmatprep.mubr.bf16.mxu0 0
  %2717 = vmatmul.mubr.bf16.gmra.mrb[0].mxu0 %v2518
  %v2718 = vpop.f32.mrb[0].mxu0
  %v2719 = vadd.f32 %v2433, %v2718
  %v2720 = vpop.f32.mrb[0].mxu0
  %v2721 = vpop.f32.mrb[0].mxu0
  %v2722 = vadd.f32 %v2433, %v2721
  %v2723 = vpop.f32.mrb[0].mxu0
  %2724 = vmatprep.mubr.bf16.mxu0 0
  %2725 = vmatmul.mubr.bf16.gmra.mrb[0].mxu0 %v2521
  %v2726 = vpop.f32.mrb[0].mxu0
  %v2727 = vadd.f32 %v2433, %v2726
  %v2728 = vpop.f32.mrb[0].mxu0
  %v2729 = vpop.f32.mrb[0].mxu0
  %v2730 = vadd.f32 %v2433, %v2729
  %v2731 = vpop.f32.mrb[0].mxu0
  %2732 = vmatprep.mubr.bf16.mxu0 0
  %2733 = vmatmul.mubr.bf16.gmra.mrb[0].mxu0 %v2524
  %v2734 = vpop.f32.mrb[0].mxu0
  %v2735 = vadd.f32 %v2433, %v2734
  %v2736 = vpop.f32.mrb[0].mxu0
  %v2737 = vpop.f32.mrb[0].mxu0
  %v2738 = vadd.f32 %v2433, %v2737
  %v2739 = vpop.f32.mrb[0].mxu0
  %2740 = vmatprep.mubr.bf16.mxu0 0
  %2741 = vmatmul.mubr.bf16.gmra.mrb[0].mxu0 %v2527
  %v2742 = vpop.f32.mrb[0].mxu0
  %v2743 = vadd.f32 %v2433, %v2742
  %v2744 = vpop.f32.mrb[0].mxu0
  %v2745 = vpop.f32.mrb[0].mxu0
  %v2746 = vadd.f32 %v2433, %v2745
  %v2747 = vpop.f32.mrb[0].mxu0
  %2748 = vmatprep.mubr.bf16.mxu0 0
  %2749 = vmatmul.mubr.bf16.gmra.mrb[0].mxu0 %v2530
  %v2750 = vpop.f32.mrb[0].mxu0
  %v2751 = vadd.f32 %v2433, %v2750
  %v2752 = vpop.f32.mrb[0].mxu0
  %v2753 = vpop.f32.mrb[0].mxu0
  %v2754 = vadd.f32 %v2433, %v2753
  %v2755 = vpop.f32.mrb[0].mxu0
  %2756 = vdwg.mxu0
  %v2757 = vpack.c.bf16 %v2570, %v2567
  %v2758 = vpack.c.bf16 %v2578, %v2575
  %v2759 = vpack.c.bf16 %v2586, %v2583
  %v2760 = vpack.c.bf16 %v2594, %v2591
  %v2761 = vpack.c.bf16 %v2602, %v2599
  %v2762 = vpack.c.bf16 %v2610, %v2607
  %v2763 = vpack.c.bf16 %v2618, %v2615
  %v2764 = vpack.c.bf16 %v2626, %v2623
  %v2765 = vpack.c.bf16 %v2634, %v2631
  %v2766 = vpack.c.bf16 %v2642, %v2639
  %v2767 = vpack.c.bf16 %v2650, %v2647
  %v2768 = vpack.c.bf16 %v2658, %v2655
  %v2769 = vpack.c.bf16 %v2666, %v2663
  %v2770 = vpack.c.bf16 %v2674, %v2671
  %v2771 = vpack.c.bf16 %v2682, %v2679
  %v2772 = vpack.c.bf16 %v2690, %v2687
  %v2773 = vpack.c.bf16 %v2698, %v2695
  %v2774 = vpack.c.bf16 %v2706, %v2703
  %v2775 = vpack.c.bf16 %v2714, %v2711
  %v2776 = vpack.c.bf16 %v2722, %v2719
  %v2777 = vpack.c.bf16 %v2730, %v2727
  %v2778 = vpack.c.bf16 %v2738, %v2735
  %v2779 = vpack.c.bf16 %v2746, %v2743
  %v2780 = vpack.c.bf16 %v2754, %v2751
  %v2805 = vunpack.c.l.b16 %v2757
  %v2806 = vunpack.c.h.b16 %v2757
  %v2807 = vunpack.c.l.b16 %v2758
  %v2808 = vunpack.c.h.b16 %v2758
  %v2809 = vunpack.c.l.b16 %v2759
  %v2810 = vunpack.c.h.b16 %v2759
  %v2811 = vunpack.c.l.b16 %v2760
  %v2812 = vunpack.c.h.b16 %v2760
  %v2813 = vunpack.c.l.b16 %v2761
  %v2814 = vunpack.c.h.b16 %v2761
  %v2815 = vunpack.c.l.b16 %v2762
  %v2816 = vunpack.c.h.b16 %v2762
  %v2817 = vunpack.c.l.b16 %v2763
  %v2818 = vunpack.c.h.b16 %v2763
  %v2819 = vunpack.c.l.b16 %v2764
  %v2820 = vunpack.c.h.b16 %v2764
  %v2821 = vunpack.c.l.b16 %v2765
  %v2822 = vunpack.c.h.b16 %v2765
  %v2823 = vunpack.c.l.b16 %v2766
  %v2824 = vunpack.c.h.b16 %v2766
  %v2825 = vunpack.c.l.b16 %v2767
  %v2826 = vunpack.c.h.b16 %v2767
  %v2827 = vunpack.c.l.b16 %v2768
  %v2828 = vunpack.c.h.b16 %v2768
  %v2829 = vunpack.c.l.b16 %v2769
  %v2830 = vunpack.c.h.b16 %v2769
  %v2831 = vunpack.c.l.b16 %v2770
  %v2832 = vunpack.c.h.b16 %v2770
  %v2833 = vunpack.c.l.b16 %v2771
  %v2834 = vunpack.c.h.b16 %v2771
  %v2835 = vunpack.c.l.b16 %v2772
  %v2836 = vunpack.c.h.b16 %v2772
  %v2837 = vunpack.c.l.b16 %v2773
  %v2838 = vunpack.c.h.b16 %v2773
  %v2839 = vunpack.c.l.b16 %v2774
  %v2840 = vunpack.c.h.b16 %v2774
  %v2841 = vunpack.c.l.b16 %v2775
  %v2842 = vunpack.c.h.b16 %v2775
  %v2843 = vunpack.c.l.b16 %v2776
  %v2844 = vunpack.c.h.b16 %v2776
  %v2845 = vunpack.c.l.b16 %v2777
  %v2846 = vunpack.c.h.b16 %v2777
  %v2847 = vunpack.c.l.b16 %v2778
  %v2848 = vunpack.c.h.b16 %v2778
  %v2849 = vunpack.c.l.b16 %v2779
  %v2850 = vunpack.c.h.b16 %v2779
  %v2851 = vunpack.c.l.b16 %v2780
  %v2852 = vunpack.c.h.b16 %v2780
  %v2853 = vpack.c.b16 %v2805, %v2805
  %v2854 = vpack.c.b16 %v2806, %v2806
  %v2855 = vpack.c.b16 %v2807, %v2807
  %v2856 = vpack.c.b16 %v2808, %v2808
  %v2857 = vpack.c.b16 %v2809, %v2809
  %v2858 = vpack.c.b16 %v2810, %v2810
  %v2859 = vpack.c.b16 %v2811, %v2811
  %v2860 = vpack.c.b16 %v2812, %v2812
  %v2861 = vpack.c.b16 %v2813, %v2813
  %v2862 = vpack.c.b16 %v2814, %v2814
  %v2863 = vpack.c.b16 %v2815, %v2815
  %v2864 = vpack.c.b16 %v2816, %v2816
  %v2865 = vpack.c.b16 %v2817, %v2817
  %v2866 = vpack.c.b16 %v2818, %v2818
  %v2867 = vpack.c.b16 %v2819, %v2819
  %v2868 = vpack.c.b16 %v2820, %v2820
  %v2869 = vpack.c.b16 %v2821, %v2821
  %v2870 = vpack.c.b16 %v2822, %v2822
  %v2871 = vpack.c.b16 %v2823, %v2823
  %v2872 = vpack.c.b16 %v2824, %v2824
  %v2873 = vpack.c.b16 %v2825, %v2825
  %v2874 = vpack.c.b16 %v2826, %v2826
  %v2875 = vpack.c.b16 %v2827, %v2827
  %v2876 = vpack.c.b16 %v2828, %v2828
  %v2877 = vpack.c.b16 %v2829, %v2829
  %v2878 = vpack.c.b16 %v2830, %v2830
  %v2879 = vpack.c.b16 %v2831, %v2831
  %v2880 = vpack.c.b16 %v2832, %v2832
  %v2881 = vpack.c.b16 %v2833, %v2833
  %v2882 = vpack.c.b16 %v2834, %v2834
  %v2883 = vpack.c.b16 %v2835, %v2835
  %v2884 = vpack.c.b16 %v2836, %v2836
  %v2885 = vpack.c.b16 %v2837, %v2837
  %v2886 = vpack.c.b16 %v2838, %v2838
  %v2887 = vpack.c.b16 %v2839, %v2839
  %v2888 = vpack.c.b16 %v2840, %v2840
  %v2889 = vpack.c.b16 %v2841, %v2841
  %v2890 = vpack.c.b16 %v2842, %v2842
  %v2891 = vpack.c.b16 %v2843, %v2843
  %v2892 = vpack.c.b16 %v2844, %v2844
  %v2893 = vpack.c.b16 %v2845, %v2845
  %v2894 = vpack.c.b16 %v2846, %v2846
  %v2895 = vpack.c.b16 %v2847, %v2847
  %v2896 = vpack.c.b16 %v2848, %v2848
  %v2897 = vpack.c.b16 %v2849, %v2849
  %v2898 = vpack.c.b16 %v2850, %v2850
  %v2899 = vpack.c.b16 %v2851, %v2851
  %v2900 = vpack.c.b16 %v2852, %v2852
  %2949 = vst [vmem:[%s25] sm:$0xf] %v2853
  %2950 = vst [vmem:[%s25 + $0x4] sm:$0xf] %v2854
  %2951 = vst [vmem:[%s25 + $0x8] sm:$0xf] %v2855
  %2952 = vst [vmem:[%s25 + $0xc] sm:$0xf] %v2856
  %2953 = vst [vmem:[%s25 + $0x10] sm:$0xf] %v2857
  %2954 = vst [vmem:[%s25 + $0x14] sm:$0xf] %v2858
  %2955 = vst [vmem:[%s25 + $0x18] sm:$0xf] %v2859
  %2956 = vst [vmem:[%s25 + $0x1c] sm:$0xf] %v2860
  %2957 = vst [vmem:[%s25 + $0x20] sm:$0xf] %v2861
  %2958 = vst [vmem:[%s25 + $0x24] sm:$0xf] %v2862
  %2959 = vst [vmem:[%s25 + $0x28] sm:$0xf] %v2863
  %2960 = vst [vmem:[%s25 + $0x2c] sm:$0xf] %v2864
  %2961 = vst [vmem:[%s25 + $0x30] sm:$0xf] %v2865
  %2962 = vst [vmem:[%s25 + $0x34] sm:$0xf] %v2866
  %2963 = vst [vmem:[%s25 + $0x38] sm:$0xf] %v2867
  %2964 = vst [vmem:[%s25 + $0x3c] sm:$0xf] %v2868
  %2965 = vst [vmem:[%s25 + $0x40] sm:$0xf] %v2869
  %2966 = vst [vmem:[%s25 + $0x44] sm:$0xf] %v2870
  %2967 = vst [vmem:[%s25 + $0x48] sm:$0xf] %v2871
  %2968 = vst [vmem:[%s25 + $0x4c] sm:$0xf] %v2872
  %2969 = vst [vmem:[%s25 + $0x50] sm:$0xf] %v2873
  %2970 = vst [vmem:[%s25 + $0x54] sm:$0xf] %v2874
  %2971 = vst [vmem:[%s25 + $0x58] sm:$0xf] %v2875
  %2972 = vst [vmem:[%s25 + $0x5c] sm:$0xf] %v2876
  %2973 = vst [vmem:[%s25 + $0x60] sm:$0xf] %v2877
  %2974 = vst [vmem:[%s25 + $0x64] sm:$0xf] %v2878
  %2975 = vst [vmem:[%s25 + $0x68] sm:$0xf] %v2879
  %2976 = vst [vmem:[%s25 + $0x6c] sm:$0xf] %v2880
  %2977 = vst [vmem:[%s25 + $0x70] sm:$0xf] %v2881
  %2978 = vst [vmem:[%s25 + $0x74] sm:$0xf] %v2882
  %2979 = vst [vmem:[%s25 + $0x78] sm:$0xf] %v2883
  %2980 = vst [vmem:[%s25 + $0x7c] sm:$0xf] %v2884
  %2981 = vst [vmem:[%s25 + $0x80] sm:$0xf] %v2885
  %2982 = vst [vmem:[%s25 + $0x84] sm:$0xf] %v2886
  %2983 = vst [vmem:[%s25 + $0x88] sm:$0xf] %v2887
  %2984 = vst [vmem:[%s25 + $0x8c] sm:$0xf] %v2888
  %2985 = vst [vmem:[%s25 + $0x90] sm:$0xf] %v2889
  %2986 = vst [vmem:[%s25 + $0x94] sm:$0xf] %v2890
  %2987 = vst [vmem:[%s25 + $0x98] sm:$0xf] %v2891
  %2988 = vst [vmem:[%s25 + $0x9c] sm:$0xf] %v2892
  %2989 = vst [vmem:[%s25 + $0xa0] sm:$0xf] %v2893
  %2990 = vst [vmem:[%s25 + $0xa4] sm:$0xf] %v2894
  %2991 = vst [vmem:[%s25 + $0xa8] sm:$0xf] %v2895
  %2992 = vst [vmem:[%s25 + $0xac] sm:$0xf] %v2896
  %2993 = vst [vmem:[%s25 + $0xb0] sm:$0xf] %v2897
  %2994 = vst [vmem:[%s25 + $0xb4] sm:$0xf] %v2898
  %2995 = vst [vmem:[%s25 + $0xb8] sm:$0xf] %v2899
  %2996 = vst [vmem:[%s25 + $0xbc] sm:$0xf] %v2900
  %s2997 = sadd.s32 0, 0
  %s2998 = smul.u32 48, %s2997
  %p2999 = scmp.lt.s32.totalorder %s2998, 47
  %s3000 = scalar_select %p2999, %s2998, 47
  %s3001 = smul.addr %s3000, 4
  %s3002 = scalar_lea.vmem %s3, %s3001
  // Predicated region
  $region14: #{conv2d_deep_sym_forward.2} parent=0 // pred_check
    _
  $region15: #{conv2d_deep_sym_forward.2} parent=0 // pred_check_branch
    %3004 = sbr.rel (0) target = $region17
  $region16: #{conv2d_deep_sym_forward.2} parent=0 // pred_region
    %s3005 = sadd.s32 0, 0
    %s3006 = smul.u32 48, %s3005
  $region17: #{conv2d_deep_sym_forward.2} parent=0 // pred_fallthru
    _
  // Predicated region
  $region18: #{conv2d_deep_sym_forward.2} parent=0 // pred_check
    _
  $region19: #{conv2d_deep_sym_forward.2} parent=0 // pred_check_branch
    %3008 = sbr.rel (0) target = $region21
  $region20: #{conv2d_deep_sym_forward.2} parent=0 // pred_region
    %s3009 = sadd.s32 0, 0
    %s3010 = smul.u32 48, %s3009
    %p3011 = scmp.lt.s32.totalorder %s3010, 47
    %s3012 = scalar_select %p3011, %s3010, 47
    %s3013 = smul.addr %s3012, 4
    %s3014 = scalar_lea.vmem %s3, %s3013
  $region21: #{conv2d_deep_sym_forward.2} parent=0 // pred_fallthru
    _

</llo_original>
